<compile_context>
chip_gen: v7x
topology: tpu7x:2x2x1
jax: 0.10.0
libtpu: 0.0.40
codegen_flags: <defaults>
</compile_context>

<pallas_src>
import numpy as np
import jax
import jax.numpy as jnp
from jax.experimental import pallas as pl
from jax.experimental.pallas import tpu as pltpu

TILE_DST = 256     # destination-node tile (rows of the attention matrix)
TILE_SRC = 256     # source-node tile streamed with the online softmax
LANE_PAD = 128     # lane-dense padding for channel dims
NEG_BIG = 1e9      # additive mask magnitude (exp underflows to 0 in f32)


def _round_up(x, m):
    return (x + m - 1) // m * m


def _pad_nodes(n):
    n_pad = _round_up(n, max(TILE_DST, TILE_SRC))
    # Keep the dst-tile count even so both v7x TensorCores get balanced parallel tiles.
    if (n_pad // TILE_DST) % 2 == 1:
        n_pad += TILE_DST
    assert n_pad % TILE_DST == 0 and n_pad % TILE_SRC == 0
    return n_pad


# ---------------------------------------------------------------------------
# Host-side graph preprocessing (numpy): int8 adjacency + block-sparse schedule.
# ---------------------------------------------------------------------------
def build_graph_tables(edge_index, n, n_pad):
    # TODO(synk): a fully edge-list (scatter-softmax) sparse kernel would avoid the dense
    # int8 per-block mask entirely; kept block-dense here.
    ei = np.asarray(edge_index)
    src = ei[0].astype(np.int64)
    dst = ei[1].astype(np.int64)
    diag = np.arange(n_pad)

    # Dense adjacency, built directly in int8 with one scatter; self loops on every row
    # (incl. padded rows) so each softmax row has at least one unmasked entry.
    adj = np.zeros((n_pad, n_pad), dtype=np.int8)
    adj[dst, src] = 1
    adj[diag, diag] = 1

    num_dst = n_pad // TILE_DST
    num_src = n_pad // TILE_SRC
    has_blk = np.zeros((num_dst, num_src), dtype=bool)
    has_blk[dst // TILE_DST, src // TILE_SRC] = True
    has_blk[diag // TILE_DST, diag // TILE_SRC] = True

    counts = has_blk.sum(axis=1).astype(np.int32)
    max_blocks = int(counts.max())
    ids = np.zeros((num_dst, max_blocks), dtype=np.int32)
    for i in range(num_dst):
        nz = np.nonzero(has_blk[i])[0].astype(np.int32)
        ids[i, : nz.size] = nz
        ids[i, nz.size:] = nz[-1]   # pad with last valid id: same block index -> no re-DMA
    total_blocks = int(counts.sum())

    schedule = (jnp.asarray(ids.reshape(-1)), jnp.asarray(counts),
                max_blocks, total_blocks, n_pad)
    return jnp.asarray(adj), schedule


# ---------------------------------------------------------------------------
# Kernel: one GATConv layer, grid = (dst tiles, non-empty src blocks), online softmax.
# ---------------------------------------------------------------------------
def _make_gat_kernel(apply_relu):
    def kernel(bids_ref, bcnt_ref,                 # scalar-prefetch (SMEM)
               adst_ref, asrc_ref, mask_ref, xsp_ref, bias_ref,
               out_ref,
               m_scr, l_scr, acc_scr):
        i = pl.program_id(0)
        t = pl.program_id(1)

        @pl.when(t == 0)
        def _init():
            m_scr[...] = jnp.full_like(m_scr, -jnp.inf)
            l_scr[...] = jnp.zeros_like(l_scr)
            acc_scr[...] = jnp.zeros_like(acc_scr)

        @pl.when(t < bcnt_ref[i])                  # skip padded schedule steps
        def _accumulate():
            # Attention logits from the hoisted per-node terms (broadcast add).
            s = adst_ref[...] + asrc_ref[...]                         # (TD, TS) f32
            s = jnp.where(s >= 0.0, s, 0.2 * s)                       # LeakyReLU(0.2)
            # Additive -1e9 mask from the int8 adjacency block (convert + FMA).
            e = s + (mask_ref[...].astype(jnp.float32) - 1.0) * NEG_BIG

            # Online (flash-style) softmax accumulation, f32.
            m_prev = m_scr[...]
            m_new = jnp.maximum(m_prev, jnp.max(e, axis=-1, keepdims=True))
            scale = jnp.exp(m_prev - m_new)
            p = jnp.exp(e - m_new)                                    # (TD, TS) f32
            l_scr[...] = scale * l_scr[...] + jnp.sum(p, axis=-1, keepdims=True)
            acc_scr[...] = scale * acc_scr[...] + jnp.dot(
                p.astype(jnp.bfloat16), xsp_ref[...],
                preferred_element_type=jnp.float32)
            m_scr[...] = m_new

        @pl.when(t == pl.num_programs(1) - 1)
        def _finalize():
            out = acc_scr[...] * pl.reciprocal(l_scr[...], approx=True) + bias_ref[...]
            if apply_relu:
                out = jnp.maximum(out, 0.0)
            out_ref[...] = out.astype(out_ref.dtype)

    return kernel


# ---------------------------------------------------------------------------
# Wrapper for one GATConv layer.
# ---------------------------------------------------------------------------
def gat_conv_pallas(x, adj_i8, schedule, w_src, w_dst, att_src, att_dst, bias,
                    *, apply_relu, out_dtype):
    block_ids, block_counts, max_blocks, total_blocks, n_pad = schedule
    n, f_in = x.shape
    h = w_src.shape[1]
    hp = _round_up(h, LANE_PAD)
    assert n <= n_pad and adj_i8.shape == (n_pad, n_pad)

    x32 = x.astype(jnp.float32)
    # Hoisted (computed once, not per grid step):
    #   source projection (bf16 MXU precision, lane-dense), attention logit rows/cols.
    xs_proj = jnp.dot(x32.astype(jnp.bfloat16), w_src.astype(jnp.bfloat16),
                      preferred_element_type=jnp.float32)                  # (n, h)
    xs_proj_pad = jnp.zeros((n_pad, hp), jnp.bfloat16).at[:n, :h].set(
        xs_proj.astype(jnp.bfloat16))
    a_src = (x32 @ (w_src @ att_src.T)).T                                  # (1, n)
    a_src_pad = jnp.zeros((1, n_pad), jnp.float32).at[:, :n].set(a_src)
    a_dst = x32 @ (w_dst @ att_dst.T)                                      # (n, 1)
    a_dst_pad = jnp.zeros((n_pad, 1), jnp.float32).at[:n, :].set(a_dst)
    bias_pad = jnp.zeros((1, hp), jnp.float32).at[:, :h].set(bias)

    num_dst = n_pad // TILE_DST
    grid = (num_dst, max_blocks)

    def src_blk(i, t, bids, bcnt):
        return bids[i * max_blocks + t]

    out_bytes = jnp.dtype(out_dtype).itemsize
    cost = pl.CostEstimate(
        flops=int(2 * n * f_in * h                                   # hoisted projection
                  + 2 * total_blocks * TILE_DST * TILE_SRC * hp      # p @ xs_proj
                  + 12 * total_blocks * TILE_DST * TILE_SRC),        # elementwise chain
        transcendentals=int(total_blocks * (TILE_DST * TILE_SRC + 2 * TILE_DST)),
        bytes_accessed=int(total_blocks * TILE_DST * TILE_SRC                  # int8 mask
                           + total_blocks * TILE_SRC * hp * 2                  # xs_proj re-reads
                           + total_blocks * (TILE_SRC + TILE_DST) * 4          # a_src/a_dst
                           + num_dst * TILE_DST * hp * out_bytes))             # output

    out = pl.pallas_call(
        _make_gat_kernel(apply_relu),
        out_shape=jax.ShapeDtypeStruct((n_pad, hp), out_dtype),
        grid_spec=pltpu.PrefetchScalarGridSpec(
            num_scalar_prefetch=2,
            grid=grid,
            in_specs=[
                pl.BlockSpec((TILE_DST, 1), lambda i, t, bids, bcnt: (i, 0)),      # a_dst
                pl.BlockSpec((1, TILE_SRC),
                             lambda i, t, bids, bcnt: (0, src_blk(i, t, bids, bcnt))),  # a_src
                pl.BlockSpec((TILE_DST, TILE_SRC),
                             lambda i, t, bids, bcnt: (i, src_blk(i, t, bids, bcnt))),  # mask int8
                pl.BlockSpec((TILE_SRC, hp),
                             lambda i, t, bids, bcnt: (src_blk(i, t, bids, bcnt), 0)),  # xs_proj bf16
                pl.BlockSpec((1, hp), lambda i, t, bids, bcnt: (0, 0)),            # bias
            ],
            out_specs=pl.BlockSpec((TILE_DST, hp), lambda i, t, bids, bcnt: (i, 0)),
            scratch_shapes=[
                pltpu.VMEM((TILE_DST, 1), jnp.float32),    # running max m
                pltpu.VMEM((TILE_DST, 1), jnp.float32),    # running denom l
                pltpu.VMEM((TILE_DST, hp), jnp.float32),   # output accumulator
            ],
        ),
        compiler_params=pltpu.CompilerParams(
            dimension_semantics=("parallel", "arbitrary"),
            vmem_limit_bytes=32 * 1024 * 1024),
        cost_estimate=cost,
    )(block_ids, block_counts, a_dst_pad, a_src_pad, adj_i8, xs_proj_pad, bias_pad)
    return out                                           # (n_pad, hp), padded


def gnn_forward(x, edge_index, params):
    n = x.shape[0]
    hidden = params["w1_src"].shape[1]
    out_ch = params["w2_src"].shape[1]

    n_pad = _pad_nodes(n)
    adj_i8, schedule = build_graph_tables(edge_index, n, n_pad)

    h1 = gat_conv_pallas(x, adj_i8, schedule,
                         params["w1_src"], params["w1_dst"],
                         params["att1_src"], params["att1_dst"], params["b1"],
                         apply_relu=True, out_dtype=jnp.bfloat16)
    # Layer 2 consumes the bf16 activations directly (valid hidden columns only).
    out = gat_conv_pallas(h1[:, :hidden], adj_i8, schedule,
                          params["w2_src"], params["w2_dst"],
                          params["att2_src"], params["att2_dst"], params["b2"],
                          apply_relu=False, out_dtype=jnp.float32)
    return out[:n, :out_ch]


# ---------------------------------------------------------------------------
# Plain-JAX reference (dense GATConv, bf16 matmul precision) for validation.
# ---------------------------------------------------------------------------
def _gat_conv_reference(x, adj, w_src, w_dst, att_src, att_dst, bias):
    xs_proj = jnp.dot(x.astype(jnp.bfloat16), w_src.astype(jnp.bfloat16),
                      preferred_element_type=jnp.float32)
    a_src = x @ (w_src @ att_src.T)            # (N, 1)
    a_dst = x @ (w_dst @ att_dst.T)            # (N, 1)
    s = a_dst + a_src.T
    s = jnp.where(s >= 0.0, s, 0.2 * s)
    e = jnp.where(adj > 0, s, -NEG_BIG)
    e = e - jnp.max(e, axis=-1, keepdims=True)
    p = jnp.exp(e)
    alpha = p / jnp.sum(p, axis=-1, keepdims=True)
    out = jnp.dot(alpha.astype(jnp.bfloat16), xs_proj.astype(jnp.bfloat16),
                  preferred_element_type=jnp.float32)
    return out + bias


def gnn_reference(x, edge_index, params):
    n = x.shape[0]
    adj = jnp.zeros((n, n), jnp.float32).at[edge_index[1], edge_index[0]].set(1.0)
    adj = jnp.maximum(adj, jnp.eye(n, dtype=jnp.float32))
    h = _gat_conv_reference(x, adj, params["w1_src"], params["w1_dst"],
                            params["att1_src"], params["att1_dst"], params["b1"])
    h = jnp.maximum(h, 0.0)
    return _gat_conv_reference(h, adj, params["w2_src"], params["w2_dst"],
                               params["att2_src"], params["att2_dst"], params["b2"])


# ---------------------------------------------------------------------------
# Parameters (glorot; note attention-vector init differs from PyG numerically).
# ---------------------------------------------------------------------------
def make_params(key, in_channels, hidden_channels, out_channels):
    ks = jax.random.split(key, 8)

    def glorot(k, shape):
        s = jnp.sqrt(6.0 / (shape[0] + shape[1]))
        return jax.random.uniform(k, shape, jnp.float32, -s, s)

    return {
        "w1_src": glorot(ks[0], (in_channels, hidden_channels)),
        "w1_dst": glorot(ks[1], (in_channels, hidden_channels)),
        "att1_src": glorot(ks[2], (1, hidden_channels)),
        "att1_dst": glorot(ks[3], (1, hidden_channels)),
        "b1": jnp.zeros((1, hidden_channels), jnp.float32),
        "w2_src": glorot(ks[4], (hidden_channels, out_channels)),
        "w2_dst": glorot(ks[5], (hidden_channels, out_channels)),
        "att2_src": glorot(ks[6], (1, out_channels)),
        "att2_dst": glorot(ks[7], (1, out_channels)),
        "b2": jnp.zeros((1, out_channels), jnp.float32),
    }


if __name__ == "__main__":
    N, F_IN, HIDDEN, OUT = 512, 16, 32, 8

    key = jax.random.PRNGKey(0)
    k_x, k_p = jax.random.split(key)

    # Node features [N, F_IN]
    x = jax.random.normal(k_x, (N, F_IN), jnp.float32)

    # Deterministic sparse graph: star (node 0 -> every other node), edge_index [2, N-1].
    # Different dst tiles see different numbers of non-empty src blocks, exercising the
    # block-sparse skip path.
    src = jnp.zeros((N - 1,), jnp.int32)
    dst = jnp.arange(1, N, dtype=jnp.int32)
    edge_index = jnp.stack([src, dst], axis=0)

    params = make_params(k_p, F_IN, HIDDEN, OUT)

    out = gnn_forward(x, edge_index, params)
    out = jax.block_until_ready(out)
    ref = gnn_reference(x, edge_index, params)

    assert out.shape == (N, OUT)
    assert bool(jnp.all(jnp.isfinite(out)))
    assert bool(jnp.allclose(out, ref, atol=5e-2, rtol=5e-2)), \
        f"max abs diff {float(jnp.max(jnp.abs(out - ref)))}"
    print("KERNEL_OK")
</pallas_src>

<mosaic_0001>
module attributes {stable_mosaic.version = 11 : i64} {
  func.func @kernel(%arg0: i32, %arg1: i32, %arg2: memref<4xi32, #tpu.memory_space<smem>>, %arg3: memref<2xi32, #tpu.memory_space<smem>>, %arg4: memref<256x1xf32, #tpu.memory_space<vmem>>, %arg5: memref<1x256xf32, #tpu.memory_space<vmem>>, %arg6: memref<256x256xi8, #tpu.memory_space<vmem>>, %arg7: memref<256x128xbf16, #tpu.memory_space<vmem>>, %arg8: memref<1x128xf32, #tpu.memory_space<vmem>>, %arg9: memref<256x128xbf16, #tpu.memory_space<vmem>>, %arg10: memref<256x1xf32, #tpu.memory_space<vmem>>, %arg11: memref<256x1xf32, #tpu.memory_space<vmem>>, %arg12: memref<256x128xf32, #tpu.memory_space<vmem>>) attributes {dimension_semantics = [#tpu.dimension_semantics<parallel>, #tpu.dimension_semantics<arbitrary>], iteration_bounds = array<i64: 2, 2>, scalar_prefetch = 2 : i64, scratch_operands = 3 : i64, tpu.core_type = #tpu.core_type<tc>, window_params = [{transform_indices = @transform_0, window_bounds = array<i64: 256, 1>}, {transform_indices = @transform_1, window_bounds = array<i64: 1, 256>}, {transform_indices = @transform_2, window_bounds = array<i64: 256, 256>}, {transform_indices = @transform_3, window_bounds = array<i64: 256, 128>}, {pipeline_mode = #tpu.pipeline_mode<synchronous>, transform_indices = @transform_4, window_bounds = array<i64: 1, 128>}, {transform_indices = @transform_5, window_bounds = array<i64: 256, 128>}]} {
    %c0_i32 = arith.constant 0 : i32
    %0 = arith.cmpi eq, %arg1, %c0_i32 : i32
    %1 = arith.extui %0 : i1 to i32
    %c0_i32_0 = arith.constant 0 : i32
    %2 = arith.cmpi ne, %1, %c0_i32_0 : i32
    scf.if %2 {
      %cst = arith.constant 0xFF800000 : f32
      %11 = vector.broadcast %cst : f32 to vector<256x1xf32>
      %c0 = arith.constant 0 : index
      %c0_3 = arith.constant 0 : index
      %12 = vector.load %arg10[%c0, %c0_3] : memref<256x1xf32, #tpu.memory_space<vmem>>, vector<256x1xf32>
      tpu.vector_store %arg10[%c0, %c0_3], %11 {strides = array<i32>} : memref<256x1xf32, #tpu.memory_space<vmem>>, vector<256x1xf32>,
      %cst_4 = arith.constant 0.000000e+00 : f32
      %13 = vector.broadcast %cst_4 : f32 to vector<256x1xf32>
      %c0_5 = arith.constant 0 : index
      %c0_6 = arith.constant 0 : index
      %14 = vector.load %arg11[%c0_5, %c0_6] : memref<256x1xf32, #tpu.memory_space<vmem>>, vector<256x1xf32>
      tpu.vector_store %arg11[%c0_5, %c0_6], %13 {strides = array<i32>} : memref<256x1xf32, #tpu.memory_space<vmem>>, vector<256x1xf32>,
      %cst_7 = arith.constant 0.000000e+00 : f32
      %15 = vector.broadcast %cst_7 : f32 to vector<256x128xf32>
      %c0_8 = arith.constant 0 : index
      %c0_9 = arith.constant 0 : index
      %16 = vector.load %arg12[%c0_8, %c0_9] : memref<256x128xf32, #tpu.memory_space<vmem>>, vector<256x128xf32>
      tpu.vector_store %arg12[%c0_8, %c0_9], %15 {strides = array<i32>} : memref<256x128xf32, #tpu.memory_space<vmem>>, vector<256x128xf32>,
    } else {
    }
    %3 = arith.index_cast %arg0 : i32 to index
    %4 = memref.load %arg3[%3] : memref<2xi32, #tpu.memory_space<smem>>
    %5 = arith.cmpi slt, %arg1, %4 : i32
    %6 = arith.extui %5 : i1 to i32
    %c0_i32_1 = arith.constant 0 : i32
    %7 = arith.cmpi ne, %6, %c0_i32_1 : i32
    scf.if %7 {
      %c0 = arith.constant 0 : index
      %c0_3 = arith.constant 0 : index
      %11 = vector.load %arg4[%c0, %c0_3] : memref<256x1xf32, #tpu.memory_space<vmem>>, vector<256x1xf32>
      %c0_4 = arith.constant 0 : index
      %c0_5 = arith.constant 0 : index
      %12 = vector.load %arg5[%c0_4, %c0_5] : memref<1x256xf32, #tpu.memory_space<vmem>>, vector<1x256xf32>
      %13 = vector.broadcast %11 : vector<256x1xf32> to vector<256x256xf32>
      %14 = vector.broadcast %12 : vector<1x256xf32> to vector<256x256xf32>
      %15 = arith.addf %13, %14 : vector<256x256xf32>
      %cst = arith.constant 0.000000e+00 : f32
      %16 = vector.broadcast %cst : f32 to vector<256x256xf32>
      %17 = arith.cmpf oge, %15, %16 : vector<256x256xf32>
      %cst_6 = arith.constant 2.000000e-01 : f32
      %18 = vector.broadcast %cst_6 : f32 to vector<256x256xf32>
      %19 = arith.mulf %18, %15 : vector<256x256xf32>
      %20 = arith.select %17, %15, %19 : vector<256x256xi1>, vector<256x256xf32>
      %c0_7 = arith.constant 0 : index
      %c0_8 = arith.constant 0 : index
      %21 = vector.load %arg6[%c0_7, %c0_8] : memref<256x256xi8, #tpu.memory_space<vmem>>, vector<256x256xi8>
      %22 = arith.sitofp %21 : vector<256x256xi8> to vector<256x256xf32>
      %cst_9 = arith.constant 1.000000e+00 : f32
      %23 = vector.broadcast %cst_9 : f32 to vector<256x256xf32>
      %24 = arith.subf %22, %23 : vector<256x256xf32>
      %cst_10 = arith.constant 1.000000e+09 : f32
      %25 = vector.broadcast %cst_10 : f32 to vector<256x256xf32>
      %26 = arith.mulf %24, %25 : vector<256x256xf32>
      %27 = arith.addf %20, %26 : vector<256x256xf32>
      %c0_11 = arith.constant 0 : index
      %c0_12 = arith.constant 0 : index
      %28 = vector.load %arg10[%c0_11, %c0_12] : memref<256x1xf32, #tpu.memory_space<vmem>>, vector<256x1xf32>
      %cst_13 = arith.constant dense<0xFF800000> : vector<256xf32>
      %29 = vector.multi_reduction <maximumf>, %27, %cst_13 [1] : vector<256x256xf32> to vector<256xf32>
      %30 = vector.shape_cast %29 : vector<256xf32> to vector<256x1xf32>
      %31 = arith.maximumf %28, %30 : vector<256x1xf32>
      %32 = arith.subf %28, %31 : vector<256x1xf32>
      %33 = math.exp %32 : vector<256x1xf32>
      %34 = vector.broadcast %31 : vector<256x1xf32> to vector<256x256xf32>
      %35 = arith.subf %27, %34 : vector<256x256xf32>
      %36 = math.exp %35 : vector<256x256xf32>
      %c0_14 = arith.constant 0 : index
      %c0_15 = arith.constant 0 : index
      %37 = vector.load %arg11[%c0_14, %c0_15] : memref<256x1xf32, #tpu.memory_space<vmem>>, vector<256x1xf32>
      %38 = arith.mulf %33, %37 : vector<256x1xf32>
      %cst_16 = arith.constant dense<0.000000e+00> : vector<256xf32>
      %39 = vector.multi_reduction <add>, %36, %cst_16 [1] : vector<256x256xf32> to vector<256xf32>
      %40 = vector.shape_cast %39 : vector<256xf32> to vector<256x1xf32>
      %41 = arith.addf %38, %40 : vector<256x1xf32>
      %c0_17 = arith.constant 0 : index
      %c0_18 = arith.constant 0 : index
      %42 = vector.load %arg11[%c0_17, %c0_18] : memref<256x1xf32, #tpu.memory_space<vmem>>, vector<256x1xf32>
      tpu.vector_store %arg11[%c0_17, %c0_18], %41 {strides = array<i32>} : memref<256x1xf32, #tpu.memory_space<vmem>>, vector<256x1xf32>,
      %c0_19 = arith.constant 0 : index
      %c0_20 = arith.constant 0 : index
      %43 = vector.load %arg12[%c0_19, %c0_20] : memref<256x128xf32, #tpu.memory_space<vmem>>, vector<256x128xf32>
      %44 = vector.broadcast %33 : vector<256x1xf32> to vector<256x128xf32>
      %45 = arith.mulf %44, %43 : vector<256x128xf32>
      %46 = arith.truncf %36 : vector<256x256xf32> to vector<256x256xbf16>
      %c0_21 = arith.constant 0 : index
      %c0_22 = arith.constant 0 : index
      %47 = vector.load %arg7[%c0_21, %c0_22] : memref<256x128xbf16, #tpu.memory_space<vmem>>, vector<256x128xbf16>
      %cst_23 = arith.constant dense<0.000000e+00> : vector<256x128xf32>
      %48 = tpu.matmul %46, %47, %cst_23 {dimension_numbers = #tpu.dot_dimension_numbers<[1], [0], [0], [1], [0, 0, 1, 1], [], []>} : vector<256x256xbf16>, vector<256x128xbf16>, vector<256x128xf32> -> vector<256x128xf32>
      %49 = arith.addf %45, %48 : vector<256x128xf32>
      %c0_24 = arith.constant 0 : index
      %c0_25 = arith.constant 0 : index
      %50 = vector.load %arg12[%c0_24, %c0_25] : memref<256x128xf32, #tpu.memory_space<vmem>>, vector<256x128xf32>
      tpu.vector_store %arg12[%c0_24, %c0_25], %49 {strides = array<i32>} : memref<256x128xf32, #tpu.memory_space<vmem>>, vector<256x128xf32>,
      %c0_26 = arith.constant 0 : index
      %c0_27 = arith.constant 0 : index
      %51 = vector.load %arg10[%c0_26, %c0_27] : memref<256x1xf32, #tpu.memory_space<vmem>>, vector<256x1xf32>
      tpu.vector_store %arg10[%c0_26, %c0_27], %31 {strides = array<i32>} : memref<256x1xf32, #tpu.memory_space<vmem>>, vector<256x1xf32>,
    } else {
    }
    %c1_i32 = arith.constant 1 : i32
    %8 = arith.cmpi eq, %arg1, %c1_i32 : i32
    %9 = arith.extui %8 : i1 to i32
    %c0_i32_2 = arith.constant 0 : i32
    %10 = arith.cmpi ne, %9, %c0_i32_2 : i32
    scf.if %10 {
      %c0 = arith.constant 0 : index
      %c0_3 = arith.constant 0 : index
      %11 = vector.load %arg12[%c0, %c0_3] : memref<256x128xf32, #tpu.memory_space<vmem>>, vector<256x128xf32>
      %c0_4 = arith.constant 0 : index
      %c0_5 = arith.constant 0 : index
      %12 = vector.load %arg11[%c0_4, %c0_5] : memref<256x1xf32, #tpu.memory_space<vmem>>, vector<256x1xf32>
      %13 = tpu.reciprocal %12 {approx = true} : vector<256x1xf32> -> vector<256x1xf32>
      %14 = vector.broadcast %13 : vector<256x1xf32> to vector<256x128xf32>
      %15 = arith.mulf %11, %14 : vector<256x128xf32>
      %c0_6 = arith.constant 0 : index
      %c0_7 = arith.constant 0 : index
      %16 = vector.load %arg8[%c0_6, %c0_7] : memref<1x128xf32, #tpu.memory_space<vmem>>, vector<1x128xf32>
      %17 = vector.broadcast %16 : vector<1x128xf32> to vector<256x128xf32>
      %18 = arith.addf %15, %17 : vector<256x128xf32>
      %cst = arith.constant 0.000000e+00 : f32
      %19 = vector.broadcast %cst : f32 to vector<256x128xf32>
      %20 = arith.maximumf %18, %19 : vector<256x128xf32>
      %21 = arith.truncf %20 : vector<256x128xf32> to vector<256x128xbf16>
      %c0_8 = arith.constant 0 : index
      %c0_9 = arith.constant 0 : index
      %22 = vector.load %arg9[%c0_8, %c0_9] : memref<256x128xbf16, #tpu.memory_space<vmem>>, vector<256x128xbf16>
      tpu.vector_store %arg9[%c0_8, %c0_9], %21 {strides = array<i32>} : memref<256x128xbf16, #tpu.memory_space<vmem>>, vector<256x128xbf16>,
    } else {
    }
    return
  }
  func.func @transform_0(%arg0: i32, %arg1: i32, %arg2: memref<4xi32, #tpu.memory_space<smem>>, %arg3: memref<2xi32, #tpu.memory_space<smem>>) -> (i32, i32) {
    %c0_i32 = arith.constant 0 : i32
    %c0_i32_0 = arith.constant 0 : i32
    return %arg0, %c0_i32 : i32, i32
  }
  func.func @transform_1(%arg0: i32, %arg1: i32, %arg2: memref<4xi32, #tpu.memory_space<smem>>, %arg3: memref<2xi32, #tpu.memory_space<smem>>) -> (i32, i32) {
    %c2_i32 = arith.constant 2 : i32
    %0 = arith.muli %arg0, %c2_i32 : i32
    %1 = arith.addi %0, %arg1 : i32
    %2 = arith.index_cast %1 : i32 to index
    %3 = memref.load %arg2[%2] : memref<4xi32, #tpu.memory_space<smem>>
    %c0_i32 = arith.constant 0 : i32
    %c0_i32_0 = arith.constant 0 : i32
    return %c0_i32, %3 : i32, i32
  }
  func.func @transform_2(%arg0: i32, %arg1: i32, %arg2: memref<4xi32, #tpu.memory_space<smem>>, %arg3: memref<2xi32, #tpu.memory_space<smem>>) -> (i32, i32) {
    %c2_i32 = arith.constant 2 : i32
    %0 = arith.muli %arg0, %c2_i32 : i32
    %1 = arith.addi %0, %arg1 : i32
    %2 = arith.index_cast %1 : i32 to index
    %3 = memref.load %arg2[%2] : memref<4xi32, #tpu.memory_space<smem>>
    %c0_i32 = arith.constant 0 : i32
    return %arg0, %3 : i32, i32
  }
  func.func @transform_3(%arg0: i32, %arg1: i32, %arg2: memref<4xi32, #tpu.memory_space<smem>>, %arg3: memref<2xi32, #tpu.memory_space<smem>>) -> (i32, i32) {
    %c2_i32 = arith.constant 2 : i32
    %0 = arith.muli %arg0, %c2_i32 : i32
    %1 = arith.addi %0, %arg1 : i32
    %2 = arith.index_cast %1 : i32 to index
    %3 = memref.load %arg2[%2] : memref<4xi32, #tpu.memory_space<smem>>
    %c0_i32 = arith.constant 0 : i32
    %c0_i32_0 = arith.constant 0 : i32
    return %3, %c0_i32 : i32, i32
  }
  func.func @transform_4(%arg0: i32, %arg1: i32, %arg2: memref<4xi32, #tpu.memory_space<smem>>, %arg3: memref<2xi32, #tpu.memory_space<smem>>) -> (i32, i32) {
    %c0_i32 = arith.constant 0 : i32
    %c0_i32_0 = arith.constant 0 : i32
    %c0_i32_1 = arith.constant 0 : i32
    return %c0_i32, %c0_i32_0 : i32, i32
  }
  func.func @transform_5(%arg0: i32, %arg1: i32, %arg2: memref<4xi32, #tpu.memory_space<smem>>, %arg3: memref<2xi32, #tpu.memory_space<smem>>) -> (i32, i32) {
    %c0_i32 = arith.constant 0 : i32
    %c0_i32_0 = arith.constant 0 : i32
    return %arg0, %c0_i32 : i32, i32
  }
}

</mosaic_0001>

<llo_original>
// kernel: tpu_custom_call.1
$region0: #{tpu_custom_call.1}
  #allocation0 [shape = 'u32[]', space=smem, size = 0x4, offset = 0x4, fixed_abs, tag = 'smem constant byte address 0x4 - core index']
  #allocation1 [shape = 'u32[144,128]{1,0:T(1,128)}', space=vmem, size = 0x12000, scoped, tag = 'internal scratch']
  #allocation2 [shape = 'f32[256,1]{1,0:T(8,128)}', space=vmem, size = 0x20000, scoped, tag = 'scratch operand']
  #allocation3 [shape = 'f32[256,1]{1,0:T(8,128)}', space=vmem, size = 0x20000, scoped, tag = 'scratch operand']
  #allocation4 [shape = 'f32[256,128]{1,0:T(8,128)}', space=vmem, size = 0x20000, scoped, tag = 'scratch operand']
  #allocation5 [shape = 's32[1]{0}', space=sflag, size = 0x4, scoped, tag = 'scoped memory for tpu_custom_call.1']
  #allocation6 [shape = 'u8[512]{0}', space=smem, size = 0x200, scoped, tag = 'prefetched SMEM operand 0']
  #allocation7 [shape = 'u8[512]{0}', space=smem, size = 0x200, scoped, tag = 'prefetched SMEM operand 1']
  %s0 = inlined_call_operand.vmem [shape: s32[4], index: 0, kind: input, shape index: {}]
  %s1 = inlined_call_operand.vmem [shape: s32[2], index: 1, kind: input, shape index: {}]
  %s2 = inlined_call_operand.vmem [shape: f32[512,1], index: 2, kind: input, shape index: {}]
  %s3 = inlined_call_operand.vmem [shape: f32[1,512], index: 3, kind: input, shape index: {}]
  %s4 = inlined_call_operand.vmem [shape: s8[512,512], index: 4, kind: input, shape index: {}]
  %s5 = inlined_call_operand.hbm [shape: bf16[512,128], index: 5, kind: input, shape index: {}]
  %s6 = inlined_call_operand.vmem [shape: f32[1,128], index: 6, kind: input, shape index: {}]
  %s7 = inlined_call_operand.hbm [shape: bf16[512,128], index: 7, kind: output, shape index: {}]
  %s8 = sld [smem:[#allocation0]]
  $region92: #{tpu_custom_call.1} parent=0
    _
  %s10 = ssub.s32 1, %s8
  %s11 = scalar_select 0, %s10, %s8
  %s12 = sshll.u32 %s0, 4
  %s13 = int_to_ptr.vmem [resolvable:$true] %s12
  %15 = dma.vmem_to_smem %s13, 16, [#allocation6], [#allocation5]
  %s16 = sshll.u32 %s1, 4
  %s17 = int_to_ptr.vmem [resolvable:$true] %s16
  %19 = dma.vmem_to_smem %s17, 16, [#allocation7], [#allocation5]
  %20 = dma.done [#allocation5], 32
  %21 = sfence
  $region1: #{tpu_custom_call.1} parent=0
    #allocation8 [shape = 'u8[131072]{0}', space=vmem, size = 0x20000, scoped, tag = 'input window, operand 4']
    #allocation9 [shape = 'u8[131072]{0}', space=vmem, size = 0x20000, scoped, tag = 'input window, operand 5']
    #allocation10 [shape = 's32[2]{0}', space=sflag, size = 0x8, scoped, tag = 'scoped memory for tpu_custom_call.1']
    #allocation11 [shape = 's32[2]{0}', space=sflag, size = 0x8, scoped, tag = 'scoped memory for tpu_custom_call.1']
    #allocation12 [shape = 'u8[131072]{0}', space=vmem, size = 0x20000, scoped, tag = 'output window, operand 0']
    %22 = vsyncpa [#allocation10], 0
    %s23 = scalar_lea.sflag [#allocation10], 1
    %24 = vsyncpa %s23, 0
    %25 = vsyncpa [#allocation11], 0
    %s26 = scalar_lea.sflag [#allocation11], 1
    %27 = vsyncpa %s26, 0
    loop: start=0, step=1, limit=6
    $region2: #{tpu_custom_call.1} parent=1 // loop_pre_header
      _
    $region3: #{tpu_custom_call.1} parent=1 // loop_header
      %s29 = sphi 0, %s33
      %p30 = scmp.ge.s32.totalorder %s29, 6
      %s36 = sphi 0, %s48
      %s37 = sphi 0, %s44
      %s38 = sphi 0, %s36
      %s39 = sphi 0, %s37
      %s40 = sphi 0, %s38
      %s41 = sphi 0, %s39
      %s51 = sphi 0, %s53
      %s54 = sphi 0, %s51
      %s55 = sphi 0, %s54
      %s71 = sphi 0, %s55
      %s83 = sphi 0, %s85
      %s86 = sphi 0, %s83
      %s87 = sphi 0, %s86
      %s103 = sphi 0, %s87
      %s117 = sphi 0, %s119
      %s120 = sphi 0, %s117
      %s121 = sphi 0, %s120
      %s137 = sphi 0, %s121
      %s149 = sphi 0, %s151
      %s152 = sphi 0, %s149
      %s153 = sphi 0, %s152
      %s169 = sphi 0, %s153
      %s173 = sphi 0, %s173
      %s175 = sphi 0, %s173
      %s176 = sphi 0, %s175
      %s190 = sphi 0, %s176
      %s196 = sphi 0, %s198
      %s199 = sphi 0, %s196
      %s200 = sphi 0, %s199
      %s216 = sphi 0, %s200
    $region4: #{tpu_custom_call.1} parent=1 // loop_header_branch
      %32 = sbr.rel (%p30) target = $region8
    $region5: #{tpu_custom_call.1} parent=1 // loop_body
      %s34 = ssub.s32 %s29, 1
      %s35 = ssub.s32 %s29, 2
      %s42 = sadd.s32 1, %s37
      %p43 = scmp.ge.s32.totalorder %s42, 2
      %s44 = scalar_select %p43, 0, %s42
      %s45 = sadd.s32 1, %s36
      %s46 = scalar_select %p43, %s45, %s36
      %p47 = scmp.ge.s32.totalorder %s46, 2
      %s48 = scalar_select %p47, 0, %s46
      %s49 = ssub.s32 %s36, %s48
      %p50 = scmp.eq.s32.totalorder %s49, 0
      %s52 = sadd.s32 %s51, 1
      %s53 = scalar_select %p50, %s51, %s52
      %p56 = pneg %p50
      %p57 = scmp.eq.s32.totalorder %s29, 3
      %p58 = por %p56, %p57
      %p59 = scmp.ne.s32.totalorder %s51, %s54
      %p60 = scmp.eq.s32.totalorder %s29, 0
      %p61 = por %p59, %p60
      %p62 = scmp.ne.s32.totalorder %s51, %s54
      %p63 = scmp.eq.s32.totalorder %s34, 3
      %p64 = por %p62, %p63
      %p65 = scmp.ne.s32.totalorder %s54, %s55
      %p66 = scmp.eq.s32.totalorder %s34, 0
      %p67 = por %p65, %p66
      %p68 = scmp.ne.s32.totalorder %s54, %s55
      %p69 = scmp.eq.s32.totalorder %s35, 3
      %p70 = por %p68, %p69
      %p72 = scmp.ne.s32.totalorder %s55, %s71
      %p73 = scmp.eq.s32.totalorder %s35, 0
      %p74 = por %p72, %p73
      %s75 = smul.u32 %s36, 2
      %s76 = sadd.s32 %s75, %s37
      %s77 = sld [smem:[#allocation6 + %s76]]
      %s78 = smul.u32 %s48, 2
      %s79 = sadd.s32 %s78, %s44
      %s80 = sld [smem:[#allocation6 + %s79]]
      %s81 = ssub.s32 %s77, %s80
      %p82 = scmp.eq.s32.totalorder %s81, 0
      %s84 = sadd.s32 %s83, 1
      %s85 = scalar_select %p82, %s83, %s84
      %p88 = pneg %p82
      %p89 = scmp.eq.s32.totalorder %s29, 3
      %p90 = por %p88, %p89
      %p91 = scmp.ne.s32.totalorder %s83, %s86
      %p92 = scmp.eq.s32.totalorder %s29, 0
      %p93 = por %p91, %p92
      %p94 = scmp.ne.s32.totalorder %s83, %s86
      %p95 = scmp.eq.s32.totalorder %s34, 3
      %p96 = por %p94, %p95
      %p97 = scmp.ne.s32.totalorder %s86, %s87
      %p98 = scmp.eq.s32.totalorder %s34, 0
      %p99 = por %p97, %p98
      %p100 = scmp.ne.s32.totalorder %s86, %s87
      %p101 = scmp.eq.s32.totalorder %s35, 3
      %p102 = por %p100, %p101
      %p104 = scmp.ne.s32.totalorder %s87, %s103
      %p105 = scmp.eq.s32.totalorder %s35, 0
      %p106 = por %p104, %p105
      %s107 = smul.u32 %s36, 2
      %s108 = sadd.s32 %s107, %s37
      %s109 = sld [smem:[#allocation6 + %s108]]
      %s110 = smul.u32 %s48, 2
      %s111 = sadd.s32 %s110, %s44
      %s112 = sld [smem:[#allocation6 + %s111]]
      %s113 = ssub.s32 %s36, %s48
      %s114 = ssub.s32 %s109, %s112
      %s115 = sor.u32 %s113, %s114
      %p116 = scmp.eq.s32.totalorder %s115, 0
      %s118 = sadd.s32 %s117, 1
      %s119 = scalar_select %p116, %s117, %s118
      %p122 = pneg %p116
      %p123 = scmp.eq.s32.totalorder %s29, 3
      %p124 = por %p122, %p123
      %p125 = scmp.ne.s32.totalorder %s117, %s120
      %p126 = scmp.eq.s32.totalorder %s29, 0
      %p127 = por %p125, %p126
      %p128 = scmp.ne.s32.totalorder %s117, %s120
      %p129 = scmp.eq.s32.totalorder %s34, 3
      %p130 = por %p128, %p129
      %p131 = scmp.ne.s32.totalorder %s120, %s121
      %p132 = scmp.eq.s32.totalorder %s34, 0
      %p133 = por %p131, %p132
      %p134 = scmp.ne.s32.totalorder %s120, %s121
      %p135 = scmp.eq.s32.totalorder %s35, 3
      %p136 = por %p134, %p135
      %p138 = scmp.ne.s32.totalorder %s121, %s137
      %p139 = scmp.eq.s32.totalorder %s35, 0
      %p140 = por %p138, %p139
      %s141 = smul.u32 %s36, 2
      %s142 = sadd.s32 %s141, %s37
      %s143 = sld [smem:[#allocation6 + %s142]]
      %s144 = smul.u32 %s48, 2
      %s145 = sadd.s32 %s144, %s44
      %s146 = sld [smem:[#allocation6 + %s145]]
      %s147 = ssub.s32 %s143, %s146
      %p148 = scmp.eq.s32.totalorder %s147, 0
      %s150 = sadd.s32 %s149, 1
      %s151 = scalar_select %p148, %s149, %s150
      %p154 = pneg %p148
      %p155 = scmp.eq.s32.totalorder %s29, 3
      %p156 = por %p154, %p155
      %p157 = scmp.ne.s32.totalorder %s149, %s152
      %p158 = scmp.eq.s32.totalorder %s29, 0
      %p159 = por %p157, %p158
      %p160 = scmp.ne.s32.totalorder %s149, %s152
      %p161 = scmp.eq.s32.totalorder %s34, 3
      %p162 = por %p160, %p161
      %p163 = scmp.ne.s32.totalorder %s152, %s153
      %p164 = scmp.eq.s32.totalorder %s34, 0
      %p165 = por %p163, %p164
      %p166 = scmp.ne.s32.totalorder %s152, %s153
      %p167 = scmp.eq.s32.totalorder %s35, 3
      %p168 = por %p166, %p167
      %p170 = scmp.ne.s32.totalorder %s153, %s169
      %p171 = scmp.eq.s32.totalorder %s35, 0
      %p172 = por %p170, %p171
      %s174 = sadd.s32 %s173, 1
      %p177 = scmp.eq.s32.totalorder %s29, 3
      %p178 = scmp.ne.s32.totalorder %s173, %s175
      %p179 = scmp.eq.s32.totalorder %s29, 0
      %p180 = por %p178, %p179
      %p181 = scmp.ne.s32.totalorder %s173, %s175
      %p182 = scmp.eq.s32.totalorder %s34, 3
      %p183 = por %p181, %p182
      %p184 = scmp.ne.s32.totalorder %s175, %s176
      %p185 = scmp.eq.s32.totalorder %s34, 0
      %p186 = por %p184, %p185
      %p187 = scmp.ne.s32.totalorder %s175, %s176
      %p188 = scmp.eq.s32.totalorder %s35, 3
      %p189 = por %p187, %p188
      %p191 = scmp.ne.s32.totalorder %s176, %s190
      %p192 = scmp.eq.s32.totalorder %s35, 0
      %p193 = por %p191, %p192
      %s194 = ssub.s32 %s36, %s48
      %p195 = scmp.eq.s32.totalorder %s194, 0
      %s197 = sadd.s32 %s196, 1
      %s198 = scalar_select %p195, %s196, %s197
      %p201 = pneg %p195
      %p202 = scmp.eq.s32.totalorder %s29, 3
      %p203 = por %p201, %p202
      %p204 = scmp.ne.s32.totalorder %s196, %s199
      %p205 = scmp.eq.s32.totalorder %s29, 0
      %p206 = por %p204, %p205
      %p207 = scmp.ne.s32.totalorder %s196, %s199
      %p208 = scmp.eq.s32.totalorder %s34, 3
      %p209 = por %p207, %p208
      %p210 = scmp.ne.s32.totalorder %s199, %s200
      %p211 = scmp.eq.s32.totalorder %s34, 0
      %p212 = por %p210, %p211
      %p213 = scmp.ne.s32.totalorder %s199, %s200
      %p214 = scmp.eq.s32.totalorder %s35, 3
      %p215 = por %p213, %p214
      %p217 = scmp.ne.s32.totalorder %s200, %s216
      %p218 = scmp.eq.s32.totalorder %s35, 0
      %p219 = por %p217, %p218
      %p220 = scmp.le.s32.totalorder 1, %s29
      %p221 = scmp.lt.s32.totalorder %s29, 5
      %p222 = pnand %p220, %p221
      %p223 = pneg %p222
      // Predicated region
      $region9: #{tpu_custom_call.1} parent=5 // pred_check
        _
      $region10: #{tpu_custom_call.1} parent=5 // pred_check_branch
        %225 = sbr.rel (%p222) target = $region12
      $region11: #{tpu_custom_call.1} parent=5 // pred_region
        %s226 = ssub.s32 %s29, 1
        // Predicated region
        $region13: #{tpu_custom_call.1} parent=11 // pred_check
          %p227 = pneg %p186
        $region14: #{tpu_custom_call.1} parent=11 // pred_check_branch
          %229 = sbr.rel (%p227) target = $region16
        $region15: #{tpu_custom_call.1} parent=11 // pred_region
          _
        $region16: #{tpu_custom_call.1} parent=11 // pred_fallthru
          _
      $region12: #{tpu_custom_call.1} parent=5 // pred_fallthru
        _
      %p230 = scmp.lt.s32.totalorder %s29, 4
      // Predicated region
      $region17: #{tpu_custom_call.1} parent=5 // pred_check
        %p231 = pneg %p230
      $region18: #{tpu_custom_call.1} parent=5 // pred_check_branch
        %233 = sbr.rel (%p231) target = $region20
      $region19: #{tpu_custom_call.1} parent=5 // pred_region
        // Predicated region
        $region21: #{tpu_custom_call.1} parent=19 // pred_check
          %p234 = pneg %p61
        $region22: #{tpu_custom_call.1} parent=19 // pred_check_branch
          %236 = sbr.rel (%p234) target = $region24
        $region23: #{tpu_custom_call.1} parent=19 // pred_region
          %s237 = smul.u32 32, %s36
          %p238 = scmp.lt.s32.totalorder %s237, 63
          %s239 = scalar_select %p238, %s237, 63
          %s240 = smul.addr %s239, 8
          %s241 = scalar_lea.vmem %s2, %s240
          %s242 = smul.u32 32, %s36
        $region24: #{tpu_custom_call.1} parent=19 // pred_fallthru
          _
        // Predicated region
        $region25: #{tpu_custom_call.1} parent=19 // pred_check
          %p243 = pneg %p93
        $region26: #{tpu_custom_call.1} parent=19 // pred_check_branch
          %245 = sbr.rel (%p243) target = $region28
        $region27: #{tpu_custom_call.1} parent=19 // pred_region
          %s246 = smul.u32 %s36, 2
          %s247 = sadd.s32 %s246, %s37
          %s248 = sld [smem:[#allocation6 + %s247]]
          %s249 = smul.u32 2, %s248
          %p250 = scmp.lt.s32.totalorder %s249, 3
          %s251 = scalar_select %p250, %s249, 3
          %s252 = scalar_lea.vmem %s3, %s251
          %s253 = smul.u32 %s36, 2
          %s254 = sadd.s32 %s253, %s37
          %s255 = sld [smem:[#allocation6 + %s254]]
          %s256 = smul.u32 2, %s255
        $region28: #{tpu_custom_call.1} parent=19 // pred_fallthru
          _
        // Predicated region
        $region29: #{tpu_custom_call.1} parent=19 // pred_check
          %p257 = pneg %p127
        $region30: #{tpu_custom_call.1} parent=19 // pred_check_branch
          %259 = sbr.rel (%p257) target = $region32
        $region31: #{tpu_custom_call.1} parent=19 // pred_region
          %s260 = sand.u32 %s117, 1
          %s261 = sand.u32 %s117, 1
          %s262 = smul.addr %s261, 128
          %s263 = scalar_lea.vmem [#allocation8], %s262
          %s264 = smul.u32 %s36, 2
          %s265 = sadd.s32 %s264, %s37
          %s266 = sld [smem:[#allocation6 + %s265]]
          %s267 = smul.u32 8, %s36
          %s268 = smul.u32 2, %s266
          %s269 = smul.addr %s267, 4
          %s270 = sadd.s32 %s268, %s269
          %s271 = smul.addr %s270, 8
          %s272 = scalar_lea.vmem %s4, %s271
          // Predicated region
          $region33: #{tpu_custom_call.1} parent=31 // pred_check
            _
          $region34: #{tpu_custom_call.1} parent=31 // pred_check_branch
            %274 = sbr.rel (0) target = $region36
          $region35: #{tpu_custom_call.1} parent=31 // pred_region
            // Predicated region
            $region37: #{tpu_custom_call.1} parent=35 // pred_check
              _
            $region38: #{tpu_custom_call.1} parent=35 // pred_check_branch
              %276 = sbr.rel (0) target = $region40
            $region39: #{tpu_custom_call.1} parent=35 // pred_region
              loop: start=0, step=1, limit=1
              $region41: #{tpu_custom_call.1} parent=39 // loop_pre_header
                _
              $region42: #{tpu_custom_call.1} parent=39 // loop_header
                %s278 = sphi 0, %s282
                %p279 = scmp.ge.s32.totalorder %s278, 1
                %s283 = sphi %s272, %s272
                %s284 = sphi %s263, %s263
              $region43: #{tpu_custom_call.1} parent=39 // loop_header_branch
                %281 = sbr.rel (%p279) target = $region47
              $region44: #{tpu_custom_call.1} parent=39 // loop_body
                %v285 = vld [vmem:[%s283] sm:$0xff]
                %286 = vst [vmem:[%s284] sm:$0xff] %v285
                %v287 = vld [vmem:[%s283 + $0x8] sm:$0xff]
                %288 = vst [vmem:[%s284 + $0x8] sm:$0xff] %v287
                %v289 = vld [vmem:[%s283 + $0x20] sm:$0xff]
                %290 = vst [vmem:[%s284 + $0x10] sm:$0xff] %v289
                %v291 = vld [vmem:[%s283 + $0x28] sm:$0xff]
                %292 = vst [vmem:[%s284 + $0x18] sm:$0xff] %v291
                %v293 = vld [vmem:[%s283 + $0x40] sm:$0xff]
                %294 = vst [vmem:[%s284 + $0x20] sm:$0xff] %v293
                %v295 = vld [vmem:[%s283 + $0x48] sm:$0xff]
                %296 = vst [vmem:[%s284 + $0x28] sm:$0xff] %v295
                %v297 = vld [vmem:[%s283 + $0x60] sm:$0xff]
                %298 = vst [vmem:[%s284 + $0x30] sm:$0xff] %v297
                %v299 = vld [vmem:[%s283 + $0x68] sm:$0xff]
                %300 = vst [vmem:[%s284 + $0x38] sm:$0xff] %v299
                %v301 = vld [vmem:[%s283 + $0x80] sm:$0xff]
                %302 = vst [vmem:[%s284 + $0x40] sm:$0xff] %v301
                %v303 = vld [vmem:[%s283 + $0x88] sm:$0xff]
                %304 = vst [vmem:[%s284 + $0x48] sm:$0xff] %v303
                %v305 = vld [vmem:[%s283 + $0xa0] sm:$0xff]
                %306 = vst [vmem:[%s284 + $0x50] sm:$0xff] %v305
                %v307 = vld [vmem:[%s283 + $0xa8] sm:$0xff]
                %308 = vst [vmem:[%s284 + $0x58] sm:$0xff] %v307
                %v309 = vld [vmem:[%s283 + $0xc0] sm:$0xff]
                %310 = vst [vmem:[%s284 + $0x60] sm:$0xff] %v309
                %v311 = vld [vmem:[%s283 + $0xc8] sm:$0xff]
                %312 = vst [vmem:[%s284 + $0x68] sm:$0xff] %v311
                %v313 = vld [vmem:[%s283 + $0xe0] sm:$0xff]
                %314 = vst [vmem:[%s284 + $0x70] sm:$0xff] %v313
                %v315 = vld [vmem:[%s283 + $0xe8] sm:$0xff]
                %316 = vst [vmem:[%s284 + $0x78] sm:$0xff] %v315
              $region45: #{tpu_custom_call.1} parent=39 // loop_footer
                %s282 = sadd.s32 1, %s278
              $region46: #{tpu_custom_call.1} parent=39 // loop_footer_branch
                %277 = sbr.rel target = $region42
              $region47: #{tpu_custom_call.1} parent=39 // loop_exit
                _
            $region40: #{tpu_custom_call.1} parent=35 // pred_fallthru
              _
            // Predicated region
            $region48: #{tpu_custom_call.1} parent=35 // pred_check
              _
            $region49: #{tpu_custom_call.1} parent=35 // pred_check_branch
              %318 = sbr.rel target = $region51
            $region50: #{tpu_custom_call.1} parent=35 // pred_region
              _
            $region51: #{tpu_custom_call.1} parent=35 // pred_fallthru
              _
          $region36: #{tpu_custom_call.1} parent=31 // pred_fallthru
            _
          %319 = vnop
        $region32: #{tpu_custom_call.1} parent=19 // pred_fallthru
          _
        // Predicated region
        $region52: #{tpu_custom_call.1} parent=19 // pred_check
          %p320 = pneg %p159
        $region53: #{tpu_custom_call.1} parent=19 // pred_check_branch
          %322 = sbr.rel (%p320) target = $region55
        $region54: #{tpu_custom_call.1} parent=19 // pred_region
          %s323 = sand.u32 %s149, 1
          %s324 = scalar_lea.sflag [#allocation10], %s323
          %s325 = sand.u32 %s149, 1
          %s326 = smul.addr %s325, 128
          %s327 = scalar_lea.vmem [#allocation9], %s326
          %s328 = smul.u32 %s36, 2
          %s329 = sadd.s32 %s328, %s37
          %s330 = sld [smem:[#allocation6 + %s329]]
          %s331 = smul.u32 32, %s330
          %s333 = ssub.s32 2048, 2048
          %334 = vsyncadd %s324, %s333
          %s335 = smul.addr %s331, 64
          %s336 = scalar_lea.hbm %s5, %s335
          %s337 = sshll.u32 %s327, 4
          %s338 = int_to_ptr.vmem [resolvable:$true] %s337
          %343 = dma.hbm_to_vmem [thread:$0]  %s336, 2048, %s338, %s324, 64, 64, 4
        $region55: #{tpu_custom_call.1} parent=19 // pred_fallthru
          _
      $region20: #{tpu_custom_call.1} parent=5 // pred_fallthru
        _
      %p344 = scmp.le.s32.totalorder 1, %s29
      %p345 = scmp.lt.s32.totalorder %s29, 5
      %p346 = pnand %p344, %p345
      %p347 = pneg %p346
      // Predicated region
      $region56: #{tpu_custom_call.1} parent=5 // pred_check
        _
      $region57: #{tpu_custom_call.1} parent=5 // pred_check_branch
        %349 = sbr.rel (%p346) target = $region59
      $region58: #{tpu_custom_call.1} parent=5 // pred_region
        %s350 = ssub.s32 %s29, 1
        %s351 = sand.u32 %s120, 1
        %s352 = sand.u32 %s120, 1
        %s353 = smul.addr %s352, 128
        %s354 = scalar_lea.vmem [#allocation8], %s353
        // Predicated region
        $region60: #{tpu_custom_call.1} parent=58 // pred_check
          %p355 = pneg %p133
        $region61: #{tpu_custom_call.1} parent=58 // pred_check_branch
          %357 = sbr.rel (%p355) target = $region63
        $region62: #{tpu_custom_call.1} parent=58 // pred_region
          _
        $region63: #{tpu_custom_call.1} parent=58 // pred_fallthru
          _
        %s358 = sand.u32 %s152, 1
        %s359 = scalar_lea.sflag [#allocation10], %s358
        %s360 = sand.u32 %s152, 1
        %s361 = smul.addr %s360, 128
        %s362 = scalar_lea.vmem [#allocation9], %s361
        // Predicated region
        $region64: #{tpu_custom_call.1} parent=58 // pred_check
          %p363 = pneg %p165
        $region65: #{tpu_custom_call.1} parent=58 // pred_check_branch
          %365 = sbr.rel (%p363) target = $region67
        $region66: #{tpu_custom_call.1} parent=58 // pred_region
          %366 = dma.done %s359, 2048
        $region67: #{tpu_custom_call.1} parent=58 // pred_fallthru
          _
        %s367 = smul.u32 32, %s38
        %p368 = scmp.lt.s32.totalorder %s367, 63
        %s369 = scalar_select %p368, %s367, 63
        %s370 = smul.addr %s369, 8
        %s371 = scalar_lea.vmem %s2, %s370
        %p372 = pneg %p67
        %p373 = pneg %p64
        %s374 = smul.u32 %s38, 2
        %s375 = sadd.s32 %s374, %s39
        %s376 = sld [smem:[#allocation6 + %s375]]
        %s377 = smul.u32 2, %s376
        %p378 = scmp.lt.s32.totalorder %s377, 3
        %s379 = scalar_select %p378, %s377, 3
        %s380 = scalar_lea.vmem %s3, %s379
        %p381 = pneg %p99
        %p382 = pneg %p96
        %s383 = sand.u32 %s120, 1
        %s384 = sand.u32 %s120, 1
        %s385 = smul.addr %s384, 128
        %s386 = scalar_lea.vmem [#allocation8], %s385
        %p387 = pneg %p133
        %p388 = pneg %p130
        %s389 = sand.u32 %s152, 1
        %s390 = scalar_lea.sflag [#allocation10], %s389
        %s391 = sand.u32 %s152, 1
        %s392 = smul.addr %s391, 128
        %s393 = scalar_lea.vmem [#allocation9], %s392
        %p394 = pneg %p165
        %p395 = pneg %p162
        %p396 = pneg %p186
        %p397 = pneg %p183
        %p398 = pneg %p212
        %p399 = pneg %p209
        %s400 = sand.u32 %s199, 1
        %s401 = scalar_lea.sflag [#allocation11], %s400
        %s402 = sand.u32 %s199, 1
        %s403 = smul.addr %s402, 128
        %s404 = scalar_lea.vmem [#allocation12], %s403
        %s405 = smul.u32 32, %s38
        %p406 = scmp.lt.s32.totalorder %s405, 63
        %s407 = scalar_select %p406, %s405, 63
        %s408 = smul.addr %s407, 8
        %s409 = scalar_lea.vmem %s2, %s408
        %s410 = smul.u32 32, %s38
        %s411 = smul.u32 %s38, 2
        %s412 = sadd.s32 %s411, %s39
        %s413 = sld [smem:[#allocation6 + %s412]]
        %s414 = smul.u32 2, %s413
        %p415 = scmp.lt.s32.totalorder %s414, 3
        %s416 = scalar_select %p415, %s414, 3
        %s417 = scalar_lea.vmem %s3, %s416
        %s418 = smul.u32 %s38, 2
        %s419 = sadd.s32 %s418, %s39
        %s420 = sld [smem:[#allocation6 + %s419]]
        %s421 = smul.u32 2, %s420
        %s422 = smul.u32 %s38, 2
        %s423 = sadd.s32 %s422, %s39
        %s424 = sld [smem:[#allocation6 + %s423]]
        %s425 = smul.u32 8, %s38
        %s426 = smul.u32 2, %s424
        %s427 = smul.u32 %s38, 2
        %s428 = sadd.s32 %s427, %s39
        %s429 = sld [smem:[#allocation6 + %s428]]
        %s430 = smul.u32 32, %s429
        %s431 = smul.u32 32, %s38
        %p433 = scmp.eq.s32.totalorder %s39, 0
        // Predicated region
        $region68: #{tpu_custom_call.1} parent=58 // pred_check
          %p434 = pneg %p433
        $region69: #{tpu_custom_call.1} parent=58 // pred_check_branch
          %436 = sbr.rel (%p434) target = $region71
        $region70: #{tpu_custom_call.1} parent=58 // pred_region
          %vm437 = vcmask 7168
          %438 = vst.msk [vmem:[#allocation2] sm:$0xff] %vm437, -inf
          %439 = vst.msk [vmem:[#allocation2 + $0x8] sm:$0xff] %vm437, -inf
          %440 = vst.msk [vmem:[#allocation2 + $0x10] sm:$0xff] %vm437, -inf
          %441 = vst.msk [vmem:[#allocation2 + $0x18] sm:$0xff] %vm437, -inf
          %442 = vst.msk [vmem:[#allocation2 + $0x20] sm:$0xff] %vm437, -inf
          %443 = vst.msk [vmem:[#allocation2 + $0x28] sm:$0xff] %vm437, -inf
          %444 = vst.msk [vmem:[#allocation2 + $0x30] sm:$0xff] %vm437, -inf
          %445 = vst.msk [vmem:[#allocation2 + $0x38] sm:$0xff] %vm437, -inf
          %446 = vst.msk [vmem:[#allocation2 + $0x40] sm:$0xff] %vm437, -inf
          %447 = vst.msk [vmem:[#allocation2 + $0x48] sm:$0xff] %vm437, -inf
          %448 = vst.msk [vmem:[#allocation2 + $0x50] sm:$0xff] %vm437, -inf
          %449 = vst.msk [vmem:[#allocation2 + $0x58] sm:$0xff] %vm437, -inf
          %450 = vst.msk [vmem:[#allocation2 + $0x60] sm:$0xff] %vm437, -inf
          %451 = vst.msk [vmem:[#allocation2 + $0x68] sm:$0xff] %vm437, -inf
          %452 = vst.msk [vmem:[#allocation2 + $0x70] sm:$0xff] %vm437, -inf
          %453 = vst.msk [vmem:[#allocation2 + $0x78] sm:$0xff] %vm437, -inf
          %454 = vst.msk [vmem:[#allocation2 + $0x80] sm:$0xff] %vm437, -inf
          %455 = vst.msk [vmem:[#allocation2 + $0x88] sm:$0xff] %vm437, -inf
          %456 = vst.msk [vmem:[#allocation2 + $0x90] sm:$0xff] %vm437, -inf
          %457 = vst.msk [vmem:[#allocation2 + $0x98] sm:$0xff] %vm437, -inf
          %458 = vst.msk [vmem:[#allocation2 + $0xa0] sm:$0xff] %vm437, -inf
          %459 = vst.msk [vmem:[#allocation2 + $0xa8] sm:$0xff] %vm437, -inf
          %460 = vst.msk [vmem:[#allocation2 + $0xb0] sm:$0xff] %vm437, -inf
          %461 = vst.msk [vmem:[#allocation2 + $0xb8] sm:$0xff] %vm437, -inf
          %462 = vst.msk [vmem:[#allocation2 + $0xc0] sm:$0xff] %vm437, -inf
          %463 = vst.msk [vmem:[#allocation2 + $0xc8] sm:$0xff] %vm437, -inf
          %464 = vst.msk [vmem:[#allocation2 + $0xd0] sm:$0xff] %vm437, -inf
          %465 = vst.msk [vmem:[#allocation2 + $0xd8] sm:$0xff] %vm437, -inf
          %466 = vst.msk [vmem:[#allocation2 + $0xe0] sm:$0xff] %vm437, -inf
          %467 = vst.msk [vmem:[#allocation2 + $0xe8] sm:$0xff] %vm437, -inf
          %468 = vst.msk [vmem:[#allocation2 + $0xf0] sm:$0xff] %vm437, -inf
          %469 = vst.msk [vmem:[#allocation2 + $0xf8] sm:$0xff] %vm437, -inf
          %470 = vst.msk [vmem:[#allocation3] sm:$0xff] %vm437, 0.0
          %471 = vst.msk [vmem:[#allocation3 + $0x8] sm:$0xff] %vm437, 0.0
          %472 = vst.msk [vmem:[#allocation3 + $0x10] sm:$0xff] %vm437, 0.0
          %473 = vst.msk [vmem:[#allocation3 + $0x18] sm:$0xff] %vm437, 0.0
          %474 = vst.msk [vmem:[#allocation3 + $0x20] sm:$0xff] %vm437, 0.0
          %475 = vst.msk [vmem:[#allocation3 + $0x28] sm:$0xff] %vm437, 0.0
          %476 = vst.msk [vmem:[#allocation3 + $0x30] sm:$0xff] %vm437, 0.0
          %477 = vst.msk [vmem:[#allocation3 + $0x38] sm:$0xff] %vm437, 0.0
          %478 = vst.msk [vmem:[#allocation3 + $0x40] sm:$0xff] %vm437, 0.0
          %479 = vst.msk [vmem:[#allocation3 + $0x48] sm:$0xff] %vm437, 0.0
          %480 = vst.msk [vmem:[#allocation3 + $0x50] sm:$0xff] %vm437, 0.0
          %481 = vst.msk [vmem:[#allocation3 + $0x58] sm:$0xff] %vm437, 0.0
          %482 = vst.msk [vmem:[#allocation3 + $0x60] sm:$0xff] %vm437, 0.0
          %483 = vst.msk [vmem:[#allocation3 + $0x68] sm:$0xff] %vm437, 0.0
          %484 = vst.msk [vmem:[#allocation3 + $0x70] sm:$0xff] %vm437, 0.0
          %485 = vst.msk [vmem:[#allocation3 + $0x78] sm:$0xff] %vm437, 0.0
          %486 = vst.msk [vmem:[#allocation3 + $0x80] sm:$0xff] %vm437, 0.0
          %487 = vst.msk [vmem:[#allocation3 + $0x88] sm:$0xff] %vm437, 0.0
          %488 = vst.msk [vmem:[#allocation3 + $0x90] sm:$0xff] %vm437, 0.0
          %489 = vst.msk [vmem:[#allocation3 + $0x98] sm:$0xff] %vm437, 0.0
          %490 = vst.msk [vmem:[#allocation3 + $0xa0] sm:$0xff] %vm437, 0.0
          %491 = vst.msk [vmem:[#allocation3 + $0xa8] sm:$0xff] %vm437, 0.0
          %492 = vst.msk [vmem:[#allocation3 + $0xb0] sm:$0xff] %vm437, 0.0
          %493 = vst.msk [vmem:[#allocation3 + $0xb8] sm:$0xff] %vm437, 0.0
          %494 = vst.msk [vmem:[#allocation3 + $0xc0] sm:$0xff] %vm437, 0.0
          %495 = vst.msk [vmem:[#allocation3 + $0xc8] sm:$0xff] %vm437, 0.0
          %496 = vst.msk [vmem:[#allocation3 + $0xd0] sm:$0xff] %vm437, 0.0
          %497 = vst.msk [vmem:[#allocation3 + $0xd8] sm:$0xff] %vm437, 0.0
          %498 = vst.msk [vmem:[#allocation3 + $0xe0] sm:$0xff] %vm437, 0.0
          %499 = vst.msk [vmem:[#allocation3 + $0xe8] sm:$0xff] %vm437, 0.0
          %500 = vst.msk [vmem:[#allocation3 + $0xf0] sm:$0xff] %vm437, 0.0
          %501 = vst.msk [vmem:[#allocation3 + $0xf8] sm:$0xff] %vm437, 0.0
          %502 = vst [vmem:[#allocation4] sm:$0xff] 0.0
          %503 = vst [vmem:[#allocation4 + $0x8] sm:$0xff] 0.0
          %504 = vst [vmem:[#allocation4 + $0x10] sm:$0xff] 0.0
          %505 = vst [vmem:[#allocation4 + $0x18] sm:$0xff] 0.0
          %506 = vst [vmem:[#allocation4 + $0x20] sm:$0xff] 0.0
          %507 = vst [vmem:[#allocation4 + $0x28] sm:$0xff] 0.0
          %508 = vst [vmem:[#allocation4 + $0x30] sm:$0xff] 0.0
          %509 = vst [vmem:[#allocation4 + $0x38] sm:$0xff] 0.0
          %510 = vst [vmem:[#allocation4 + $0x40] sm:$0xff] 0.0
          %511 = vst [vmem:[#allocation4 + $0x48] sm:$0xff] 0.0
          %512 = vst [vmem:[#allocation4 + $0x50] sm:$0xff] 0.0
          %513 = vst [vmem:[#allocation4 + $0x58] sm:$0xff] 0.0
          %514 = vst [vmem:[#allocation4 + $0x60] sm:$0xff] 0.0
          %515 = vst [vmem:[#allocation4 + $0x68] sm:$0xff] 0.0
          %516 = vst [vmem:[#allocation4 + $0x70] sm:$0xff] 0.0
          %517 = vst [vmem:[#allocation4 + $0x78] sm:$0xff] 0.0
          %518 = vst [vmem:[#allocation4 + $0x80] sm:$0xff] 0.0
          %519 = vst [vmem:[#allocation4 + $0x88] sm:$0xff] 0.0
          %520 = vst [vmem:[#allocation4 + $0x90] sm:$0xff] 0.0
          %521 = vst [vmem:[#allocation4 + $0x98] sm:$0xff] 0.0
          %522 = vst [vmem:[#allocation4 + $0xa0] sm:$0xff] 0.0
          %523 = vst [vmem:[#allocation4 + $0xa8] sm:$0xff] 0.0
          %524 = vst [vmem:[#allocation4 + $0xb0] sm:$0xff] 0.0
          %525 = vst [vmem:[#allocation4 + $0xb8] sm:$0xff] 0.0
          %526 = vst [vmem:[#allocation4 + $0xc0] sm:$0xff] 0.0
          %527 = vst [vmem:[#allocation4 + $0xc8] sm:$0xff] 0.0
          %528 = vst [vmem:[#allocation4 + $0xd0] sm:$0xff] 0.0
          %529 = vst [vmem:[#allocation4 + $0xd8] sm:$0xff] 0.0
          %530 = vst [vmem:[#allocation4 + $0xe0] sm:$0xff] 0.0
          %531 = vst [vmem:[#allocation4 + $0xe8] sm:$0xff] 0.0
          %532 = vst [vmem:[#allocation4 + $0xf0] sm:$0xff] 0.0
          %533 = vst [vmem:[#allocation4 + $0xf8] sm:$0xff] 0.0
        $region71: #{tpu_custom_call.1} parent=58 // pred_fallthru
          _
        %s534 = sld [smem:[#allocation7 + %s38]]
        %p535 = scmp.lt.s32.totalorder %s39, %s534
        // Predicated region
        $region72: #{tpu_custom_call.1} parent=58 // pred_check
          %p536 = pneg %p535
        $region73: #{tpu_custom_call.1} parent=58 // pred_check_branch
          %538 = sbr.rel (%p536) target = $region75
        $region74: #{tpu_custom_call.1} parent=58 // pred_region
          %v539 = vld [vmem:[%s409] sm:$0xff]
          %v540 = vld [vmem:[%s409 + $0x8] sm:$0xff]
          %v541 = vld [vmem:[%s409 + $0x10] sm:$0xff]
          %v542 = vld [vmem:[%s409 + $0x18] sm:$0xff]
          %v543 = vld [vmem:[%s409 + $0x20] sm:$0xff]
          %v544 = vld [vmem:[%s409 + $0x28] sm:$0xff]
          %v545 = vld [vmem:[%s409 + $0x30] sm:$0xff]
          %v546 = vld [vmem:[%s409 + $0x38] sm:$0xff]
          %v547 = vld [vmem:[%s409 + $0x40] sm:$0xff]
          %v548 = vld [vmem:[%s409 + $0x48] sm:$0xff]
          %v549 = vld [vmem:[%s409 + $0x50] sm:$0xff]
          %v550 = vld [vmem:[%s409 + $0x58] sm:$0xff]
          %v551 = vld [vmem:[%s409 + $0x60] sm:$0xff]
          %v552 = vld [vmem:[%s409 + $0x68] sm:$0xff]
          %v553 = vld [vmem:[%s409 + $0x70] sm:$0xff]
          %v554 = vld [vmem:[%s409 + $0x78] sm:$0xff]
          %v555 = vld [vmem:[%s409 + $0x80] sm:$0xff]
          %v556 = vld [vmem:[%s409 + $0x88] sm:$0xff]
          %v557 = vld [vmem:[%s409 + $0x90] sm:$0xff]
          %v558 = vld [vmem:[%s409 + $0x98] sm:$0xff]
          %v559 = vld [vmem:[%s409 + $0xa0] sm:$0xff]
          %v560 = vld [vmem:[%s409 + $0xa8] sm:$0xff]
          %v561 = vld [vmem:[%s409 + $0xb0] sm:$0xff]
          %v562 = vld [vmem:[%s409 + $0xb8] sm:$0xff]
          %v563 = vld [vmem:[%s409 + $0xc0] sm:$0xff]
          %v564 = vld [vmem:[%s409 + $0xc8] sm:$0xff]
          %v565 = vld [vmem:[%s409 + $0xd0] sm:$0xff]
          %v566 = vld [vmem:[%s409 + $0xd8] sm:$0xff]
          %v567 = vld [vmem:[%s409 + $0xe0] sm:$0xff]
          %v568 = vld [vmem:[%s409 + $0xe8] sm:$0xff]
          %v569 = vld [vmem:[%s409 + $0xf0] sm:$0xff]
          %v570 = vld [vmem:[%s409 + $0xf8] sm:$0xff]
          %v571 = vld [vmem:[%s417] sm:$0x3]
          %573 = vset.pattern.permute.xlu0 0
          %574 = vperm.xlu0 %573, %v539
          %v575 = vpop.permute.xlu0 %574
          %578 = vset.pattern.permute.xlu0 0
          %579 = vperm.xlu0 %578, %v540
          %v580 = vpop.permute.xlu0 %579
          %583 = vset.pattern.permute.xlu0 0
          %584 = vperm.xlu0 %583, %v541
          %v585 = vpop.permute.xlu0 %584
          %588 = vset.pattern.permute.xlu0 0
          %589 = vperm.xlu0 %588, %v542
          %v590 = vpop.permute.xlu0 %589
          %593 = vset.pattern.permute.xlu0 0
          %594 = vperm.xlu0 %593, %v543
          %v595 = vpop.permute.xlu0 %594
          %598 = vset.pattern.permute.xlu0 0
          %599 = vperm.xlu0 %598, %v544
          %v600 = vpop.permute.xlu0 %599
          %603 = vset.pattern.permute.xlu0 0
          %604 = vperm.xlu0 %603, %v545
          %v605 = vpop.permute.xlu0 %604
          %608 = vset.pattern.permute.xlu0 0
          %609 = vperm.xlu0 %608, %v546
          %v610 = vpop.permute.xlu0 %609
          %613 = vset.pattern.permute.xlu0 0
          %614 = vperm.xlu0 %613, %v547
          %v615 = vpop.permute.xlu0 %614
          %618 = vset.pattern.permute.xlu0 0
          %619 = vperm.xlu0 %618, %v548
          %v620 = vpop.permute.xlu0 %619
          %623 = vset.pattern.permute.xlu0 0
          %624 = vperm.xlu0 %623, %v549
          %v625 = vpop.permute.xlu0 %624
          %628 = vset.pattern.permute.xlu0 0
          %629 = vperm.xlu0 %628, %v550
          %v630 = vpop.permute.xlu0 %629
          %633 = vset.pattern.permute.xlu0 0
          %634 = vperm.xlu0 %633, %v551
          %v635 = vpop.permute.xlu0 %634
          %638 = vset.pattern.permute.xlu0 0
          %639 = vperm.xlu0 %638, %v552
          %v640 = vpop.permute.xlu0 %639
          %643 = vset.pattern.permute.xlu0 0
          %644 = vperm.xlu0 %643, %v553
          %v645 = vpop.permute.xlu0 %644
          %648 = vset.pattern.permute.xlu0 0
          %649 = vperm.xlu0 %648, %v554
          %v650 = vpop.permute.xlu0 %649
          %653 = vset.pattern.permute.xlu0 0
          %654 = vperm.xlu0 %653, %v555
          %v655 = vpop.permute.xlu0 %654
          %658 = vset.pattern.permute.xlu0 0
          %659 = vperm.xlu0 %658, %v556
          %v660 = vpop.permute.xlu0 %659
          %663 = vset.pattern.permute.xlu0 0
          %664 = vperm.xlu0 %663, %v557
          %v665 = vpop.permute.xlu0 %664
          %668 = vset.pattern.permute.xlu0 0
          %669 = vperm.xlu0 %668, %v558
          %v670 = vpop.permute.xlu0 %669
          %673 = vset.pattern.permute.xlu0 0
          %674 = vperm.xlu0 %673, %v559
          %v675 = vpop.permute.xlu0 %674
          %678 = vset.pattern.permute.xlu0 0
          %679 = vperm.xlu0 %678, %v560
          %v680 = vpop.permute.xlu0 %679
          %683 = vset.pattern.permute.xlu0 0
          %684 = vperm.xlu0 %683, %v561
          %v685 = vpop.permute.xlu0 %684
          %688 = vset.pattern.permute.xlu0 0
          %689 = vperm.xlu0 %688, %v562
          %v690 = vpop.permute.xlu0 %689
          %693 = vset.pattern.permute.xlu0 0
          %694 = vperm.xlu0 %693, %v563
          %v695 = vpop.permute.xlu0 %694
          %698 = vset.pattern.permute.xlu0 0
          %699 = vperm.xlu0 %698, %v564
          %v700 = vpop.permute.xlu0 %699
          %703 = vset.pattern.permute.xlu0 0
          %704 = vperm.xlu0 %703, %v565
          %v705 = vpop.permute.xlu0 %704
          %708 = vset.pattern.permute.xlu0 0
          %709 = vperm.xlu0 %708, %v566
          %v710 = vpop.permute.xlu0 %709
          %713 = vset.pattern.permute.xlu0 0
          %714 = vperm.xlu0 %713, %v567
          %v715 = vpop.permute.xlu0 %714
          %718 = vset.pattern.permute.xlu0 0
          %719 = vperm.xlu0 %718, %v568
          %v720 = vpop.permute.xlu0 %719
          %723 = vset.pattern.permute.xlu0 0
          %724 = vperm.xlu0 %723, %v569
          %v725 = vpop.permute.xlu0 %724
          %728 = vset.pattern.permute.xlu0 0
          %729 = vperm.xlu0 %728, %v570
          %v730 = vpop.permute.xlu0 %729
          %v733 = vlaneseq
          %v734 = vshrl.u32 %v733, 7
          %v735 = vsub.s32 0, %v734
          %v736 = vrot.slane %v571, %v735
          %v737 = vlaneseq
          %v738 = vshrl.u32 %v737, 7
          %v739 = vsub.s32 1, %v738
          %v740 = vrot.slane %v571, %v739
          %v743 = vadd.f32 %v575, %v736
          %v744 = vadd.f32 %v575, %v740
          %v745 = vadd.f32 %v580, %v736
          %v746 = vadd.f32 %v580, %v740
          %v747 = vadd.f32 %v585, %v736
          %v748 = vadd.f32 %v585, %v740
          %v749 = vadd.f32 %v590, %v736
          %v750 = vadd.f32 %v590, %v740
          %v751 = vadd.f32 %v595, %v736
          %v752 = vadd.f32 %v595, %v740
          %v753 = vadd.f32 %v600, %v736
          %v754 = vadd.f32 %v600, %v740
          %v755 = vadd.f32 %v605, %v736
          %v756 = vadd.f32 %v605, %v740
          %v757 = vadd.f32 %v610, %v736
          %v758 = vadd.f32 %v610, %v740
          %v759 = vadd.f32 %v615, %v736
          %v760 = vadd.f32 %v615, %v740
          %v761 = vadd.f32 %v620, %v736
          %v762 = vadd.f32 %v620, %v740
          %v763 = vadd.f32 %v625, %v736
          %v764 = vadd.f32 %v625, %v740
          %v765 = vadd.f32 %v630, %v736
          %v766 = vadd.f32 %v630, %v740
          %v767 = vadd.f32 %v635, %v736
          %v768 = vadd.f32 %v635, %v740
          %v769 = vadd.f32 %v640, %v736
          %v770 = vadd.f32 %v640, %v740
          %v771 = vadd.f32 %v645, %v736
          %v772 = vadd.f32 %v645, %v740
          %v773 = vadd.f32 %v650, %v736
          %v774 = vadd.f32 %v650, %v740
          %v775 = vadd.f32 %v655, %v736
          %v776 = vadd.f32 %v655, %v740
          %v777 = vadd.f32 %v660, %v736
          %v778 = vadd.f32 %v660, %v740
          %v779 = vadd.f32 %v665, %v736
          %v780 = vadd.f32 %v665, %v740
          %v781 = vadd.f32 %v670, %v736
          %v782 = vadd.f32 %v670, %v740
          %v783 = vadd.f32 %v675, %v736
          %v784 = vadd.f32 %v675, %v740
          %v785 = vadd.f32 %v680, %v736
          %v786 = vadd.f32 %v680, %v740
          %v787 = vadd.f32 %v685, %v736
          %v788 = vadd.f32 %v685, %v740
          %v789 = vadd.f32 %v690, %v736
          %v790 = vadd.f32 %v690, %v740
          %v791 = vadd.f32 %v695, %v736
          %v792 = vadd.f32 %v695, %v740
          %v793 = vadd.f32 %v700, %v736
          %v794 = vadd.f32 %v700, %v740
          %v795 = vadd.f32 %v705, %v736
          %v796 = vadd.f32 %v705, %v740
          %v797 = vadd.f32 %v710, %v736
          %v798 = vadd.f32 %v710, %v740
          %v799 = vadd.f32 %v715, %v736
          %v800 = vadd.f32 %v715, %v740
          %v801 = vadd.f32 %v720, %v736
          %v802 = vadd.f32 %v720, %v740
          %v803 = vadd.f32 %v725, %v736
          %v804 = vadd.f32 %v725, %v740
          %v805 = vadd.f32 %v730, %v736
          %v806 = vadd.f32 %v730, %v740
          %vm807 = vcmp.ge.f32.partialorder %v743, 0.0
          %vm808 = vcmp.ge.f32.partialorder %v744, 0.0
          %vm809 = vcmp.ge.f32.partialorder %v745, 0.0
          %vm810 = vcmp.ge.f32.partialorder %v746, 0.0
          %vm811 = vcmp.ge.f32.partialorder %v747, 0.0
          %vm812 = vcmp.ge.f32.partialorder %v748, 0.0
          %vm813 = vcmp.ge.f32.partialorder %v749, 0.0
          %vm814 = vcmp.ge.f32.partialorder %v750, 0.0
          %vm815 = vcmp.ge.f32.partialorder %v751, 0.0
          %vm816 = vcmp.ge.f32.partialorder %v752, 0.0
          %vm817 = vcmp.ge.f32.partialorder %v753, 0.0
          %vm818 = vcmp.ge.f32.partialorder %v754, 0.0
          %vm819 = vcmp.ge.f32.partialorder %v755, 0.0
          %vm820 = vcmp.ge.f32.partialorder %v756, 0.0
          %vm821 = vcmp.ge.f32.partialorder %v757, 0.0
          %vm822 = vcmp.ge.f32.partialorder %v758, 0.0
          %vm823 = vcmp.ge.f32.partialorder %v759, 0.0
          %vm824 = vcmp.ge.f32.partialorder %v760, 0.0
          %vm825 = vcmp.ge.f32.partialorder %v761, 0.0
          %vm826 = vcmp.ge.f32.partialorder %v762, 0.0
          %vm827 = vcmp.ge.f32.partialorder %v763, 0.0
          %vm828 = vcmp.ge.f32.partialorder %v764, 0.0
          %vm829 = vcmp.ge.f32.partialorder %v765, 0.0
          %vm830 = vcmp.ge.f32.partialorder %v766, 0.0
          %vm831 = vcmp.ge.f32.partialorder %v767, 0.0
          %vm832 = vcmp.ge.f32.partialorder %v768, 0.0
          %vm833 = vcmp.ge.f32.partialorder %v769, 0.0
          %vm834 = vcmp.ge.f32.partialorder %v770, 0.0
          %vm835 = vcmp.ge.f32.partialorder %v771, 0.0
          %vm836 = vcmp.ge.f32.partialorder %v772, 0.0
          %vm837 = vcmp.ge.f32.partialorder %v773, 0.0
          %vm838 = vcmp.ge.f32.partialorder %v774, 0.0
          %vm839 = vcmp.ge.f32.partialorder %v775, 0.0
          %vm840 = vcmp.ge.f32.partialorder %v776, 0.0
          %vm841 = vcmp.ge.f32.partialorder %v777, 0.0
          %vm842 = vcmp.ge.f32.partialorder %v778, 0.0
          %vm843 = vcmp.ge.f32.partialorder %v779, 0.0
          %vm844 = vcmp.ge.f32.partialorder %v780, 0.0
          %vm845 = vcmp.ge.f32.partialorder %v781, 0.0
          %vm846 = vcmp.ge.f32.partialorder %v782, 0.0
          %vm847 = vcmp.ge.f32.partialorder %v783, 0.0
          %vm848 = vcmp.ge.f32.partialorder %v784, 0.0
          %vm849 = vcmp.ge.f32.partialorder %v785, 0.0
          %vm850 = vcmp.ge.f32.partialorder %v786, 0.0
          %vm851 = vcmp.ge.f32.partialorder %v787, 0.0
          %vm852 = vcmp.ge.f32.partialorder %v788, 0.0
          %vm853 = vcmp.ge.f32.partialorder %v789, 0.0
          %vm854 = vcmp.ge.f32.partialorder %v790, 0.0
          %vm855 = vcmp.ge.f32.partialorder %v791, 0.0
          %vm856 = vcmp.ge.f32.partialorder %v792, 0.0
          %vm857 = vcmp.ge.f32.partialorder %v793, 0.0
          %vm858 = vcmp.ge.f32.partialorder %v794, 0.0
          %vm859 = vcmp.ge.f32.partialorder %v795, 0.0
          %vm860 = vcmp.ge.f32.partialorder %v796, 0.0
          %vm861 = vcmp.ge.f32.partialorder %v797, 0.0
          %vm862 = vcmp.ge.f32.partialorder %v798, 0.0
          %vm863 = vcmp.ge.f32.partialorder %v799, 0.0
          %vm864 = vcmp.ge.f32.partialorder %v800, 0.0
          %vm865 = vcmp.ge.f32.partialorder %v801, 0.0
          %vm866 = vcmp.ge.f32.partialorder %v802, 0.0
          %vm867 = vcmp.ge.f32.partialorder %v803, 0.0
          %vm868 = vcmp.ge.f32.partialorder %v804, 0.0
          %vm869 = vcmp.ge.f32.partialorder %v805, 0.0
          %vm870 = vcmp.ge.f32.partialorder %v806, 0.0
          %v871 = vmul.f32 %v743, 0.2
          %v872 = vmul.f32 %v744, 0.2
          %v873 = vmul.f32 %v745, 0.2
          %v874 = vmul.f32 %v746, 0.2
          %v875 = vmul.f32 %v747, 0.2
          %v876 = vmul.f32 %v748, 0.2
          %v877 = vmul.f32 %v749, 0.2
          %v878 = vmul.f32 %v750, 0.2
          %v879 = vmul.f32 %v751, 0.2
          %v880 = vmul.f32 %v752, 0.2
          %v881 = vmul.f32 %v753, 0.2
          %v882 = vmul.f32 %v754, 0.2
          %v883 = vmul.f32 %v755, 0.2
          %v884 = vmul.f32 %v756, 0.2
          %v885 = vmul.f32 %v757, 0.2
          %v886 = vmul.f32 %v758, 0.2
          %v887 = vmul.f32 %v759, 0.2
          %v888 = vmul.f32 %v760, 0.2
          %v889 = vmul.f32 %v761, 0.2
          %v890 = vmul.f32 %v762, 0.2
          %v891 = vmul.f32 %v763, 0.2
          %v892 = vmul.f32 %v764, 0.2
          %v893 = vmul.f32 %v765, 0.2
          %v894 = vmul.f32 %v766, 0.2
          %v895 = vmul.f32 %v767, 0.2
          %v896 = vmul.f32 %v768, 0.2
          %v897 = vmul.f32 %v769, 0.2
          %v898 = vmul.f32 %v770, 0.2
          %v899 = vmul.f32 %v771, 0.2
          %v900 = vmul.f32 %v772, 0.2
          %v901 = vmul.f32 %v773, 0.2
          %v902 = vmul.f32 %v774, 0.2
          %v903 = vmul.f32 %v775, 0.2
          %v904 = vmul.f32 %v776, 0.2
          %v905 = vmul.f32 %v777, 0.2
          %v906 = vmul.f32 %v778, 0.2
          %v907 = vmul.f32 %v779, 0.2
          %v908 = vmul.f32 %v780, 0.2
          %v909 = vmul.f32 %v781, 0.2
          %v910 = vmul.f32 %v782, 0.2
          %v911 = vmul.f32 %v783, 0.2
          %v912 = vmul.f32 %v784, 0.2
          %v913 = vmul.f32 %v785, 0.2
          %v914 = vmul.f32 %v786, 0.2
          %v915 = vmul.f32 %v787, 0.2
          %v916 = vmul.f32 %v788, 0.2
          %v917 = vmul.f32 %v789, 0.2
          %v918 = vmul.f32 %v790, 0.2
          %v919 = vmul.f32 %v791, 0.2
          %v920 = vmul.f32 %v792, 0.2
          %v921 = vmul.f32 %v793, 0.2
          %v922 = vmul.f32 %v794, 0.2
          %v923 = vmul.f32 %v795, 0.2
          %v924 = vmul.f32 %v796, 0.2
          %v925 = vmul.f32 %v797, 0.2
          %v926 = vmul.f32 %v798, 0.2
          %v927 = vmul.f32 %v799, 0.2
          %v928 = vmul.f32 %v800, 0.2
          %v929 = vmul.f32 %v801, 0.2
          %v930 = vmul.f32 %v802, 0.2
          %v931 = vmul.f32 %v803, 0.2
          %v932 = vmul.f32 %v804, 0.2
          %v933 = vmul.f32 %v805, 0.2
          %v934 = vmul.f32 %v806, 0.2
          %v935 = vsel %vm807, %v743, %v871
          %v936 = vsel %vm808, %v744, %v872
          %v937 = vsel %vm809, %v745, %v873
          %v938 = vsel %vm810, %v746, %v874
          %v939 = vsel %vm811, %v747, %v875
          %v940 = vsel %vm812, %v748, %v876
          %v941 = vsel %vm813, %v749, %v877
          %v942 = vsel %vm814, %v750, %v878
          %v943 = vsel %vm815, %v751, %v879
          %v944 = vsel %vm816, %v752, %v880
          %v945 = vsel %vm817, %v753, %v881
          %v946 = vsel %vm818, %v754, %v882
          %v947 = vsel %vm819, %v755, %v883
          %v948 = vsel %vm820, %v756, %v884
          %v949 = vsel %vm821, %v757, %v885
          %v950 = vsel %vm822, %v758, %v886
          %v951 = vsel %vm823, %v759, %v887
          %v952 = vsel %vm824, %v760, %v888
          %v953 = vsel %vm825, %v761, %v889
          %v954 = vsel %vm826, %v762, %v890
          %v955 = vsel %vm827, %v763, %v891
          %v956 = vsel %vm828, %v764, %v892
          %v957 = vsel %vm829, %v765, %v893
          %v958 = vsel %vm830, %v766, %v894
          %v959 = vsel %vm831, %v767, %v895
          %v960 = vsel %vm832, %v768, %v896
          %v961 = vsel %vm833, %v769, %v897
          %v962 = vsel %vm834, %v770, %v898
          %v963 = vsel %vm835, %v771, %v899
          %v964 = vsel %vm836, %v772, %v900
          %v965 = vsel %vm837, %v773, %v901
          %v966 = vsel %vm838, %v774, %v902
          %v967 = vsel %vm839, %v775, %v903
          %v968 = vsel %vm840, %v776, %v904
          %v969 = vsel %vm841, %v777, %v905
          %v970 = vsel %vm842, %v778, %v906
          %v971 = vsel %vm843, %v779, %v907
          %v972 = vsel %vm844, %v780, %v908
          %v973 = vsel %vm845, %v781, %v909
          %v974 = vsel %vm846, %v782, %v910
          %v975 = vsel %vm847, %v783, %v911
          %v976 = vsel %vm848, %v784, %v912
          %v977 = vsel %vm849, %v785, %v913
          %v978 = vsel %vm850, %v786, %v914
          %v979 = vsel %vm851, %v787, %v915
          %v980 = vsel %vm852, %v788, %v916
          %v981 = vsel %vm853, %v789, %v917
          %v982 = vsel %vm854, %v790, %v918
          %v983 = vsel %vm855, %v791, %v919
          %v984 = vsel %vm856, %v792, %v920
          %v985 = vsel %vm857, %v793, %v921
          %v986 = vsel %vm858, %v794, %v922
          %v987 = vsel %vm859, %v795, %v923
          %v988 = vsel %vm860, %v796, %v924
          %v989 = vsel %vm861, %v797, %v925
          %v990 = vsel %vm862, %v798, %v926
          %v991 = vsel %vm863, %v799, %v927
          %v992 = vsel %vm864, %v800, %v928
          %v993 = vsel %vm865, %v801, %v929
          %v994 = vsel %vm866, %v802, %v930
          %v995 = vsel %vm867, %v803, %v931
          %v996 = vsel %vm868, %v804, %v932
          %v997 = vsel %vm869, %v805, %v933
          %v998 = vsel %vm870, %v806, %v934
          %v999 = vld [vmem:[%s354] sm:$0xff]
          %v1000 = vld [vmem:[%s354 + $0x8] sm:$0xff]
          %v1001 = vld [vmem:[%s354 + $0x10] sm:$0xff]
          %v1002 = vld [vmem:[%s354 + $0x18] sm:$0xff]
          %v1003 = vld [vmem:[%s354 + $0x20] sm:$0xff]
          %v1004 = vld [vmem:[%s354 + $0x28] sm:$0xff]
          %v1005 = vld [vmem:[%s354 + $0x30] sm:$0xff]
          %v1006 = vld [vmem:[%s354 + $0x38] sm:$0xff]
          %v1007 = vld [vmem:[%s354 + $0x40] sm:$0xff]
          %v1008 = vld [vmem:[%s354 + $0x48] sm:$0xff]
          %v1009 = vld [vmem:[%s354 + $0x50] sm:$0xff]
          %v1010 = vld [vmem:[%s354 + $0x58] sm:$0xff]
          %v1011 = vld [vmem:[%s354 + $0x60] sm:$0xff]
          %v1012 = vld [vmem:[%s354 + $0x68] sm:$0xff]
          %v1013 = vld [vmem:[%s354 + $0x70] sm:$0xff]
          %v1014 = vld [vmem:[%s354 + $0x78] sm:$0xff]
          %v1015 = vunpack.c.0.s8 %v999
          %v1016 = vunpack.c.0.s8 %v1000
          %v1017 = vunpack.c.1.s8 %v999
          %v1018 = vunpack.c.1.s8 %v1000
          %v1019 = vunpack.c.2.s8 %v999
          %v1020 = vunpack.c.2.s8 %v1000
          %v1021 = vunpack.c.3.s8 %v999
          %v1022 = vunpack.c.3.s8 %v1000
          %v1023 = vunpack.c.0.s8 %v1001
          %v1024 = vunpack.c.0.s8 %v1002
          %v1025 = vunpack.c.1.s8 %v1001
          %v1026 = vunpack.c.1.s8 %v1002
          %v1027 = vunpack.c.2.s8 %v1001
          %v1028 = vunpack.c.2.s8 %v1002
          %v1029 = vunpack.c.3.s8 %v1001
          %v1030 = vunpack.c.3.s8 %v1002
          %v1031 = vunpack.c.0.s8 %v1003
          %v1032 = vunpack.c.0.s8 %v1004
          %v1033 = vunpack.c.1.s8 %v1003
          %v1034 = vunpack.c.1.s8 %v1004
          %v1035 = vunpack.c.2.s8 %v1003
          %v1036 = vunpack.c.2.s8 %v1004
          %v1037 = vunpack.c.3.s8 %v1003
          %v1038 = vunpack.c.3.s8 %v1004
          %v1039 = vunpack.c.0.s8 %v1005
          %v1040 = vunpack.c.0.s8 %v1006
          %v1041 = vunpack.c.1.s8 %v1005
          %v1042 = vunpack.c.1.s8 %v1006
          %v1043 = vunpack.c.2.s8 %v1005
          %v1044 = vunpack.c.2.s8 %v1006
          %v1045 = vunpack.c.3.s8 %v1005
          %v1046 = vunpack.c.3.s8 %v1006
          %v1047 = vunpack.c.0.s8 %v1007
          %v1048 = vunpack.c.0.s8 %v1008
          %v1049 = vunpack.c.1.s8 %v1007
          %v1050 = vunpack.c.1.s8 %v1008
          %v1051 = vunpack.c.2.s8 %v1007
          %v1052 = vunpack.c.2.s8 %v1008
          %v1053 = vunpack.c.3.s8 %v1007
          %v1054 = vunpack.c.3.s8 %v1008
          %v1055 = vunpack.c.0.s8 %v1009
          %v1056 = vunpack.c.0.s8 %v1010
          %v1057 = vunpack.c.1.s8 %v1009
          %v1058 = vunpack.c.1.s8 %v1010
          %v1059 = vunpack.c.2.s8 %v1009
          %v1060 = vunpack.c.2.s8 %v1010
          %v1061 = vunpack.c.3.s8 %v1009
          %v1062 = vunpack.c.3.s8 %v1010
          %v1063 = vunpack.c.0.s8 %v1011
          %v1064 = vunpack.c.0.s8 %v1012
          %v1065 = vunpack.c.1.s8 %v1011
          %v1066 = vunpack.c.1.s8 %v1012
          %v1067 = vunpack.c.2.s8 %v1011
          %v1068 = vunpack.c.2.s8 %v1012
          %v1069 = vunpack.c.3.s8 %v1011
          %v1070 = vunpack.c.3.s8 %v1012
          %v1071 = vunpack.c.0.s8 %v1013
          %v1072 = vunpack.c.0.s8 %v1014
          %v1073 = vunpack.c.1.s8 %v1013
          %v1074 = vunpack.c.1.s8 %v1014
          %v1075 = vunpack.c.2.s8 %v1013
          %v1076 = vunpack.c.2.s8 %v1014
          %v1077 = vunpack.c.3.s8 %v1013
          %v1078 = vunpack.c.3.s8 %v1014
          %v1079 = vcvt.s32.f32 %v1015
          %v1080 = vcvt.s32.f32 %v1016
          %v1081 = vcvt.s32.f32 %v1017
          %v1082 = vcvt.s32.f32 %v1018
          %v1083 = vcvt.s32.f32 %v1019
          %v1084 = vcvt.s32.f32 %v1020
          %v1085 = vcvt.s32.f32 %v1021
          %v1086 = vcvt.s32.f32 %v1022
          %v1087 = vcvt.s32.f32 %v1023
          %v1088 = vcvt.s32.f32 %v1024
          %v1089 = vcvt.s32.f32 %v1025
          %v1090 = vcvt.s32.f32 %v1026
          %v1091 = vcvt.s32.f32 %v1027
          %v1092 = vcvt.s32.f32 %v1028
          %v1093 = vcvt.s32.f32 %v1029
          %v1094 = vcvt.s32.f32 %v1030
          %v1095 = vcvt.s32.f32 %v1031
          %v1096 = vcvt.s32.f32 %v1032
          %v1097 = vcvt.s32.f32 %v1033
          %v1098 = vcvt.s32.f32 %v1034
          %v1099 = vcvt.s32.f32 %v1035
          %v1100 = vcvt.s32.f32 %v1036
          %v1101 = vcvt.s32.f32 %v1037
          %v1102 = vcvt.s32.f32 %v1038
          %v1103 = vcvt.s32.f32 %v1039
          %v1104 = vcvt.s32.f32 %v1040
          %v1105 = vcvt.s32.f32 %v1041
          %v1106 = vcvt.s32.f32 %v1042
          %v1107 = vcvt.s32.f32 %v1043
          %v1108 = vcvt.s32.f32 %v1044
          %v1109 = vcvt.s32.f32 %v1045
          %v1110 = vcvt.s32.f32 %v1046
          %v1111 = vcvt.s32.f32 %v1047
          %v1112 = vcvt.s32.f32 %v1048
          %v1113 = vcvt.s32.f32 %v1049
          %v1114 = vcvt.s32.f32 %v1050
          %v1115 = vcvt.s32.f32 %v1051
          %v1116 = vcvt.s32.f32 %v1052
          %v1117 = vcvt.s32.f32 %v1053
          %v1118 = vcvt.s32.f32 %v1054
          %v1119 = vcvt.s32.f32 %v1055
          %v1120 = vcvt.s32.f32 %v1056
          %v1121 = vcvt.s32.f32 %v1057
          %v1122 = vcvt.s32.f32 %v1058
          %v1123 = vcvt.s32.f32 %v1059
          %v1124 = vcvt.s32.f32 %v1060
          %v1125 = vcvt.s32.f32 %v1061
          %v1126 = vcvt.s32.f32 %v1062
          %v1127 = vcvt.s32.f32 %v1063
          %v1128 = vcvt.s32.f32 %v1064
          %v1129 = vcvt.s32.f32 %v1065
          %v1130 = vcvt.s32.f32 %v1066
          %v1131 = vcvt.s32.f32 %v1067
          %v1132 = vcvt.s32.f32 %v1068
          %v1133 = vcvt.s32.f32 %v1069
          %v1134 = vcvt.s32.f32 %v1070
          %v1135 = vcvt.s32.f32 %v1071
          %v1136 = vcvt.s32.f32 %v1072
          %v1137 = vcvt.s32.f32 %v1073
          %v1138 = vcvt.s32.f32 %v1074
          %v1139 = vcvt.s32.f32 %v1075
          %v1140 = vcvt.s32.f32 %v1076
          %v1141 = vcvt.s32.f32 %v1077
          %v1142 = vcvt.s32.f32 %v1078
          %v1143 = vsub.f32 %v1079, 1.0
          %v1144 = vsub.f32 %v1080, 1.0
          %v1145 = vsub.f32 %v1081, 1.0
          %v1146 = vsub.f32 %v1082, 1.0
          %v1147 = vsub.f32 %v1083, 1.0
          %v1148 = vsub.f32 %v1084, 1.0
          %v1149 = vsub.f32 %v1085, 1.0
          %v1150 = vsub.f32 %v1086, 1.0
          %v1151 = vsub.f32 %v1087, 1.0
          %v1152 = vsub.f32 %v1088, 1.0
          %v1153 = vsub.f32 %v1089, 1.0
          %v1154 = vsub.f32 %v1090, 1.0
          %v1155 = vsub.f32 %v1091, 1.0
          %v1156 = vsub.f32 %v1092, 1.0
          %v1157 = vsub.f32 %v1093, 1.0
          %v1158 = vsub.f32 %v1094, 1.0
          %v1159 = vsub.f32 %v1095, 1.0
          %v1160 = vsub.f32 %v1096, 1.0
          %v1161 = vsub.f32 %v1097, 1.0
          %v1162 = vsub.f32 %v1098, 1.0
          %v1163 = vsub.f32 %v1099, 1.0
          %v1164 = vsub.f32 %v1100, 1.0
          %v1165 = vsub.f32 %v1101, 1.0
          %v1166 = vsub.f32 %v1102, 1.0
          %v1167 = vsub.f32 %v1103, 1.0
          %v1168 = vsub.f32 %v1104, 1.0
          %v1169 = vsub.f32 %v1105, 1.0
          %v1170 = vsub.f32 %v1106, 1.0
          %v1171 = vsub.f32 %v1107, 1.0
          %v1172 = vsub.f32 %v1108, 1.0
          %v1173 = vsub.f32 %v1109, 1.0
          %v1174 = vsub.f32 %v1110, 1.0
          %v1175 = vsub.f32 %v1111, 1.0
          %v1176 = vsub.f32 %v1112, 1.0
          %v1177 = vsub.f32 %v1113, 1.0
          %v1178 = vsub.f32 %v1114, 1.0
          %v1179 = vsub.f32 %v1115, 1.0
          %v1180 = vsub.f32 %v1116, 1.0
          %v1181 = vsub.f32 %v1117, 1.0
          %v1182 = vsub.f32 %v1118, 1.0
          %v1183 = vsub.f32 %v1119, 1.0
          %v1184 = vsub.f32 %v1120, 1.0
          %v1185 = vsub.f32 %v1121, 1.0
          %v1186 = vsub.f32 %v1122, 1.0
          %v1187 = vsub.f32 %v1123, 1.0
          %v1188 = vsub.f32 %v1124, 1.0
          %v1189 = vsub.f32 %v1125, 1.0
          %v1190 = vsub.f32 %v1126, 1.0
          %v1191 = vsub.f32 %v1127, 1.0
          %v1192 = vsub.f32 %v1128, 1.0
          %v1193 = vsub.f32 %v1129, 1.0
          %v1194 = vsub.f32 %v1130, 1.0
          %v1195 = vsub.f32 %v1131, 1.0
          %v1196 = vsub.f32 %v1132, 1.0
          %v1197 = vsub.f32 %v1133, 1.0
          %v1198 = vsub.f32 %v1134, 1.0
          %v1199 = vsub.f32 %v1135, 1.0
          %v1200 = vsub.f32 %v1136, 1.0
          %v1201 = vsub.f32 %v1137, 1.0
          %v1202 = vsub.f32 %v1138, 1.0
          %v1203 = vsub.f32 %v1139, 1.0
          %v1204 = vsub.f32 %v1140, 1.0
          %v1205 = vsub.f32 %v1141, 1.0
          %v1206 = vsub.f32 %v1142, 1.0
          %v1207 = vmul.f32 %v1143, 1e+09
          %v1208 = vmul.f32 %v1144, 1e+09
          %v1209 = vmul.f32 %v1145, 1e+09
          %v1210 = vmul.f32 %v1146, 1e+09
          %v1211 = vmul.f32 %v1147, 1e+09
          %v1212 = vmul.f32 %v1148, 1e+09
          %v1213 = vmul.f32 %v1149, 1e+09
          %v1214 = vmul.f32 %v1150, 1e+09
          %v1215 = vmul.f32 %v1151, 1e+09
          %v1216 = vmul.f32 %v1152, 1e+09
          %v1217 = vmul.f32 %v1153, 1e+09
          %v1218 = vmul.f32 %v1154, 1e+09
          %v1219 = vmul.f32 %v1155, 1e+09
          %v1220 = vmul.f32 %v1156, 1e+09
          %v1221 = vmul.f32 %v1157, 1e+09
          %v1222 = vmul.f32 %v1158, 1e+09
          %v1223 = vmul.f32 %v1159, 1e+09
          %v1224 = vmul.f32 %v1160, 1e+09
          %v1225 = vmul.f32 %v1161, 1e+09
          %v1226 = vmul.f32 %v1162, 1e+09
          %v1227 = vmul.f32 %v1163, 1e+09
          %v1228 = vmul.f32 %v1164, 1e+09
          %v1229 = vmul.f32 %v1165, 1e+09
          %v1230 = vmul.f32 %v1166, 1e+09
          %v1231 = vmul.f32 %v1167, 1e+09
          %v1232 = vmul.f32 %v1168, 1e+09
          %v1233 = vmul.f32 %v1169, 1e+09
          %v1234 = vmul.f32 %v1170, 1e+09
          %v1235 = vmul.f32 %v1171, 1e+09
          %v1236 = vmul.f32 %v1172, 1e+09
          %v1237 = vmul.f32 %v1173, 1e+09
          %v1238 = vmul.f32 %v1174, 1e+09
          %v1239 = vmul.f32 %v1175, 1e+09
          %v1240 = vmul.f32 %v1176, 1e+09
          %v1241 = vmul.f32 %v1177, 1e+09
          %v1242 = vmul.f32 %v1178, 1e+09
          %v1243 = vmul.f32 %v1179, 1e+09
          %v1244 = vmul.f32 %v1180, 1e+09
          %v1245 = vmul.f32 %v1181, 1e+09
          %v1246 = vmul.f32 %v1182, 1e+09
          %v1247 = vmul.f32 %v1183, 1e+09
          %v1248 = vmul.f32 %v1184, 1e+09
          %v1249 = vmul.f32 %v1185, 1e+09
          %v1250 = vmul.f32 %v1186, 1e+09
          %v1251 = vmul.f32 %v1187, 1e+09
          %v1252 = vmul.f32 %v1188, 1e+09
          %v1253 = vmul.f32 %v1189, 1e+09
          %v1254 = vmul.f32 %v1190, 1e+09
          %v1255 = vmul.f32 %v1191, 1e+09
          %v1256 = vmul.f32 %v1192, 1e+09
          %v1257 = vmul.f32 %v1193, 1e+09
          %v1258 = vmul.f32 %v1194, 1e+09
          %v1259 = vmul.f32 %v1195, 1e+09
          %v1260 = vmul.f32 %v1196, 1e+09
          %v1261 = vmul.f32 %v1197, 1e+09
          %v1262 = vmul.f32 %v1198, 1e+09
          %v1263 = vmul.f32 %v1199, 1e+09
          %v1264 = vmul.f32 %v1200, 1e+09
          %v1265 = vmul.f32 %v1201, 1e+09
          %v1266 = vmul.f32 %v1202, 1e+09
          %v1267 = vmul.f32 %v1203, 1e+09
          %v1268 = vmul.f32 %v1204, 1e+09
          %v1269 = vmul.f32 %v1205, 1e+09
          %v1270 = vmul.f32 %v1206, 1e+09
          %v1271 = vadd.f32 %v935, %v1207
          %v1272 = vadd.f32 %v936, %v1208
          %v1273 = vadd.f32 %v937, %v1209
          %v1274 = vadd.f32 %v938, %v1210
          %v1275 = vadd.f32 %v939, %v1211
          %v1276 = vadd.f32 %v940, %v1212
          %v1277 = vadd.f32 %v941, %v1213
          %v1278 = vadd.f32 %v942, %v1214
          %v1279 = vadd.f32 %v943, %v1215
          %v1280 = vadd.f32 %v944, %v1216
          %v1281 = vadd.f32 %v945, %v1217
          %v1282 = vadd.f32 %v946, %v1218
          %v1283 = vadd.f32 %v947, %v1219
          %v1284 = vadd.f32 %v948, %v1220
          %v1285 = vadd.f32 %v949, %v1221
          %v1286 = vadd.f32 %v950, %v1222
          %v1287 = vadd.f32 %v951, %v1223
          %v1288 = vadd.f32 %v952, %v1224
          %v1289 = vadd.f32 %v953, %v1225
          %v1290 = vadd.f32 %v954, %v1226
          %v1291 = vadd.f32 %v955, %v1227
          %v1292 = vadd.f32 %v956, %v1228
          %v1293 = vadd.f32 %v957, %v1229
          %v1294 = vadd.f32 %v958, %v1230
          %v1295 = vadd.f32 %v959, %v1231
          %v1296 = vadd.f32 %v960, %v1232
          %v1297 = vadd.f32 %v961, %v1233
          %v1298 = vadd.f32 %v962, %v1234
          %v1299 = vadd.f32 %v963, %v1235
          %v1300 = vadd.f32 %v964, %v1236
          %v1301 = vadd.f32 %v965, %v1237
          %v1302 = vadd.f32 %v966, %v1238
          %v1303 = vadd.f32 %v967, %v1239
          %v1304 = vadd.f32 %v968, %v1240
          %v1305 = vadd.f32 %v969, %v1241
          %v1306 = vadd.f32 %v970, %v1242
          %v1307 = vadd.f32 %v971, %v1243
          %v1308 = vadd.f32 %v972, %v1244
          %v1309 = vadd.f32 %v973, %v1245
          %v1310 = vadd.f32 %v974, %v1246
          %v1311 = vadd.f32 %v975, %v1247
          %v1312 = vadd.f32 %v976, %v1248
          %v1313 = vadd.f32 %v977, %v1249
          %v1314 = vadd.f32 %v978, %v1250
          %v1315 = vadd.f32 %v979, %v1251
          %v1316 = vadd.f32 %v980, %v1252
          %v1317 = vadd.f32 %v981, %v1253
          %v1318 = vadd.f32 %v982, %v1254
          %v1319 = vadd.f32 %v983, %v1255
          %v1320 = vadd.f32 %v984, %v1256
          %v1321 = vadd.f32 %v985, %v1257
          %v1322 = vadd.f32 %v986, %v1258
          %v1323 = vadd.f32 %v987, %v1259
          %v1324 = vadd.f32 %v988, %v1260
          %v1325 = vadd.f32 %v989, %v1261
          %v1326 = vadd.f32 %v990, %v1262
          %v1327 = vadd.f32 %v991, %v1263
          %v1328 = vadd.f32 %v992, %v1264
          %v1329 = vadd.f32 %v993, %v1265
          %v1330 = vadd.f32 %v994, %v1266
          %v1331 = vadd.f32 %v995, %v1267
          %v1332 = vadd.f32 %v996, %v1268
          %v1333 = vadd.f32 %v997, %v1269
          %v1334 = vadd.f32 %v998, %v1270
          %v1335 = vld [vmem:[#allocation2] sm:$0xff]
          %v1336 = vld [vmem:[#allocation2 + $0x8] sm:$0xff]
          %v1337 = vld [vmem:[#allocation2 + $0x10] sm:$0xff]
          %v1338 = vld [vmem:[#allocation2 + $0x18] sm:$0xff]
          %v1339 = vld [vmem:[#allocation2 + $0x20] sm:$0xff]
          %v1340 = vld [vmem:[#allocation2 + $0x28] sm:$0xff]
          %v1341 = vld [vmem:[#allocation2 + $0x30] sm:$0xff]
          %v1342 = vld [vmem:[#allocation2 + $0x38] sm:$0xff]
          %v1343 = vld [vmem:[#allocation2 + $0x40] sm:$0xff]
          %v1344 = vld [vmem:[#allocation2 + $0x48] sm:$0xff]
          %v1345 = vld [vmem:[#allocation2 + $0x50] sm:$0xff]
          %v1346 = vld [vmem:[#allocation2 + $0x58] sm:$0xff]
          %v1347 = vld [vmem:[#allocation2 + $0x60] sm:$0xff]
          %v1348 = vld [vmem:[#allocation2 + $0x68] sm:$0xff]
          %v1349 = vld [vmem:[#allocation2 + $0x70] sm:$0xff]
          %v1350 = vld [vmem:[#allocation2 + $0x78] sm:$0xff]
          %v1351 = vld [vmem:[#allocation2 + $0x80] sm:$0xff]
          %v1352 = vld [vmem:[#allocation2 + $0x88] sm:$0xff]
          %v1353 = vld [vmem:[#allocation2 + $0x90] sm:$0xff]
          %v1354 = vld [vmem:[#allocation2 + $0x98] sm:$0xff]
          %v1355 = vld [vmem:[#allocation2 + $0xa0] sm:$0xff]
          %v1356 = vld [vmem:[#allocation2 + $0xa8] sm:$0xff]
          %v1357 = vld [vmem:[#allocation2 + $0xb0] sm:$0xff]
          %v1358 = vld [vmem:[#allocation2 + $0xb8] sm:$0xff]
          %v1359 = vld [vmem:[#allocation2 + $0xc0] sm:$0xff]
          %v1360 = vld [vmem:[#allocation2 + $0xc8] sm:$0xff]
          %v1361 = vld [vmem:[#allocation2 + $0xd0] sm:$0xff]
          %v1362 = vld [vmem:[#allocation2 + $0xd8] sm:$0xff]
          %v1363 = vld [vmem:[#allocation2 + $0xe0] sm:$0xff]
          %v1364 = vld [vmem:[#allocation2 + $0xe8] sm:$0xff]
          %v1365 = vld [vmem:[#allocation2 + $0xf0] sm:$0xff]
          %v1366 = vld [vmem:[#allocation2 + $0xf8] sm:$0xff]
          %v1367 = vmax.f32 %v1271, %v1272
          %1368 = vmax.xlane.f32.xlu0 %v1367
          %v1369 = vpop.xlane.xlu0 %1368
          %v1370 = vmax.f32 %v1273, %v1274
          %1371 = vmax.xlane.f32.xlu0 %v1370
          %v1372 = vpop.xlane.xlu0 %1371
          %v1373 = vmax.f32 %v1275, %v1276
          %1374 = vmax.xlane.f32.xlu0 %v1373
          %v1375 = vpop.xlane.xlu0 %1374
          %v1376 = vmax.f32 %v1277, %v1278
          %1377 = vmax.xlane.f32.xlu0 %v1376
          %v1378 = vpop.xlane.xlu0 %1377
          %v1379 = vmax.f32 %v1279, %v1280
          %1380 = vmax.xlane.f32.xlu0 %v1379
          %v1381 = vpop.xlane.xlu0 %1380
          %v1382 = vmax.f32 %v1281, %v1282
          %1383 = vmax.xlane.f32.xlu0 %v1382
          %v1384 = vpop.xlane.xlu0 %1383
          %v1385 = vmax.f32 %v1283, %v1284
          %1386 = vmax.xlane.f32.xlu0 %v1385
          %v1387 = vpop.xlane.xlu0 %1386
          %v1388 = vmax.f32 %v1285, %v1286
          %1389 = vmax.xlane.f32.xlu0 %v1388
          %v1390 = vpop.xlane.xlu0 %1389
          %v1391 = vmax.f32 %v1287, %v1288
          %1392 = vmax.xlane.f32.xlu0 %v1391
          %v1393 = vpop.xlane.xlu0 %1392
          %v1394 = vmax.f32 %v1289, %v1290
          %1395 = vmax.xlane.f32.xlu0 %v1394
          %v1396 = vpop.xlane.xlu0 %1395
          %v1397 = vmax.f32 %v1291, %v1292
          %1398 = vmax.xlane.f32.xlu0 %v1397
          %v1399 = vpop.xlane.xlu0 %1398
          %v1400 = vmax.f32 %v1293, %v1294
          %1401 = vmax.xlane.f32.xlu0 %v1400
          %v1402 = vpop.xlane.xlu0 %1401
          %v1403 = vmax.f32 %v1295, %v1296
          %1404 = vmax.xlane.f32.xlu0 %v1403
          %v1405 = vpop.xlane.xlu0 %1404
          %v1406 = vmax.f32 %v1297, %v1298
          %1407 = vmax.xlane.f32.xlu0 %v1406
          %v1408 = vpop.xlane.xlu0 %1407
          %v1409 = vmax.f32 %v1299, %v1300
          %1410 = vmax.xlane.f32.xlu0 %v1409
          %v1411 = vpop.xlane.xlu0 %1410
          %v1412 = vmax.f32 %v1301, %v1302
          %1413 = vmax.xlane.f32.xlu0 %v1412
          %v1414 = vpop.xlane.xlu0 %1413
          %v1415 = vmax.f32 %v1303, %v1304
          %1416 = vmax.xlane.f32.xlu0 %v1415
          %v1417 = vpop.xlane.xlu0 %1416
          %v1418 = vmax.f32 %v1305, %v1306
          %1419 = vmax.xlane.f32.xlu0 %v1418
          %v1420 = vpop.xlane.xlu0 %1419
          %v1421 = vmax.f32 %v1307, %v1308
          %1422 = vmax.xlane.f32.xlu0 %v1421
          %v1423 = vpop.xlane.xlu0 %1422
          %v1424 = vmax.f32 %v1309, %v1310
          %1425 = vmax.xlane.f32.xlu0 %v1424
          %v1426 = vpop.xlane.xlu0 %1425
          %v1427 = vmax.f32 %v1311, %v1312
          %1428 = vmax.xlane.f32.xlu0 %v1427
          %v1429 = vpop.xlane.xlu0 %1428
          %v1430 = vmax.f32 %v1313, %v1314
          %1431 = vmax.xlane.f32.xlu0 %v1430
          %v1432 = vpop.xlane.xlu0 %1431
          %v1433 = vmax.f32 %v1315, %v1316
          %1434 = vmax.xlane.f32.xlu0 %v1433
          %v1435 = vpop.xlane.xlu0 %1434
          %v1436 = vmax.f32 %v1317, %v1318
          %1437 = vmax.xlane.f32.xlu0 %v1436
          %v1438 = vpop.xlane.xlu0 %1437
          %v1439 = vmax.f32 %v1319, %v1320
          %1440 = vmax.xlane.f32.xlu0 %v1439
          %v1441 = vpop.xlane.xlu0 %1440
          %v1442 = vmax.f32 %v1321, %v1322
          %1443 = vmax.xlane.f32.xlu0 %v1442
          %v1444 = vpop.xlane.xlu0 %1443
          %v1445 = vmax.f32 %v1323, %v1324
          %1446 = vmax.xlane.f32.xlu0 %v1445
          %v1447 = vpop.xlane.xlu0 %1446
          %v1448 = vmax.f32 %v1325, %v1326
          %1449 = vmax.xlane.f32.xlu0 %v1448
          %v1450 = vpop.xlane.xlu0 %1449
          %v1451 = vmax.f32 %v1327, %v1328
          %1452 = vmax.xlane.f32.xlu0 %v1451
          %v1453 = vpop.xlane.xlu0 %1452
          %v1454 = vmax.f32 %v1329, %v1330
          %1455 = vmax.xlane.f32.xlu0 %v1454
          %v1456 = vpop.xlane.xlu0 %1455
          %v1457 = vmax.f32 %v1331, %v1332
          %1458 = vmax.xlane.f32.xlu0 %v1457
          %v1459 = vpop.xlane.xlu0 %1458
          %v1460 = vmax.f32 %v1333, %v1334
          %1461 = vmax.xlane.f32.xlu0 %v1460
          %v1462 = vpop.xlane.xlu0 %1461
          %v1463 = vmax.f32 %v1335, %v1369
          %v1464 = vmax.f32 %v1336, %v1372
          %v1465 = vmax.f32 %v1337, %v1375
          %v1466 = vmax.f32 %v1338, %v1378
          %v1467 = vmax.f32 %v1339, %v1381
          %v1468 = vmax.f32 %v1340, %v1384
          %v1469 = vmax.f32 %v1341, %v1387
          %v1470 = vmax.f32 %v1342, %v1390
          %v1471 = vmax.f32 %v1343, %v1393
          %v1472 = vmax.f32 %v1344, %v1396
          %v1473 = vmax.f32 %v1345, %v1399
          %v1474 = vmax.f32 %v1346, %v1402
          %v1475 = vmax.f32 %v1347, %v1405
          %v1476 = vmax.f32 %v1348, %v1408
          %v1477 = vmax.f32 %v1349, %v1411
          %v1478 = vmax.f32 %v1350, %v1414
          %v1479 = vmax.f32 %v1351, %v1417
          %v1480 = vmax.f32 %v1352, %v1420
          %v1481 = vmax.f32 %v1353, %v1423
          %v1482 = vmax.f32 %v1354, %v1426
          %v1483 = vmax.f32 %v1355, %v1429
          %v1484 = vmax.f32 %v1356, %v1432
          %v1485 = vmax.f32 %v1357, %v1435
          %v1486 = vmax.f32 %v1358, %v1438
          %v1487 = vmax.f32 %v1359, %v1441
          %v1488 = vmax.f32 %v1360, %v1444
          %v1489 = vmax.f32 %v1361, %v1447
          %v1490 = vmax.f32 %v1362, %v1450
          %v1491 = vmax.f32 %v1363, %v1453
          %v1492 = vmax.f32 %v1364, %v1456
          %v1493 = vmax.f32 %v1365, %v1459
          %v1494 = vmax.f32 %v1366, %v1462
          %v1495 = vsub.f32 %v1335, %v1463
          %v1496 = vsub.f32 %v1336, %v1464
          %v1497 = vsub.f32 %v1337, %v1465
          %v1498 = vsub.f32 %v1338, %v1466
          %v1499 = vsub.f32 %v1339, %v1467
          %v1500 = vsub.f32 %v1340, %v1468
          %v1501 = vsub.f32 %v1341, %v1469
          %v1502 = vsub.f32 %v1342, %v1470
          %v1503 = vsub.f32 %v1343, %v1471
          %v1504 = vsub.f32 %v1344, %v1472
          %v1505 = vsub.f32 %v1345, %v1473
          %v1506 = vsub.f32 %v1346, %v1474
          %v1507 = vsub.f32 %v1347, %v1475
          %v1508 = vsub.f32 %v1348, %v1476
          %v1509 = vsub.f32 %v1349, %v1477
          %v1510 = vsub.f32 %v1350, %v1478
          %v1511 = vsub.f32 %v1351, %v1479
          %v1512 = vsub.f32 %v1352, %v1480
          %v1513 = vsub.f32 %v1353, %v1481
          %v1514 = vsub.f32 %v1354, %v1482
          %v1515 = vsub.f32 %v1355, %v1483
          %v1516 = vsub.f32 %v1356, %v1484
          %v1517 = vsub.f32 %v1357, %v1485
          %v1518 = vsub.f32 %v1358, %v1486
          %v1519 = vsub.f32 %v1359, %v1487
          %v1520 = vsub.f32 %v1360, %v1488
          %v1521 = vsub.f32 %v1361, %v1489
          %v1522 = vsub.f32 %v1362, %v1490
          %v1523 = vsub.f32 %v1363, %v1491
          %v1524 = vsub.f32 %v1364, %v1492
          %v1525 = vsub.f32 %v1365, %v1493
          %v1526 = vsub.f32 %v1366, %v1494
          %v1527 = vmul.f32 %v1495, 1.442695
          %v1528 = vpow.pop %v1527
          %v1529 = vmul.f32 %v1496, 1.442695
          %v1530 = vpow.pop %v1529
          %v1531 = vmul.f32 %v1497, 1.442695
          %v1532 = vpow.pop %v1531
          %v1533 = vmul.f32 %v1498, 1.442695
          %v1534 = vpow.pop %v1533
          %v1535 = vmul.f32 %v1499, 1.442695
          %v1536 = vpow.pop %v1535
          %v1537 = vmul.f32 %v1500, 1.442695
          %v1538 = vpow.pop %v1537
          %v1539 = vmul.f32 %v1501, 1.442695
          %v1540 = vpow.pop %v1539
          %v1541 = vmul.f32 %v1502, 1.442695
          %v1542 = vpow.pop %v1541
          %v1543 = vmul.f32 %v1503, 1.442695
          %v1544 = vpow.pop %v1543
          %v1545 = vmul.f32 %v1504, 1.442695
          %v1546 = vpow.pop %v1545
          %v1547 = vmul.f32 %v1505, 1.442695
          %v1548 = vpow.pop %v1547
          %v1549 = vmul.f32 %v1506, 1.442695
          %v1550 = vpow.pop %v1549
          %v1551 = vmul.f32 %v1507, 1.442695
          %v1552 = vpow.pop %v1551
          %v1553 = vmul.f32 %v1508, 1.442695
          %v1554 = vpow.pop %v1553
          %v1555 = vmul.f32 %v1509, 1.442695
          %v1556 = vpow.pop %v1555
          %v1557 = vmul.f32 %v1510, 1.442695
          %v1558 = vpow.pop %v1557
          %v1559 = vmul.f32 %v1511, 1.442695
          %v1560 = vpow.pop %v1559
          %v1561 = vmul.f32 %v1512, 1.442695
          %v1562 = vpow.pop %v1561
          %v1563 = vmul.f32 %v1513, 1.442695
          %v1564 = vpow.pop %v1563
          %v1565 = vmul.f32 %v1514, 1.442695
          %v1566 = vpow.pop %v1565
          %v1567 = vmul.f32 %v1515, 1.442695
          %v1568 = vpow.pop %v1567
          %v1569 = vmul.f32 %v1516, 1.442695
          %v1570 = vpow.pop %v1569
          %v1571 = vmul.f32 %v1517, 1.442695
          %v1572 = vpow.pop %v1571
          %v1573 = vmul.f32 %v1518, 1.442695
          %v1574 = vpow.pop %v1573
          %v1575 = vmul.f32 %v1519, 1.442695
          %v1576 = vpow.pop %v1575
          %v1577 = vmul.f32 %v1520, 1.442695
          %v1578 = vpow.pop %v1577
          %v1579 = vmul.f32 %v1521, 1.442695
          %v1580 = vpow.pop %v1579
          %v1581 = vmul.f32 %v1522, 1.442695
          %v1582 = vpow.pop %v1581
          %v1583 = vmul.f32 %v1523, 1.442695
          %v1584 = vpow.pop %v1583
          %v1585 = vmul.f32 %v1524, 1.442695
          %v1586 = vpow.pop %v1585
          %v1587 = vmul.f32 %v1525, 1.442695
          %v1588 = vpow.pop %v1587
          %v1589 = vmul.f32 %v1526, 1.442695
          %v1590 = vpow.pop %v1589
          %1592 = vset.pattern.permute.xlu0 0
          %1593 = vperm.xlu0 %1592, %v1463
          %v1594 = vpop.permute.xlu0 %1593
          %1597 = vset.pattern.permute.xlu0 0
          %1598 = vperm.xlu0 %1597, %v1464
          %v1599 = vpop.permute.xlu0 %1598
          %1602 = vset.pattern.permute.xlu0 0
          %1603 = vperm.xlu0 %1602, %v1465
          %v1604 = vpop.permute.xlu0 %1603
          %1607 = vset.pattern.permute.xlu0 0
          %1608 = vperm.xlu0 %1607, %v1466
          %v1609 = vpop.permute.xlu0 %1608
          %1612 = vset.pattern.permute.xlu0 0
          %1613 = vperm.xlu0 %1612, %v1467
          %v1614 = vpop.permute.xlu0 %1613
          %1617 = vset.pattern.permute.xlu0 0
          %1618 = vperm.xlu0 %1617, %v1468
          %v1619 = vpop.permute.xlu0 %1618
          %1622 = vset.pattern.permute.xlu0 0
          %1623 = vperm.xlu0 %1622, %v1469
          %v1624 = vpop.permute.xlu0 %1623
          %1627 = vset.pattern.permute.xlu0 0
          %1628 = vperm.xlu0 %1627, %v1470
          %v1629 = vpop.permute.xlu0 %1628
          %1632 = vset.pattern.permute.xlu0 0
          %1633 = vperm.xlu0 %1632, %v1471
          %v1634 = vpop.permute.xlu0 %1633
          %1637 = vset.pattern.permute.xlu0 0
          %1638 = vperm.xlu0 %1637, %v1472
          %v1639 = vpop.permute.xlu0 %1638
          %1642 = vset.pattern.permute.xlu0 0
          %1643 = vperm.xlu0 %1642, %v1473
          %v1644 = vpop.permute.xlu0 %1643
          %1647 = vset.pattern.permute.xlu0 0
          %1648 = vperm.xlu0 %1647, %v1474
          %v1649 = vpop.permute.xlu0 %1648
          %1652 = vset.pattern.permute.xlu0 0
          %1653 = vperm.xlu0 %1652, %v1475
          %v1654 = vpop.permute.xlu0 %1653
          %1657 = vset.pattern.permute.xlu0 0
          %1658 = vperm.xlu0 %1657, %v1476
          %v1659 = vpop.permute.xlu0 %1658
          %1662 = vset.pattern.permute.xlu0 0
          %1663 = vperm.xlu0 %1662, %v1477
          %v1664 = vpop.permute.xlu0 %1663
          %1667 = vset.pattern.permute.xlu0 0
          %1668 = vperm.xlu0 %1667, %v1478
          %v1669 = vpop.permute.xlu0 %1668
          %1672 = vset.pattern.permute.xlu0 0
          %1673 = vperm.xlu0 %1672, %v1479
          %v1674 = vpop.permute.xlu0 %1673
          %1677 = vset.pattern.permute.xlu0 0
          %1678 = vperm.xlu0 %1677, %v1480
          %v1679 = vpop.permute.xlu0 %1678
          %1682 = vset.pattern.permute.xlu0 0
          %1683 = vperm.xlu0 %1682, %v1481
          %v1684 = vpop.permute.xlu0 %1683
          %1687 = vset.pattern.permute.xlu0 0
          %1688 = vperm.xlu0 %1687, %v1482
          %v1689 = vpop.permute.xlu0 %1688
          %1692 = vset.pattern.permute.xlu0 0
          %1693 = vperm.xlu0 %1692, %v1483
          %v1694 = vpop.permute.xlu0 %1693
          %1697 = vset.pattern.permute.xlu0 0
          %1698 = vperm.xlu0 %1697, %v1484
          %v1699 = vpop.permute.xlu0 %1698
          %1702 = vset.pattern.permute.xlu0 0
          %1703 = vperm.xlu0 %1702, %v1485
          %v1704 = vpop.permute.xlu0 %1703
          %1707 = vset.pattern.permute.xlu0 0
          %1708 = vperm.xlu0 %1707, %v1486
          %v1709 = vpop.permute.xlu0 %1708
          %1712 = vset.pattern.permute.xlu0 0
          %1713 = vperm.xlu0 %1712, %v1487
          %v1714 = vpop.permute.xlu0 %1713
          %1717 = vset.pattern.permute.xlu0 0
          %1718 = vperm.xlu0 %1717, %v1488
          %v1719 = vpop.permute.xlu0 %1718
          %1722 = vset.pattern.permute.xlu0 0
          %1723 = vperm.xlu0 %1722, %v1489
          %v1724 = vpop.permute.xlu0 %1723
          %1727 = vset.pattern.permute.xlu0 0
          %1728 = vperm.xlu0 %1727, %v1490
          %v1729 = vpop.permute.xlu0 %1728
          %1732 = vset.pattern.permute.xlu0 0
          %1733 = vperm.xlu0 %1732, %v1491
          %v1734 = vpop.permute.xlu0 %1733
          %1737 = vset.pattern.permute.xlu0 0
          %1738 = vperm.xlu0 %1737, %v1492
          %v1739 = vpop.permute.xlu0 %1738
          %1742 = vset.pattern.permute.xlu0 0
          %1743 = vperm.xlu0 %1742, %v1493
          %v1744 = vpop.permute.xlu0 %1743
          %1747 = vset.pattern.permute.xlu0 0
          %1748 = vperm.xlu0 %1747, %v1494
          %v1749 = vpop.permute.xlu0 %1748
          %v1751 = vsub.f32 %v1271, %v1594
          %v1752 = vsub.f32 %v1272, %v1594
          %v1753 = vsub.f32 %v1273, %v1599
          %v1754 = vsub.f32 %v1274, %v1599
          %v1755 = vsub.f32 %v1275, %v1604
          %v1756 = vsub.f32 %v1276, %v1604
          %v1757 = vsub.f32 %v1277, %v1609
          %v1758 = vsub.f32 %v1278, %v1609
          %v1759 = vsub.f32 %v1279, %v1614
          %v1760 = vsub.f32 %v1280, %v1614
          %v1761 = vsub.f32 %v1281, %v1619
          %v1762 = vsub.f32 %v1282, %v1619
          %v1763 = vsub.f32 %v1283, %v1624
          %v1764 = vsub.f32 %v1284, %v1624
          %v1765 = vsub.f32 %v1285, %v1629
          %v1766 = vsub.f32 %v1286, %v1629
          %v1767 = vsub.f32 %v1287, %v1634
          %v1768 = vsub.f32 %v1288, %v1634
          %v1769 = vsub.f32 %v1289, %v1639
          %v1770 = vsub.f32 %v1290, %v1639
          %v1771 = vsub.f32 %v1291, %v1644
          %v1772 = vsub.f32 %v1292, %v1644
          %v1773 = vsub.f32 %v1293, %v1649
          %v1774 = vsub.f32 %v1294, %v1649
          %v1775 = vsub.f32 %v1295, %v1654
          %v1776 = vsub.f32 %v1296, %v1654
          %v1777 = vsub.f32 %v1297, %v1659
          %v1778 = vsub.f32 %v1298, %v1659
          %v1779 = vsub.f32 %v1299, %v1664
          %v1780 = vsub.f32 %v1300, %v1664
          %v1781 = vsub.f32 %v1301, %v1669
          %v1782 = vsub.f32 %v1302, %v1669
          %v1783 = vsub.f32 %v1303, %v1674
          %v1784 = vsub.f32 %v1304, %v1674
          %v1785 = vsub.f32 %v1305, %v1679
          %v1786 = vsub.f32 %v1306, %v1679
          %v1787 = vsub.f32 %v1307, %v1684
          %v1788 = vsub.f32 %v1308, %v1684
          %v1789 = vsub.f32 %v1309, %v1689
          %v1790 = vsub.f32 %v1310, %v1689
          %v1791 = vsub.f32 %v1311, %v1694
          %v1792 = vsub.f32 %v1312, %v1694
          %v1793 = vsub.f32 %v1313, %v1699
          %v1794 = vsub.f32 %v1314, %v1699
          %v1795 = vsub.f32 %v1315, %v1704
          %v1796 = vsub.f32 %v1316, %v1704
          %v1797 = vsub.f32 %v1317, %v1709
          %v1798 = vsub.f32 %v1318, %v1709
          %v1799 = vsub.f32 %v1319, %v1714
          %v1800 = vsub.f32 %v1320, %v1714
          %v1801 = vsub.f32 %v1321, %v1719
          %v1802 = vsub.f32 %v1322, %v1719
          %v1803 = vsub.f32 %v1323, %v1724
          %v1804 = vsub.f32 %v1324, %v1724
          %v1805 = vsub.f32 %v1325, %v1729
          %v1806 = vsub.f32 %v1326, %v1729
          %v1807 = vsub.f32 %v1327, %v1734
          %v1808 = vsub.f32 %v1328, %v1734
          %v1809 = vsub.f32 %v1329, %v1739
          %v1810 = vsub.f32 %v1330, %v1739
          %v1811 = vsub.f32 %v1331, %v1744
          %v1812 = vsub.f32 %v1332, %v1744
          %v1813 = vsub.f32 %v1333, %v1749
          %v1814 = vsub.f32 %v1334, %v1749
          %v1815 = vmul.f32 %v1751, 1.442695
          %v1816 = vpow.pop %v1815
          %v1817 = vmul.f32 %v1752, 1.442695
          %v1818 = vpow.pop %v1817
          %v1819 = vmul.f32 %v1753, 1.442695
          %v1820 = vpow.pop %v1819
          %v1821 = vmul.f32 %v1754, 1.442695
          %v1822 = vpow.pop %v1821
          %v1823 = vmul.f32 %v1755, 1.442695
          %v1824 = vpow.pop %v1823
          %v1825 = vmul.f32 %v1756, 1.442695
          %v1826 = vpow.pop %v1825
          %v1827 = vmul.f32 %v1757, 1.442695
          %v1828 = vpow.pop %v1827
          %v1829 = vmul.f32 %v1758, 1.442695
          %v1830 = vpow.pop %v1829
          %v1831 = vmul.f32 %v1759, 1.442695
          %v1832 = vpow.pop %v1831
          %v1833 = vmul.f32 %v1760, 1.442695
          %v1834 = vpow.pop %v1833
          %v1835 = vmul.f32 %v1761, 1.442695
          %v1836 = vpow.pop %v1835
          %v1837 = vmul.f32 %v1762, 1.442695
          %v1838 = vpow.pop %v1837
          %v1839 = vmul.f32 %v1763, 1.442695
          %v1840 = vpow.pop %v1839
          %v1841 = vmul.f32 %v1764, 1.442695
          %v1842 = vpow.pop %v1841
          %v1843 = vmul.f32 %v1765, 1.442695
          %v1844 = vpow.pop %v1843
          %v1845 = vmul.f32 %v1766, 1.442695
          %v1846 = vpow.pop %v1845
          %v1847 = vmul.f32 %v1767, 1.442695
          %v1848 = vpow.pop %v1847
          %v1849 = vmul.f32 %v1768, 1.442695
          %v1850 = vpow.pop %v1849
          %v1851 = vmul.f32 %v1769, 1.442695
          %v1852 = vpow.pop %v1851
          %v1853 = vmul.f32 %v1770, 1.442695
          %v1854 = vpow.pop %v1853
          %v1855 = vmul.f32 %v1771, 1.442695
          %v1856 = vpow.pop %v1855
          %v1857 = vmul.f32 %v1772, 1.442695
          %v1858 = vpow.pop %v1857
          %v1859 = vmul.f32 %v1773, 1.442695
          %v1860 = vpow.pop %v1859
          %v1861 = vmul.f32 %v1774, 1.442695
          %v1862 = vpow.pop %v1861
          %v1863 = vmul.f32 %v1775, 1.442695
          %v1864 = vpow.pop %v1863
          %v1865 = vmul.f32 %v1776, 1.442695
          %v1866 = vpow.pop %v1865
          %v1867 = vmul.f32 %v1777, 1.442695
          %v1868 = vpow.pop %v1867
          %v1869 = vmul.f32 %v1778, 1.442695
          %v1870 = vpow.pop %v1869
          %v1871 = vmul.f32 %v1779, 1.442695
          %v1872 = vpow.pop %v1871
          %v1873 = vmul.f32 %v1780, 1.442695
          %v1874 = vpow.pop %v1873
          %v1875 = vmul.f32 %v1781, 1.442695
          %v1876 = vpow.pop %v1875
          %v1877 = vmul.f32 %v1782, 1.442695
          %v1878 = vpow.pop %v1877
          %v1879 = vmul.f32 %v1783, 1.442695
          %v1880 = vpow.pop %v1879
          %v1881 = vmul.f32 %v1784, 1.442695
          %v1882 = vpow.pop %v1881
          %v1883 = vmul.f32 %v1785, 1.442695
          %v1884 = vpow.pop %v1883
          %v1885 = vmul.f32 %v1786, 1.442695
          %v1886 = vpow.pop %v1885
          %v1887 = vmul.f32 %v1787, 1.442695
          %v1888 = vpow.pop %v1887
          %v1889 = vmul.f32 %v1788, 1.442695
          %v1890 = vpow.pop %v1889
          %v1891 = vmul.f32 %v1789, 1.442695
          %v1892 = vpow.pop %v1891
          %v1893 = vmul.f32 %v1790, 1.442695
          %v1894 = vpow.pop %v1893
          %v1895 = vmul.f32 %v1791, 1.442695
          %v1896 = vpow.pop %v1895
          %v1897 = vmul.f32 %v1792, 1.442695
          %v1898 = vpow.pop %v1897
          %v1899 = vmul.f32 %v1793, 1.442695
          %v1900 = vpow.pop %v1899
          %v1901 = vmul.f32 %v1794, 1.442695
          %v1902 = vpow.pop %v1901
          %v1903 = vmul.f32 %v1795, 1.442695
          %v1904 = vpow.pop %v1903
          %v1905 = vmul.f32 %v1796, 1.442695
          %v1906 = vpow.pop %v1905
          %v1907 = vmul.f32 %v1797, 1.442695
          %v1908 = vpow.pop %v1907
          %v1909 = vmul.f32 %v1798, 1.442695
          %v1910 = vpow.pop %v1909
          %v1911 = vmul.f32 %v1799, 1.442695
          %v1912 = vpow.pop %v1911
          %v1913 = vmul.f32 %v1800, 1.442695
          %v1914 = vpow.pop %v1913
          %v1915 = vmul.f32 %v1801, 1.442695
          %v1916 = vpow.pop %v1915
          %v1917 = vmul.f32 %v1802, 1.442695
          %v1918 = vpow.pop %v1917
          %v1919 = vmul.f32 %v1803, 1.442695
          %v1920 = vpow.pop %v1919
          %v1921 = vmul.f32 %v1804, 1.442695
          %v1922 = vpow.pop %v1921
          %v1923 = vmul.f32 %v1805, 1.442695
          %v1924 = vpow.pop %v1923
          %v1925 = vmul.f32 %v1806, 1.442695
          %v1926 = vpow.pop %v1925
          %v1927 = vmul.f32 %v1807, 1.442695
          %v1928 = vpow.pop %v1927
          %v1929 = vmul.f32 %v1808, 1.442695
          %v1930 = vpow.pop %v1929
          %v1931 = vmul.f32 %v1809, 1.442695
          %v1932 = vpow.pop %v1931
          %v1933 = vmul.f32 %v1810, 1.442695
          %v1934 = vpow.pop %v1933
          %v1935 = vmul.f32 %v1811, 1.442695
          %v1936 = vpow.pop %v1935
          %v1937 = vmul.f32 %v1812, 1.442695
          %v1938 = vpow.pop %v1937
          %v1939 = vmul.f32 %v1813, 1.442695
          %v1940 = vpow.pop %v1939
          %v1941 = vmul.f32 %v1814, 1.442695
          %v1942 = vpow.pop %v1941
          %v1943 = vld [vmem:[#allocation3] sm:$0xff]
          %v1944 = vld [vmem:[#allocation3 + $0x8] sm:$0xff]
          %v1945 = vld [vmem:[#allocation3 + $0x10] sm:$0xff]
          %v1946 = vld [vmem:[#allocation3 + $0x18] sm:$0xff]
          %v1947 = vld [vmem:[#allocation3 + $0x20] sm:$0xff]
          %v1948 = vld [vmem:[#allocation3 + $0x28] sm:$0xff]
          %v1949 = vld [vmem:[#allocation3 + $0x30] sm:$0xff]
          %v1950 = vld [vmem:[#allocation3 + $0x38] sm:$0xff]
          %v1951 = vld [vmem:[#allocation3 + $0x40] sm:$0xff]
          %v1952 = vld [vmem:[#allocation3 + $0x48] sm:$0xff]
          %v1953 = vld [vmem:[#allocation3 + $0x50] sm:$0xff]
          %v1954 = vld [vmem:[#allocation3 + $0x58] sm:$0xff]
          %v1955 = vld [vmem:[#allocation3 + $0x60] sm:$0xff]
          %v1956 = vld [vmem:[#allocation3 + $0x68] sm:$0xff]
          %v1957 = vld [vmem:[#allocation3 + $0x70] sm:$0xff]
          %v1958 = vld [vmem:[#allocation3 + $0x78] sm:$0xff]
          %v1959 = vld [vmem:[#allocation3 + $0x80] sm:$0xff]
          %v1960 = vld [vmem:[#allocation3 + $0x88] sm:$0xff]
          %v1961 = vld [vmem:[#allocation3 + $0x90] sm:$0xff]
          %v1962 = vld [vmem:[#allocation3 + $0x98] sm:$0xff]
          %v1963 = vld [vmem:[#allocation3 + $0xa0] sm:$0xff]
          %v1964 = vld [vmem:[#allocation3 + $0xa8] sm:$0xff]
          %v1965 = vld [vmem:[#allocation3 + $0xb0] sm:$0xff]
          %v1966 = vld [vmem:[#allocation3 + $0xb8] sm:$0xff]
          %v1967 = vld [vmem:[#allocation3 + $0xc0] sm:$0xff]
          %v1968 = vld [vmem:[#allocation3 + $0xc8] sm:$0xff]
          %v1969 = vld [vmem:[#allocation3 + $0xd0] sm:$0xff]
          %v1970 = vld [vmem:[#allocation3 + $0xd8] sm:$0xff]
          %v1971 = vld [vmem:[#allocation3 + $0xe0] sm:$0xff]
          %v1972 = vld [vmem:[#allocation3 + $0xe8] sm:$0xff]
          %v1973 = vld [vmem:[#allocation3 + $0xf0] sm:$0xff]
          %v1974 = vld [vmem:[#allocation3 + $0xf8] sm:$0xff]
          %v1975 = vmul.f32 %v1528, %v1943
          %v1976 = vmul.f32 %v1530, %v1944
          %v1977 = vmul.f32 %v1532, %v1945
          %v1978 = vmul.f32 %v1534, %v1946
          %v1979 = vmul.f32 %v1536, %v1947
          %v1980 = vmul.f32 %v1538, %v1948
          %v1981 = vmul.f32 %v1540, %v1949
          %v1982 = vmul.f32 %v1542, %v1950
          %v1983 = vmul.f32 %v1544, %v1951
          %v1984 = vmul.f32 %v1546, %v1952
          %v1985 = vmul.f32 %v1548, %v1953
          %v1986 = vmul.f32 %v1550, %v1954
          %v1987 = vmul.f32 %v1552, %v1955
          %v1988 = vmul.f32 %v1554, %v1956
          %v1989 = vmul.f32 %v1556, %v1957
          %v1990 = vmul.f32 %v1558, %v1958
          %v1991 = vmul.f32 %v1560, %v1959
          %v1992 = vmul.f32 %v1562, %v1960
          %v1993 = vmul.f32 %v1564, %v1961
          %v1994 = vmul.f32 %v1566, %v1962
          %v1995 = vmul.f32 %v1568, %v1963
          %v1996 = vmul.f32 %v1570, %v1964
          %v1997 = vmul.f32 %v1572, %v1965
          %v1998 = vmul.f32 %v1574, %v1966
          %v1999 = vmul.f32 %v1576, %v1967
          %v2000 = vmul.f32 %v1578, %v1968
          %v2001 = vmul.f32 %v1580, %v1969
          %v2002 = vmul.f32 %v1582, %v1970
          %v2003 = vmul.f32 %v1584, %v1971
          %v2004 = vmul.f32 %v1586, %v1972
          %v2005 = vmul.f32 %v1588, %v1973
          %v2006 = vmul.f32 %v1590, %v1974
          %v2007 = vadd.f32 %v1816, %v1818
          %2008 = vadd.xlane.f32.xlu0 %v2007
          %v2009 = vpop.xlane.xlu0 %2008
          %v2010 = vadd.f32 %v1820, %v1822
          %2011 = vadd.xlane.f32.xlu0 %v2010
          %v2012 = vpop.xlane.xlu0 %2011
          %v2013 = vadd.f32 %v1824, %v1826
          %2014 = vadd.xlane.f32.xlu0 %v2013
          %v2015 = vpop.xlane.xlu0 %2014
          %v2016 = vadd.f32 %v1828, %v1830
          %2017 = vadd.xlane.f32.xlu0 %v2016
          %v2018 = vpop.xlane.xlu0 %2017
          %v2019 = vadd.f32 %v1832, %v1834
          %2020 = vadd.xlane.f32.xlu0 %v2019
          %v2021 = vpop.xlane.xlu0 %2020
          %v2022 = vadd.f32 %v1836, %v1838
          %2023 = vadd.xlane.f32.xlu0 %v2022
          %v2024 = vpop.xlane.xlu0 %2023
          %v2025 = vadd.f32 %v1840, %v1842
          %2026 = vadd.xlane.f32.xlu0 %v2025
          %v2027 = vpop.xlane.xlu0 %2026
          %v2028 = vadd.f32 %v1844, %v1846
          %2029 = vadd.xlane.f32.xlu0 %v2028
          %v2030 = vpop.xlane.xlu0 %2029
          %v2031 = vadd.f32 %v1848, %v1850
          %2032 = vadd.xlane.f32.xlu0 %v2031
          %v2033 = vpop.xlane.xlu0 %2032
          %v2034 = vadd.f32 %v1852, %v1854
          %2035 = vadd.xlane.f32.xlu0 %v2034
          %v2036 = vpop.xlane.xlu0 %2035
          %v2037 = vadd.f32 %v1856, %v1858
          %2038 = vadd.xlane.f32.xlu0 %v2037
          %v2039 = vpop.xlane.xlu0 %2038
          %v2040 = vadd.f32 %v1860, %v1862
          %2041 = vadd.xlane.f32.xlu0 %v2040
          %v2042 = vpop.xlane.xlu0 %2041
          %v2043 = vadd.f32 %v1864, %v1866
          %2044 = vadd.xlane.f32.xlu0 %v2043
          %v2045 = vpop.xlane.xlu0 %2044
          %v2046 = vadd.f32 %v1868, %v1870
          %2047 = vadd.xlane.f32.xlu0 %v2046
          %v2048 = vpop.xlane.xlu0 %2047
          %v2049 = vadd.f32 %v1872, %v1874
          %2050 = vadd.xlane.f32.xlu0 %v2049
          %v2051 = vpop.xlane.xlu0 %2050
          %v2052 = vadd.f32 %v1876, %v1878
          %2053 = vadd.xlane.f32.xlu0 %v2052
          %v2054 = vpop.xlane.xlu0 %2053
          %v2055 = vadd.f32 %v1880, %v1882
          %2056 = vadd.xlane.f32.xlu0 %v2055
          %v2057 = vpop.xlane.xlu0 %2056
          %v2058 = vadd.f32 %v1884, %v1886
          %2059 = vadd.xlane.f32.xlu0 %v2058
          %v2060 = vpop.xlane.xlu0 %2059
          %v2061 = vadd.f32 %v1888, %v1890
          %2062 = vadd.xlane.f32.xlu0 %v2061
          %v2063 = vpop.xlane.xlu0 %2062
          %v2064 = vadd.f32 %v1892, %v1894
          %2065 = vadd.xlane.f32.xlu0 %v2064
          %v2066 = vpop.xlane.xlu0 %2065
          %v2067 = vadd.f32 %v1896, %v1898
          %2068 = vadd.xlane.f32.xlu0 %v2067
          %v2069 = vpop.xlane.xlu0 %2068
          %v2070 = vadd.f32 %v1900, %v1902
          %2071 = vadd.xlane.f32.xlu0 %v2070
          %v2072 = vpop.xlane.xlu0 %2071
          %v2073 = vadd.f32 %v1904, %v1906
          %2074 = vadd.xlane.f32.xlu0 %v2073
          %v2075 = vpop.xlane.xlu0 %2074
          %v2076 = vadd.f32 %v1908, %v1910
          %2077 = vadd.xlane.f32.xlu0 %v2076
          %v2078 = vpop.xlane.xlu0 %2077
          %v2079 = vadd.f32 %v1912, %v1914
          %2080 = vadd.xlane.f32.xlu0 %v2079
          %v2081 = vpop.xlane.xlu0 %2080
          %v2082 = vadd.f32 %v1916, %v1918
          %2083 = vadd.xlane.f32.xlu0 %v2082
          %v2084 = vpop.xlane.xlu0 %2083
          %v2085 = vadd.f32 %v1920, %v1922
          %2086 = vadd.xlane.f32.xlu0 %v2085
          %v2087 = vpop.xlane.xlu0 %2086
          %v2088 = vadd.f32 %v1924, %v1926
          %2089 = vadd.xlane.f32.xlu0 %v2088
          %v2090 = vpop.xlane.xlu0 %2089
          %v2091 = vadd.f32 %v1928, %v1930
          %2092 = vadd.xlane.f32.xlu0 %v2091
          %v2093 = vpop.xlane.xlu0 %2092
          %v2094 = vadd.f32 %v1932, %v1934
          %2095 = vadd.xlane.f32.xlu0 %v2094
          %v2096 = vpop.xlane.xlu0 %2095
          %v2097 = vadd.f32 %v1936, %v1938
          %2098 = vadd.xlane.f32.xlu0 %v2097
          %v2099 = vpop.xlane.xlu0 %2098
          %v2100 = vadd.f32 %v1940, %v1942
          %2101 = vadd.xlane.f32.xlu0 %v2100
          %v2102 = vpop.xlane.xlu0 %2101
          %v2103 = vadd.f32 %v1975, %v2009
          %v2104 = vadd.f32 %v1976, %v2012
          %v2105 = vadd.f32 %v1977, %v2015
          %v2106 = vadd.f32 %v1978, %v2018
          %v2107 = vadd.f32 %v1979, %v2021
          %v2108 = vadd.f32 %v1980, %v2024
          %v2109 = vadd.f32 %v1981, %v2027
          %v2110 = vadd.f32 %v1982, %v2030
          %v2111 = vadd.f32 %v1983, %v2033
          %v2112 = vadd.f32 %v1984, %v2036
          %v2113 = vadd.f32 %v1985, %v2039
          %v2114 = vadd.f32 %v1986, %v2042
          %v2115 = vadd.f32 %v1987, %v2045
          %v2116 = vadd.f32 %v1988, %v2048
          %v2117 = vadd.f32 %v1989, %v2051
          %v2118 = vadd.f32 %v1990, %v2054
          %v2119 = vadd.f32 %v1991, %v2057
          %v2120 = vadd.f32 %v1992, %v2060
          %v2121 = vadd.f32 %v1993, %v2063
          %v2122 = vadd.f32 %v1994, %v2066
          %v2123 = vadd.f32 %v1995, %v2069
          %v2124 = vadd.f32 %v1996, %v2072
          %v2125 = vadd.f32 %v1997, %v2075
          %v2126 = vadd.f32 %v1998, %v2078
          %v2127 = vadd.f32 %v1999, %v2081
          %v2128 = vadd.f32 %v2000, %v2084
          %v2129 = vadd.f32 %v2001, %v2087
          %v2130 = vadd.f32 %v2002, %v2090
          %v2131 = vadd.f32 %v2003, %v2093
          %v2132 = vadd.f32 %v2004, %v2096
          %v2133 = vadd.f32 %v2005, %v2099
          %v2134 = vadd.f32 %v2006, %v2102
          %vm2135 = vcmask 7168
          %2136 = vst.msk [vmem:[#allocation3] sm:$0xff] %vm2135, %v2103
          %2137 = vst.msk [vmem:[#allocation3 + $0x8] sm:$0xff] %vm2135, %v2104
          %2138 = vst.msk [vmem:[#allocation3 + $0x10] sm:$0xff] %vm2135, %v2105
          %2139 = vst.msk [vmem:[#allocation3 + $0x18] sm:$0xff] %vm2135, %v2106
          %2140 = vst.msk [vmem:[#allocation3 + $0x20] sm:$0xff] %vm2135, %v2107
          %2141 = vst.msk [vmem:[#allocation3 + $0x28] sm:$0xff] %vm2135, %v2108
          %2142 = vst.msk [vmem:[#allocation3 + $0x30] sm:$0xff] %vm2135, %v2109
          %2143 = vst.msk [vmem:[#allocation3 + $0x38] sm:$0xff] %vm2135, %v2110
          %2144 = vst.msk [vmem:[#allocation3 + $0x40] sm:$0xff] %vm2135, %v2111
          %2145 = vst.msk [vmem:[#allocation3 + $0x48] sm:$0xff] %vm2135, %v2112
          %2146 = vst.msk [vmem:[#allocation3 + $0x50] sm:$0xff] %vm2135, %v2113
          %2147 = vst.msk [vmem:[#allocation3 + $0x58] sm:$0xff] %vm2135, %v2114
          %2148 = vst.msk [vmem:[#allocation3 + $0x60] sm:$0xff] %vm2135, %v2115
          %2149 = vst.msk [vmem:[#allocation3 + $0x68] sm:$0xff] %vm2135, %v2116
          %2150 = vst.msk [vmem:[#allocation3 + $0x70] sm:$0xff] %vm2135, %v2117
          %2151 = vst.msk [vmem:[#allocation3 + $0x78] sm:$0xff] %vm2135, %v2118
          %2152 = vst.msk [vmem:[#allocation3 + $0x80] sm:$0xff] %vm2135, %v2119
          %2153 = vst.msk [vmem:[#allocation3 + $0x88] sm:$0xff] %vm2135, %v2120
          %2154 = vst.msk [vmem:[#allocation3 + $0x90] sm:$0xff] %vm2135, %v2121
          %2155 = vst.msk [vmem:[#allocation3 + $0x98] sm:$0xff] %vm2135, %v2122
          %2156 = vst.msk [vmem:[#allocation3 + $0xa0] sm:$0xff] %vm2135, %v2123
          %2157 = vst.msk [vmem:[#allocation3 + $0xa8] sm:$0xff] %vm2135, %v2124
          %2158 = vst.msk [vmem:[#allocation3 + $0xb0] sm:$0xff] %vm2135, %v2125
          %2159 = vst.msk [vmem:[#allocation3 + $0xb8] sm:$0xff] %vm2135, %v2126
          %2160 = vst.msk [vmem:[#allocation3 + $0xc0] sm:$0xff] %vm2135, %v2127
          %2161 = vst.msk [vmem:[#allocation3 + $0xc8] sm:$0xff] %vm2135, %v2128
          %2162 = vst.msk [vmem:[#allocation3 + $0xd0] sm:$0xff] %vm2135, %v2129
          %2163 = vst.msk [vmem:[#allocation3 + $0xd8] sm:$0xff] %vm2135, %v2130
          %2164 = vst.msk [vmem:[#allocation3 + $0xe0] sm:$0xff] %vm2135, %v2131
          %2165 = vst.msk [vmem:[#allocation3 + $0xe8] sm:$0xff] %vm2135, %v2132
          %2166 = vst.msk [vmem:[#allocation3 + $0xf0] sm:$0xff] %vm2135, %v2133
          %2167 = vst.msk [vmem:[#allocation3 + $0xf8] sm:$0xff] %vm2135, %v2134
          %v2168 = vld [vmem:[#allocation4] sm:$0xff]
          %v2169 = vld [vmem:[#allocation4 + $0x8] sm:$0xff]
          %v2170 = vld [vmem:[#allocation4 + $0x10] sm:$0xff]
          %v2171 = vld [vmem:[#allocation4 + $0x18] sm:$0xff]
          %v2172 = vld [vmem:[#allocation4 + $0x20] sm:$0xff]
          %v2173 = vld [vmem:[#allocation4 + $0x28] sm:$0xff]
          %v2174 = vld [vmem:[#allocation4 + $0x30] sm:$0xff]
          %v2175 = vld [vmem:[#allocation4 + $0x38] sm:$0xff]
          %v2176 = vld [vmem:[#allocation4 + $0x40] sm:$0xff]
          %v2177 = vld [vmem:[#allocation4 + $0x48] sm:$0xff]
          %v2178 = vld [vmem:[#allocation4 + $0x50] sm:$0xff]
          %v2179 = vld [vmem:[#allocation4 + $0x58] sm:$0xff]
          %v2180 = vld [vmem:[#allocation4 + $0x60] sm:$0xff]
          %v2181 = vld [vmem:[#allocation4 + $0x68] sm:$0xff]
          %v2182 = vld [vmem:[#allocation4 + $0x70] sm:$0xff]
          %v2183 = vld [vmem:[#allocation4 + $0x78] sm:$0xff]
          %v2184 = vld [vmem:[#allocation4 + $0x80] sm:$0xff]
          %v2185 = vld [vmem:[#allocation4 + $0x88] sm:$0xff]
          %v2186 = vld [vmem:[#allocation4 + $0x90] sm:$0xff]
          %v2187 = vld [vmem:[#allocation4 + $0x98] sm:$0xff]
          %v2188 = vld [vmem:[#allocation4 + $0xa0] sm:$0xff]
          %v2189 = vld [vmem:[#allocation4 + $0xa8] sm:$0xff]
          %v2190 = vld [vmem:[#allocation4 + $0xb0] sm:$0xff]
          %v2191 = vld [vmem:[#allocation4 + $0xb8] sm:$0xff]
          %v2192 = vld [vmem:[#allocation4 + $0xc0] sm:$0xff]
          %v2193 = vld [vmem:[#allocation4 + $0xc8] sm:$0xff]
          %v2194 = vld [vmem:[#allocation4 + $0xd0] sm:$0xff]
          %v2195 = vld [vmem:[#allocation4 + $0xd8] sm:$0xff]
          %v2196 = vld [vmem:[#allocation4 + $0xe0] sm:$0xff]
          %v2197 = vld [vmem:[#allocation4 + $0xe8] sm:$0xff]
          %v2198 = vld [vmem:[#allocation4 + $0xf0] sm:$0xff]
          %v2199 = vld [vmem:[#allocation4 + $0xf8] sm:$0xff]
          %2201 = vset.pattern.permute.xlu0 0
          %2202 = vperm.xlu0 %2201, %v1528
          %v2203 = vpop.permute.xlu0 %2202
          %2206 = vset.pattern.permute.xlu0 0
          %2207 = vperm.xlu0 %2206, %v1530
          %v2208 = vpop.permute.xlu0 %2207
          %2211 = vset.pattern.permute.xlu0 0
          %2212 = vperm.xlu0 %2211, %v1532
          %v2213 = vpop.permute.xlu0 %2212
          %2216 = vset.pattern.permute.xlu0 0
          %2217 = vperm.xlu0 %2216, %v1534
          %v2218 = vpop.permute.xlu0 %2217
          %2221 = vset.pattern.permute.xlu0 0
          %2222 = vperm.xlu0 %2221, %v1536
          %v2223 = vpop.permute.xlu0 %2222
          %2226 = vset.pattern.permute.xlu0 0
          %2227 = vperm.xlu0 %2226, %v1538
          %v2228 = vpop.permute.xlu0 %2227
          %2231 = vset.pattern.permute.xlu0 0
          %2232 = vperm.xlu0 %2231, %v1540
          %v2233 = vpop.permute.xlu0 %2232
          %2236 = vset.pattern.permute.xlu0 0
          %2237 = vperm.xlu0 %2236, %v1542
          %v2238 = vpop.permute.xlu0 %2237
          %2241 = vset.pattern.permute.xlu0 0
          %2242 = vperm.xlu0 %2241, %v1544
          %v2243 = vpop.permute.xlu0 %2242
          %2246 = vset.pattern.permute.xlu0 0
          %2247 = vperm.xlu0 %2246, %v1546
          %v2248 = vpop.permute.xlu0 %2247
          %2251 = vset.pattern.permute.xlu0 0
          %2252 = vperm.xlu0 %2251, %v1548
          %v2253 = vpop.permute.xlu0 %2252
          %2256 = vset.pattern.permute.xlu0 0
          %2257 = vperm.xlu0 %2256, %v1550
          %v2258 = vpop.permute.xlu0 %2257
          %2261 = vset.pattern.permute.xlu0 0
          %2262 = vperm.xlu0 %2261, %v1552
          %v2263 = vpop.permute.xlu0 %2262
          %2266 = vset.pattern.permute.xlu0 0
          %2267 = vperm.xlu0 %2266, %v1554
          %v2268 = vpop.permute.xlu0 %2267
          %2271 = vset.pattern.permute.xlu0 0
          %2272 = vperm.xlu0 %2271, %v1556
          %v2273 = vpop.permute.xlu0 %2272
          %2276 = vset.pattern.permute.xlu0 0
          %2277 = vperm.xlu0 %2276, %v1558
          %v2278 = vpop.permute.xlu0 %2277
          %2281 = vset.pattern.permute.xlu0 0
          %2282 = vperm.xlu0 %2281, %v1560
          %v2283 = vpop.permute.xlu0 %2282
          %2286 = vset.pattern.permute.xlu0 0
          %2287 = vperm.xlu0 %2286, %v1562
          %v2288 = vpop.permute.xlu0 %2287
          %2291 = vset.pattern.permute.xlu0 0
          %2292 = vperm.xlu0 %2291, %v1564
          %v2293 = vpop.permute.xlu0 %2292
          %2296 = vset.pattern.permute.xlu0 0
          %2297 = vperm.xlu0 %2296, %v1566
          %v2298 = vpop.permute.xlu0 %2297
          %2301 = vset.pattern.permute.xlu0 0
          %2302 = vperm.xlu0 %2301, %v1568
          %v2303 = vpop.permute.xlu0 %2302
          %2306 = vset.pattern.permute.xlu0 0
          %2307 = vperm.xlu0 %2306, %v1570
          %v2308 = vpop.permute.xlu0 %2307
          %2311 = vset.pattern.permute.xlu0 0
          %2312 = vperm.xlu0 %2311, %v1572
          %v2313 = vpop.permute.xlu0 %2312
          %2316 = vset.pattern.permute.xlu0 0
          %2317 = vperm.xlu0 %2316, %v1574
          %v2318 = vpop.permute.xlu0 %2317
          %2321 = vset.pattern.permute.xlu0 0
          %2322 = vperm.xlu0 %2321, %v1576
          %v2323 = vpop.permute.xlu0 %2322
          %2326 = vset.pattern.permute.xlu0 0
          %2327 = vperm.xlu0 %2326, %v1578
          %v2328 = vpop.permute.xlu0 %2327
          %2331 = vset.pattern.permute.xlu0 0
          %2332 = vperm.xlu0 %2331, %v1580
          %v2333 = vpop.permute.xlu0 %2332
          %2336 = vset.pattern.permute.xlu0 0
          %2337 = vperm.xlu0 %2336, %v1582
          %v2338 = vpop.permute.xlu0 %2337
          %2341 = vset.pattern.permute.xlu0 0
          %2342 = vperm.xlu0 %2341, %v1584
          %v2343 = vpop.permute.xlu0 %2342
          %2346 = vset.pattern.permute.xlu0 0
          %2347 = vperm.xlu0 %2346, %v1586
          %v2348 = vpop.permute.xlu0 %2347
          %2351 = vset.pattern.permute.xlu0 0
          %2352 = vperm.xlu0 %2351, %v1588
          %v2353 = vpop.permute.xlu0 %2352
          %2356 = vset.pattern.permute.xlu0 0
          %2357 = vperm.xlu0 %2356, %v1590
          %v2358 = vpop.permute.xlu0 %2357
          %v2360 = vmul.f32 %v2203, %v2168
          %v2361 = vmul.f32 %v2208, %v2169
          %v2362 = vmul.f32 %v2213, %v2170
          %v2363 = vmul.f32 %v2218, %v2171
          %v2364 = vmul.f32 %v2223, %v2172
          %v2365 = vmul.f32 %v2228, %v2173
          %v2366 = vmul.f32 %v2233, %v2174
          %v2367 = vmul.f32 %v2238, %v2175
          %v2368 = vmul.f32 %v2243, %v2176
          %v2369 = vmul.f32 %v2248, %v2177
          %v2370 = vmul.f32 %v2253, %v2178
          %v2371 = vmul.f32 %v2258, %v2179
          %v2372 = vmul.f32 %v2263, %v2180
          %v2373 = vmul.f32 %v2268, %v2181
          %v2374 = vmul.f32 %v2273, %v2182
          %v2375 = vmul.f32 %v2278, %v2183
          %v2376 = vmul.f32 %v2283, %v2184
          %v2377 = vmul.f32 %v2288, %v2185
          %v2378 = vmul.f32 %v2293, %v2186
          %v2379 = vmul.f32 %v2298, %v2187
          %v2380 = vmul.f32 %v2303, %v2188
          %v2381 = vmul.f32 %v2308, %v2189
          %v2382 = vmul.f32 %v2313, %v2190
          %v2383 = vmul.f32 %v2318, %v2191
          %v2384 = vmul.f32 %v2323, %v2192
          %v2385 = vmul.f32 %v2328, %v2193
          %v2386 = vmul.f32 %v2333, %v2194
          %v2387 = vmul.f32 %v2338, %v2195
          %v2388 = vmul.f32 %v2343, %v2196
          %v2389 = vmul.f32 %v2348, %v2197
          %v2390 = vmul.f32 %v2353, %v2198
          %v2391 = vmul.f32 %v2358, %v2199
          %v2392 = vpack.c.bf16 %v1820, %v1816
          %v2393 = vpack.c.bf16 %v1822, %v1818
          %v2394 = vpack.c.bf16 %v1828, %v1824
          %v2395 = vpack.c.bf16 %v1830, %v1826
          %v2396 = vpack.c.bf16 %v1836, %v1832
          %v2397 = vpack.c.bf16 %v1838, %v1834
          %v2398 = vpack.c.bf16 %v1844, %v1840
          %v2399 = vpack.c.bf16 %v1846, %v1842
          %v2400 = vpack.c.bf16 %v1852, %v1848
          %v2401 = vpack.c.bf16 %v1854, %v1850
          %v2402 = vpack.c.bf16 %v1860, %v1856
          %v2403 = vpack.c.bf16 %v1862, %v1858
          %v2404 = vpack.c.bf16 %v1868, %v1864
          %v2405 = vpack.c.bf16 %v1870, %v1866
          %v2406 = vpack.c.bf16 %v1876, %v1872
          %v2407 = vpack.c.bf16 %v1878, %v1874
          %v2408 = vpack.c.bf16 %v1884, %v1880
          %v2409 = vpack.c.bf16 %v1886, %v1882
          %v2410 = vpack.c.bf16 %v1892, %v1888
          %v2411 = vpack.c.bf16 %v1894, %v1890
          %v2412 = vpack.c.bf16 %v1900, %v1896
          %v2413 = vpack.c.bf16 %v1902, %v1898
          %v2414 = vpack.c.bf16 %v1908, %v1904
          %v2415 = vpack.c.bf16 %v1910, %v1906
          %v2416 = vpack.c.bf16 %v1916, %v1912
          %v2417 = vpack.c.bf16 %v1918, %v1914
          %v2418 = vpack.c.bf16 %v1924, %v1920
          %v2419 = vpack.c.bf16 %v1926, %v1922
          %v2420 = vpack.c.bf16 %v1932, %v1928
          %v2421 = vpack.c.bf16 %v1934, %v1930
          %v2422 = vpack.c.bf16 %v1940, %v1936
          %v2423 = vpack.c.bf16 %v1942, %v1938
          %v2424 = vld [vmem:[%s362] sm:$0xf]
          %v2425 = vld [vmem:[%s362 + $0x4] sm:$0xf]
          %v2426 = vld [vmem:[%s362 + $0x8] sm:$0xf]
          %v2427 = vld [vmem:[%s362 + $0xc] sm:$0xf]
          %v2428 = vld [vmem:[%s362 + $0x10] sm:$0xf]
          %v2429 = vld [vmem:[%s362 + $0x14] sm:$0xf]
          %v2430 = vld [vmem:[%s362 + $0x18] sm:$0xf]
          %v2431 = vld [vmem:[%s362 + $0x1c] sm:$0xf]
          %v2432 = vld [vmem:[%s362 + $0x20] sm:$0xf]
          %v2433 = vld [vmem:[%s362 + $0x24] sm:$0xf]
          %v2434 = vld [vmem:[%s362 + $0x28] sm:$0xf]
          %v2435 = vld [vmem:[%s362 + $0x2c] sm:$0xf]
          %v2436 = vld [vmem:[%s362 + $0x30] sm:$0xf]
          %v2437 = vld [vmem:[%s362 + $0x34] sm:$0xf]
          %v2438 = vld [vmem:[%s362 + $0x38] sm:$0xf]
          %v2439 = vld [vmem:[%s362 + $0x3c] sm:$0xf]
          %v2440 = vld [vmem:[%s362 + $0x40] sm:$0xf]
          %v2441 = vld [vmem:[%s362 + $0x44] sm:$0xf]
          %v2442 = vld [vmem:[%s362 + $0x48] sm:$0xf]
          %v2443 = vld [vmem:[%s362 + $0x4c] sm:$0xf]
          %v2444 = vld [vmem:[%s362 + $0x50] sm:$0xf]
          %v2445 = vld [vmem:[%s362 + $0x54] sm:$0xf]
          %v2446 = vld [vmem:[%s362 + $0x58] sm:$0xf]
          %v2447 = vld [vmem:[%s362 + $0x5c] sm:$0xf]
          %v2448 = vld [vmem:[%s362 + $0x60] sm:$0xf]
          %v2449 = vld [vmem:[%s362 + $0x64] sm:$0xf]
          %v2450 = vld [vmem:[%s362 + $0x68] sm:$0xf]
          %v2451 = vld [vmem:[%s362 + $0x6c] sm:$0xf]
          %v2452 = vld [vmem:[%s362 + $0x70] sm:$0xf]
          %v2453 = vld [vmem:[%s362 + $0x74] sm:$0xf]
          %v2454 = vld [vmem:[%s362 + $0x78] sm:$0xf]
          %v2455 = vld [vmem:[%s362 + $0x7c] sm:$0xf]
          %v2488 = vunpack.c.l.b16 %v2424
          %v2489 = vunpack.c.l.b16 %v2425
          %v2490 = vunpack.c.l.b16 %v2426
          %v2491 = vunpack.c.l.b16 %v2427
          %v2492 = vunpack.c.l.b16 %v2428
          %v2493 = vunpack.c.l.b16 %v2429
          %v2494 = vunpack.c.l.b16 %v2430
          %v2495 = vunpack.c.l.b16 %v2431
          %v2496 = vunpack.c.l.b16 %v2432
          %v2497 = vunpack.c.l.b16 %v2433
          %v2498 = vunpack.c.l.b16 %v2434
          %v2499 = vunpack.c.l.b16 %v2435
          %v2500 = vunpack.c.l.b16 %v2436
          %v2501 = vunpack.c.l.b16 %v2437
          %v2502 = vunpack.c.l.b16 %v2438
          %v2503 = vunpack.c.l.b16 %v2439
          %v2504 = vunpack.c.l.b16 %v2440
          %v2505 = vunpack.c.l.b16 %v2441
          %v2506 = vunpack.c.l.b16 %v2442
          %v2507 = vunpack.c.l.b16 %v2443
          %v2508 = vunpack.c.l.b16 %v2444
          %v2509 = vunpack.c.l.b16 %v2445
          %v2510 = vunpack.c.l.b16 %v2446
          %v2511 = vunpack.c.l.b16 %v2447
          %v2512 = vunpack.c.l.b16 %v2448
          %v2513 = vunpack.c.l.b16 %v2449
          %v2514 = vunpack.c.l.b16 %v2450
          %v2515 = vunpack.c.l.b16 %v2451
          %v2516 = vunpack.c.l.b16 %v2452
          %v2517 = vunpack.c.l.b16 %v2453
          %v2518 = vunpack.c.l.b16 %v2454
          %v2519 = vunpack.c.l.b16 %v2455
          %v2520 = vpack.c.b16 %v2489, %v2488
          %v2521 = vpack.c.b16 %v2491, %v2490
          %v2522 = vpack.c.b16 %v2493, %v2492
          %v2523 = vpack.c.b16 %v2495, %v2494
          %v2524 = vpack.c.b16 %v2497, %v2496
          %v2525 = vpack.c.b16 %v2499, %v2498
          %v2526 = vpack.c.b16 %v2501, %v2500
          %v2527 = vpack.c.b16 %v2503, %v2502
          %v2528 = vpack.c.b16 %v2505, %v2504
          %v2529 = vpack.c.b16 %v2507, %v2506
          %v2530 = vpack.c.b16 %v2509, %v2508
          %v2531 = vpack.c.b16 %v2511, %v2510
          %v2532 = vpack.c.b16 %v2513, %v2512
          %v2533 = vpack.c.b16 %v2515, %v2514
          %v2534 = vpack.c.b16 %v2517, %v2516
          %v2535 = vpack.c.b16 %v2519, %v2518
          %2552 = vmatprep.subr.bf16.mxu0 0
          %2553 = vmatpush1.bf16.msra.mxu0 %v2520
          %2554 = vmatprep.subr.bf16.mxu0 0
          %2555 = vmatpush1.bf16.msra.mxu0 %v2521
          %2556 = vmatprep.subr.bf16.mxu0 0
          %2557 = vmatpush1.bf16.msra.mxu0 %v2522
          %2558 = vmatprep.subr.bf16.mxu0 0
          %2559 = vmatpush1.bf16.msra.mxu0 %v2523
          %2560 = vmatprep.subr.bf16.mxu0 0
          %2561 = vmatpush1.bf16.msra.mxu0 %v2524
          %2562 = vmatprep.subr.bf16.mxu0 0
          %2563 = vmatpush1.bf16.msra.mxu0 %v2525
          %2564 = vmatprep.subr.bf16.mxu0 0
          %2565 = vmatpush1.bf16.msra.mxu0 %v2526
          %2566 = vmatprep.subr.bf16.mxu0 0
          %2567 = vmatpush1.bf16.msra.mxu0 %v2527
          %2568 = vmatprep.subr.bf16.mxu0 0
          %2569 = vmatpush1.bf16.msra.mxu0 %v2528
          %2570 = vmatprep.subr.bf16.mxu0 0
          %2571 = vmatpush1.bf16.msra.mxu0 %v2529
          %2572 = vmatprep.subr.bf16.mxu0 0
          %2573 = vmatpush1.bf16.msra.mxu0 %v2530
          %2574 = vmatprep.subr.bf16.mxu0 0
          %2575 = vmatpush1.bf16.msra.mxu0 %v2531
          %2576 = vmatprep.subr.bf16.mxu0 0
          %2577 = vmatpush1.bf16.msra.mxu0 %v2532
          %2578 = vmatprep.subr.bf16.mxu0 0
          %2579 = vmatpush1.bf16.msra.mxu0 %v2533
          %2580 = vmatprep.subr.bf16.mxu0 0
          %2581 = vmatpush1.bf16.msra.mxu0 %v2534
          %2582 = vmatprep.subr.bf16.mxu0 0
          %2583 = vmatpush1.bf16.msra.mxu0 %v2535
          %2584 = vmatprep.mubr.bf16.mxu0 %v2393
          %2585 = vmatmul.mubr.bf16.gmra.mrb[0].mxu0 %v2392
          %v2586 = vpop.f32.mrb[0].mxu0
          %v2587 = vadd.f32 0.0, %v2586
          %v2588 = vpop.f32.mrb[0].mxu0
          %v2589 = vpop.f32.mrb[0].mxu0
          %v2590 = vadd.f32 0.0, %v2589
          %v2591 = vpop.f32.mrb[0].mxu0
          %2592 = vmatprep.mubr.bf16.mxu0 %v2395
          %2593 = vmatmul.mubr.bf16.gmra.mrb[0].mxu0 %v2394
          %v2594 = vpop.f32.mrb[0].mxu0
          %v2595 = vadd.f32 0.0, %v2594
          %v2596 = vpop.f32.mrb[0].mxu0
          %v2597 = vpop.f32.mrb[0].mxu0
          %v2598 = vadd.f32 0.0, %v2597
          %v2599 = vpop.f32.mrb[0].mxu0
          %2600 = vmatprep.mubr.bf16.mxu0 %v2397
          %2601 = vmatmul.mubr.bf16.gmra.mrb[0].mxu0 %v2396
          %v2602 = vpop.f32.mrb[0].mxu0
          %v2603 = vadd.f32 0.0, %v2602
          %v2604 = vpop.f32.mrb[0].mxu0
          %v2605 = vpop.f32.mrb[0].mxu0
          %v2606 = vadd.f32 0.0, %v2605
          %v2607 = vpop.f32.mrb[0].mxu0
          %2608 = vmatprep.mubr.bf16.mxu0 %v2399
          %2609 = vmatmul.mubr.bf16.gmra.mrb[0].mxu0 %v2398
          %v2610 = vpop.f32.mrb[0].mxu0
          %v2611 = vadd.f32 0.0, %v2610
          %v2612 = vpop.f32.mrb[0].mxu0
          %v2613 = vpop.f32.mrb[0].mxu0
          %v2614 = vadd.f32 0.0, %v2613
          %v2615 = vpop.f32.mrb[0].mxu0
          %2616 = vmatprep.mubr.bf16.mxu0 %v2401
          %2617 = vmatmul.mubr.bf16.gmra.mrb[0].mxu0 %v2400
          %v2618 = vpop.f32.mrb[0].mxu0
          %v2619 = vadd.f32 0.0, %v2618
          %v2620 = vpop.f32.mrb[0].mxu0
          %v2621 = vpop.f32.mrb[0].mxu0
          %v2622 = vadd.f32 0.0, %v2621
          %v2623 = vpop.f32.mrb[0].mxu0
          %2624 = vmatprep.mubr.bf16.mxu0 %v2403
          %2625 = vmatmul.mubr.bf16.gmra.mrb[0].mxu0 %v2402
          %v2626 = vpop.f32.mrb[0].mxu0
          %v2627 = vadd.f32 0.0, %v2626
          %v2628 = vpop.f32.mrb[0].mxu0
          %v2629 = vpop.f32.mrb[0].mxu0
          %v2630 = vadd.f32 0.0, %v2629
          %v2631 = vpop.f32.mrb[0].mxu0
          %2632 = vmatprep.mubr.bf16.mxu0 %v2405
          %2633 = vmatmul.mubr.bf16.gmra.mrb[0].mxu0 %v2404
          %v2634 = vpop.f32.mrb[0].mxu0
          %v2635 = vadd.f32 0.0, %v2634
          %v2636 = vpop.f32.mrb[0].mxu0
          %v2637 = vpop.f32.mrb[0].mxu0
          %v2638 = vadd.f32 0.0, %v2637
          %v2639 = vpop.f32.mrb[0].mxu0
          %2640 = vmatprep.mubr.bf16.mxu0 %v2407
          %2641 = vmatmul.mubr.bf16.gmra.mrb[0].mxu0 %v2406
          %v2642 = vpop.f32.mrb[0].mxu0
          %v2643 = vadd.f32 0.0, %v2642
          %v2644 = vpop.f32.mrb[0].mxu0
          %v2645 = vpop.f32.mrb[0].mxu0
          %v2646 = vadd.f32 0.0, %v2645
          %v2647 = vpop.f32.mrb[0].mxu0
          %2648 = vmatprep.mubr.bf16.mxu0 %v2409
          %2649 = vmatmul.mubr.bf16.gmra.mrb[0].mxu0 %v2408
          %v2650 = vpop.f32.mrb[0].mxu0
          %v2651 = vadd.f32 0.0, %v2650
          %v2652 = vpop.f32.mrb[0].mxu0
          %v2653 = vpop.f32.mrb[0].mxu0
          %v2654 = vadd.f32 0.0, %v2653
          %v2655 = vpop.f32.mrb[0].mxu0
          %2656 = vmatprep.mubr.bf16.mxu0 %v2411
          %2657 = vmatmul.mubr.bf16.gmra.mrb[0].mxu0 %v2410
          %v2658 = vpop.f32.mrb[0].mxu0
          %v2659 = vadd.f32 0.0, %v2658
          %v2660 = vpop.f32.mrb[0].mxu0
          %v2661 = vpop.f32.mrb[0].mxu0
          %v2662 = vadd.f32 0.0, %v2661
          %v2663 = vpop.f32.mrb[0].mxu0
          %2664 = vmatprep.mubr.bf16.mxu0 %v2413
          %2665 = vmatmul.mubr.bf16.gmra.mrb[0].mxu0 %v2412
          %v2666 = vpop.f32.mrb[0].mxu0
          %v2667 = vadd.f32 0.0, %v2666
          %v2668 = vpop.f32.mrb[0].mxu0
          %v2669 = vpop.f32.mrb[0].mxu0
          %v2670 = vadd.f32 0.0, %v2669
          %v2671 = vpop.f32.mrb[0].mxu0
          %2672 = vmatprep.mubr.bf16.mxu0 %v2415
          %2673 = vmatmul.mubr.bf16.gmra.mrb[0].mxu0 %v2414
          %v2674 = vpop.f32.mrb[0].mxu0
          %v2675 = vadd.f32 0.0, %v2674
          %v2676 = vpop.f32.mrb[0].mxu0
          %v2677 = vpop.f32.mrb[0].mxu0
          %v2678 = vadd.f32 0.0, %v2677
          %v2679 = vpop.f32.mrb[0].mxu0
          %2680 = vmatprep.mubr.bf16.mxu0 %v2417
          %2681 = vmatmul.mubr.bf16.gmra.mrb[0].mxu0 %v2416
          %v2682 = vpop.f32.mrb[0].mxu0
          %v2683 = vadd.f32 0.0, %v2682
          %v2684 = vpop.f32.mrb[0].mxu0
          %v2685 = vpop.f32.mrb[0].mxu0
          %v2686 = vadd.f32 0.0, %v2685
          %v2687 = vpop.f32.mrb[0].mxu0
          %2688 = vmatprep.mubr.bf16.mxu0 %v2419
          %2689 = vmatmul.mubr.bf16.gmra.mrb[0].mxu0 %v2418
          %v2690 = vpop.f32.mrb[0].mxu0
          %v2691 = vadd.f32 0.0, %v2690
          %v2692 = vpop.f32.mrb[0].mxu0
          %v2693 = vpop.f32.mrb[0].mxu0
          %v2694 = vadd.f32 0.0, %v2693
          %v2695 = vpop.f32.mrb[0].mxu0
          %2696 = vmatprep.mubr.bf16.mxu0 %v2421
          %2697 = vmatmul.mubr.bf16.gmra.mrb[0].mxu0 %v2420
          %v2698 = vpop.f32.mrb[0].mxu0
          %v2699 = vadd.f32 0.0, %v2698
          %v2700 = vpop.f32.mrb[0].mxu0
          %v2701 = vpop.f32.mrb[0].mxu0
          %v2702 = vadd.f32 0.0, %v2701
          %v2703 = vpop.f32.mrb[0].mxu0
          %2704 = vmatprep.mubr.bf16.mxu0 %v2423
          %2705 = vmatmul.mubr.bf16.gmra.mrb[0].mxu0 %v2422
          %v2706 = vpop.f32.mrb[0].mxu0
          %v2707 = vadd.f32 0.0, %v2706
          %v2708 = vpop.f32.mrb[0].mxu0
          %v2709 = vpop.f32.mrb[0].mxu0
          %v2710 = vadd.f32 0.0, %v2709
          %v2711 = vpop.f32.mrb[0].mxu0
          %2712 = vdwg.mxu0
          %v2713 = vadd.f32 %v2360, %v2587
          %v2714 = vadd.f32 %v2361, %v2590
          %v2715 = vadd.f32 %v2362, %v2595
          %v2716 = vadd.f32 %v2363, %v2598
          %v2717 = vadd.f32 %v2364, %v2603
          %v2718 = vadd.f32 %v2365, %v2606
          %v2719 = vadd.f32 %v2366, %v2611
          %v2720 = vadd.f32 %v2367, %v2614
          %v2721 = vadd.f32 %v2368, %v2619
          %v2722 = vadd.f32 %v2369, %v2622
          %v2723 = vadd.f32 %v2370, %v2627
          %v2724 = vadd.f32 %v2371, %v2630
          %v2725 = vadd.f32 %v2372, %v2635
          %v2726 = vadd.f32 %v2373, %v2638
          %v2727 = vadd.f32 %v2374, %v2643
          %v2728 = vadd.f32 %v2375, %v2646
          %v2729 = vadd.f32 %v2376, %v2651
          %v2730 = vadd.f32 %v2377, %v2654
          %v2731 = vadd.f32 %v2378, %v2659
          %v2732 = vadd.f32 %v2379, %v2662
          %v2733 = vadd.f32 %v2380, %v2667
          %v2734 = vadd.f32 %v2381, %v2670
          %v2735 = vadd.f32 %v2382, %v2675
          %v2736 = vadd.f32 %v2383, %v2678
          %v2737 = vadd.f32 %v2384, %v2683
          %v2738 = vadd.f32 %v2385, %v2686
          %v2739 = vadd.f32 %v2386, %v2691
          %v2740 = vadd.f32 %v2387, %v2694
          %v2741 = vadd.f32 %v2388, %v2699
          %v2742 = vadd.f32 %v2389, %v2702
          %v2743 = vadd.f32 %v2390, %v2707
          %v2744 = vadd.f32 %v2391, %v2710
          %2745 = vst [vmem:[#allocation4] sm:$0xff] %v2713
          %2746 = vst [vmem:[#allocation4 + $0x8] sm:$0xff] %v2714
          %2747 = vst [vmem:[#allocation4 + $0x10] sm:$0xff] %v2715
          %2748 = vst [vmem:[#allocation4 + $0x18] sm:$0xff] %v2716
          %2749 = vst [vmem:[#allocation4 + $0x20] sm:$0xff] %v2717
          %2750 = vst [vmem:[#allocation4 + $0x28] sm:$0xff] %v2718
          %2751 = vst [vmem:[#allocation4 + $0x30] sm:$0xff] %v2719
          %2752 = vst [vmem:[#allocation4 + $0x38] sm:$0xff] %v2720
          %2753 = vst [vmem:[#allocation4 + $0x40] sm:$0xff] %v2721
          %2754 = vst [vmem:[#allocation4 + $0x48] sm:$0xff] %v2722
          %2755 = vst [vmem:[#allocation4 + $0x50] sm:$0xff] %v2723
          %2756 = vst [vmem:[#allocation4 + $0x58] sm:$0xff] %v2724
          %2757 = vst [vmem:[#allocation4 + $0x60] sm:$0xff] %v2725
          %2758 = vst [vmem:[#allocation4 + $0x68] sm:$0xff] %v2726
          %2759 = vst [vmem:[#allocation4 + $0x70] sm:$0xff] %v2727
          %2760 = vst [vmem:[#allocation4 + $0x78] sm:$0xff] %v2728
          %2761 = vst [vmem:[#allocation4 + $0x80] sm:$0xff] %v2729
          %2762 = vst [vmem:[#allocation4 + $0x88] sm:$0xff] %v2730
          %2763 = vst [vmem:[#allocation4 + $0x90] sm:$0xff] %v2731
          %2764 = vst [vmem:[#allocation4 + $0x98] sm:$0xff] %v2732
          %2765 = vst [vmem:[#allocation4 + $0xa0] sm:$0xff] %v2733
          %2766 = vst [vmem:[#allocation4 + $0xa8] sm:$0xff] %v2734
          %2767 = vst [vmem:[#allocation4 + $0xb0] sm:$0xff] %v2735
          %2768 = vst [vmem:[#allocation4 + $0xb8] sm:$0xff] %v2736
          %2769 = vst [vmem:[#allocation4 + $0xc0] sm:$0xff] %v2737
          %2770 = vst [vmem:[#allocation4 + $0xc8] sm:$0xff] %v2738
          %2771 = vst [vmem:[#allocation4 + $0xd0] sm:$0xff] %v2739
          %2772 = vst [vmem:[#allocation4 + $0xd8] sm:$0xff] %v2740
          %2773 = vst [vmem:[#allocation4 + $0xe0] sm:$0xff] %v2741
          %2774 = vst [vmem:[#allocation4 + $0xe8] sm:$0xff] %v2742
          %2775 = vst [vmem:[#allocation4 + $0xf0] sm:$0xff] %v2743
          %2776 = vst [vmem:[#allocation4 + $0xf8] sm:$0xff] %v2744
          %2777 = vst.msk [vmem:[#allocation2] sm:$0xff] %vm2135, %v1463
          %2778 = vst.msk [vmem:[#allocation2 + $0x8] sm:$0xff] %vm2135, %v1464
          %2779 = vst.msk [vmem:[#allocation2 + $0x10] sm:$0xff] %vm2135, %v1465
          %2780 = vst.msk [vmem:[#allocation2 + $0x18] sm:$0xff] %vm2135, %v1466
          %2781 = vst.msk [vmem:[#allocation2 + $0x20] sm:$0xff] %vm2135, %v1467
          %2782 = vst.msk [vmem:[#allocation2 + $0x28] sm:$0xff] %vm2135, %v1468
          %2783 = vst.msk [vmem:[#allocation2 + $0x30] sm:$0xff] %vm2135, %v1469
          %2784 = vst.msk [vmem:[#allocation2 + $0x38] sm:$0xff] %vm2135, %v1470
          %2785 = vst.msk [vmem:[#allocation2 + $0x40] sm:$0xff] %vm2135, %v1471
          %2786 = vst.msk [vmem:[#allocation2 + $0x48] sm:$0xff] %vm2135, %v1472
          %2787 = vst.msk [vmem:[#allocation2 + $0x50] sm:$0xff] %vm2135, %v1473
          %2788 = vst.msk [vmem:[#allocation2 + $0x58] sm:$0xff] %vm2135, %v1474
          %2789 = vst.msk [vmem:[#allocation2 + $0x60] sm:$0xff] %vm2135, %v1475
          %2790 = vst.msk [vmem:[#allocation2 + $0x68] sm:$0xff] %vm2135, %v1476
          %2791 = vst.msk [vmem:[#allocation2 + $0x70] sm:$0xff] %vm2135, %v1477
          %2792 = vst.msk [vmem:[#allocation2 + $0x78] sm:$0xff] %vm2135, %v1478
          %2793 = vst.msk [vmem:[#allocation2 + $0x80] sm:$0xff] %vm2135, %v1479
          %2794 = vst.msk [vmem:[#allocation2 + $0x88] sm:$0xff] %vm2135, %v1480
          %2795 = vst.msk [vmem:[#allocation2 + $0x90] sm:$0xff] %vm2135, %v1481
          %2796 = vst.msk [vmem:[#allocation2 + $0x98] sm:$0xff] %vm2135, %v1482
          %2797 = vst.msk [vmem:[#allocation2 + $0xa0] sm:$0xff] %vm2135, %v1483
          %2798 = vst.msk [vmem:[#allocation2 + $0xa8] sm:$0xff] %vm2135, %v1484
          %2799 = vst.msk [vmem:[#allocation2 + $0xb0] sm:$0xff] %vm2135, %v1485
          %2800 = vst.msk [vmem:[#allocation2 + $0xb8] sm:$0xff] %vm2135, %v1486
          %2801 = vst.msk [vmem:[#allocation2 + $0xc0] sm:$0xff] %vm2135, %v1487
          %2802 = vst.msk [vmem:[#allocation2 + $0xc8] sm:$0xff] %vm2135, %v1488
          %2803 = vst.msk [vmem:[#allocation2 + $0xd0] sm:$0xff] %vm2135, %v1489
          %2804 = vst.msk [vmem:[#allocation2 + $0xd8] sm:$0xff] %vm2135, %v1490
          %2805 = vst.msk [vmem:[#allocation2 + $0xe0] sm:$0xff] %vm2135, %v1491
          %2806 = vst.msk [vmem:[#allocation2 + $0xe8] sm:$0xff] %vm2135, %v1492
          %2807 = vst.msk [vmem:[#allocation2 + $0xf0] sm:$0xff] %vm2135, %v1493
          %2808 = vst.msk [vmem:[#allocation2 + $0xf8] sm:$0xff] %vm2135, %v1494
        $region75: #{tpu_custom_call.1} parent=58 // pred_fallthru
          _
        %p2809 = scmp.eq.s32.totalorder %s39, 1
        // Predicated region
        $region76: #{tpu_custom_call.1} parent=58 // pred_check
          %p2810 = pneg %p2809
        $region77: #{tpu_custom_call.1} parent=58 // pred_check_branch
          %2812 = sbr.rel (%p2810) target = $region79
        $region78: #{tpu_custom_call.1} parent=58 // pred_region
          %v2813 = vld [vmem:[#allocation4] sm:$0xff]
          %v2814 = vld [vmem:[#allocation4 + $0x8] sm:$0xff]
          %v2815 = vld [vmem:[#allocation4 + $0x10] sm:$0xff]
          %v2816 = vld [vmem:[#allocation4 + $0x18] sm:$0xff]
          %v2817 = vld [vmem:[#allocation4 + $0x20] sm:$0xff]
          %v2818 = vld [vmem:[#allocation4 + $0x28] sm:$0xff]
          %v2819 = vld [vmem:[#allocation4 + $0x30] sm:$0xff]
          %v2820 = vld [vmem:[#allocation4 + $0x38] sm:$0xff]
          %v2821 = vld [vmem:[#allocation4 + $0x40] sm:$0xff]
          %v2822 = vld [vmem:[#allocation4 + $0x48] sm:$0xff]
          %v2823 = vld [vmem:[#allocation4 + $0x50] sm:$0xff]
          %v2824 = vld [vmem:[#allocation4 + $0x58] sm:$0xff]
          %v2825 = vld [vmem:[#allocation4 + $0x60] sm:$0xff]
          %v2826 = vld [vmem:[#allocation4 + $0x68] sm:$0xff]
          %v2827 = vld [vmem:[#allocation4 + $0x70] sm:$0xff]
          %v2828 = vld [vmem:[#allocation4 + $0x78] sm:$0xff]
          %v2829 = vld [vmem:[#allocation4 + $0x80] sm:$0xff]
          %v2830 = vld [vmem:[#allocation4 + $0x88] sm:$0xff]
          %v2831 = vld [vmem:[#allocation4 + $0x90] sm:$0xff]
          %v2832 = vld [vmem:[#allocation4 + $0x98] sm:$0xff]
          %v2833 = vld [vmem:[#allocation4 + $0xa0] sm:$0xff]
          %v2834 = vld [vmem:[#allocation4 + $0xa8] sm:$0xff]
          %v2835 = vld [vmem:[#allocation4 + $0xb0] sm:$0xff]
          %v2836 = vld [vmem:[#allocation4 + $0xb8] sm:$0xff]
          %v2837 = vld [vmem:[#allocation4 + $0xc0] sm:$0xff]
          %v2838 = vld [vmem:[#allocation4 + $0xc8] sm:$0xff]
          %v2839 = vld [vmem:[#allocation4 + $0xd0] sm:$0xff]
          %v2840 = vld [vmem:[#allocation4 + $0xd8] sm:$0xff]
          %v2841 = vld [vmem:[#allocation4 + $0xe0] sm:$0xff]
          %v2842 = vld [vmem:[#allocation4 + $0xe8] sm:$0xff]
          %v2843 = vld [vmem:[#allocation4 + $0xf0] sm:$0xff]
          %v2844 = vld [vmem:[#allocation4 + $0xf8] sm:$0xff]
          %v2845 = vld [vmem:[#allocation3] sm:$0xff]
          %v2846 = vld [vmem:[#allocation3 + $0x8] sm:$0xff]
          %v2847 = vld [vmem:[#allocation3 + $0x10] sm:$0xff]
          %v2848 = vld [vmem:[#allocation3 + $0x18] sm:$0xff]
          %v2849 = vld [vmem:[#allocation3 + $0x20] sm:$0xff]
          %v2850 = vld [vmem:[#allocation3 + $0x28] sm:$0xff]
          %v2851 = vld [vmem:[#allocation3 + $0x30] sm:$0xff]
          %v2852 = vld [vmem:[#allocation3 + $0x38] sm:$0xff]
          %v2853 = vld [vmem:[#allocation3 + $0x40] sm:$0xff]
          %v2854 = vld [vmem:[#allocation3 + $0x48] sm:$0xff]
          %v2855 = vld [vmem:[#allocation3 + $0x50] sm:$0xff]
          %v2856 = vld [vmem:[#allocation3 + $0x58] sm:$0xff]
          %v2857 = vld [vmem:[#allocation3 + $0x60] sm:$0xff]
          %v2858 = vld [vmem:[#allocation3 + $0x68] sm:$0xff]
          %v2859 = vld [vmem:[#allocation3 + $0x70] sm:$0xff]
          %v2860 = vld [vmem:[#allocation3 + $0x78] sm:$0xff]
          %v2861 = vld [vmem:[#allocation3 + $0x80] sm:$0xff]
          %v2862 = vld [vmem:[#allocation3 + $0x88] sm:$0xff]
          %v2863 = vld [vmem:[#allocation3 + $0x90] sm:$0xff]
          %v2864 = vld [vmem:[#allocation3 + $0x98] sm:$0xff]
          %v2865 = vld [vmem:[#allocation3 + $0xa0] sm:$0xff]
          %v2866 = vld [vmem:[#allocation3 + $0xa8] sm:$0xff]
          %v2867 = vld [vmem:[#allocation3 + $0xb0] sm:$0xff]
          %v2868 = vld [vmem:[#allocation3 + $0xb8] sm:$0xff]
          %v2869 = vld [vmem:[#allocation3 + $0xc0] sm:$0xff]
          %v2870 = vld [vmem:[#allocation3 + $0xc8] sm:$0xff]
          %v2871 = vld [vmem:[#allocation3 + $0xd0] sm:$0xff]
          %v2872 = vld [vmem:[#allocation3 + $0xd8] sm:$0xff]
          %v2873 = vld [vmem:[#allocation3 + $0xe0] sm:$0xff]
          %v2874 = vld [vmem:[#allocation3 + $0xe8] sm:$0xff]
          %v2875 = vld [vmem:[#allocation3 + $0xf0] sm:$0xff]
          %v2876 = vld [vmem:[#allocation3 + $0xf8] sm:$0xff]
          %v2877 = vrcp.pop %v2845
          %v2878 = vrcp.pop %v2846
          %v2879 = vrcp.pop %v2847
          %v2880 = vrcp.pop %v2848
          %v2881 = vrcp.pop %v2849
          %v2882 = vrcp.pop %v2850
          %v2883 = vrcp.pop %v2851
          %v2884 = vrcp.pop %v2852
          %v2885 = vrcp.pop %v2853
          %v2886 = vrcp.pop %v2854
          %v2887 = vrcp.pop %v2855
          %v2888 = vrcp.pop %v2856
          %v2889 = vrcp.pop %v2857
          %v2890 = vrcp.pop %v2858
          %v2891 = vrcp.pop %v2859
          %v2892 = vrcp.pop %v2860
          %v2893 = vrcp.pop %v2861
          %v2894 = vrcp.pop %v2862
          %v2895 = vrcp.pop %v2863
          %v2896 = vrcp.pop %v2864
          %v2897 = vrcp.pop %v2865
          %v2898 = vrcp.pop %v2866
          %v2899 = vrcp.pop %v2867
          %v2900 = vrcp.pop %v2868
          %v2901 = vrcp.pop %v2869
          %v2902 = vrcp.pop %v2870
          %v2903 = vrcp.pop %v2871
          %v2904 = vrcp.pop %v2872
          %v2905 = vrcp.pop %v2873
          %v2906 = vrcp.pop %v2874
          %v2907 = vrcp.pop %v2875
          %v2908 = vrcp.pop %v2876
          %2910 = vset.pattern.permute.xlu0 0
          %2911 = vperm.xlu0 %2910, %v2877
          %v2912 = vpop.permute.xlu0 %2911
          %2915 = vset.pattern.permute.xlu0 0
          %2916 = vperm.xlu0 %2915, %v2878
          %v2917 = vpop.permute.xlu0 %2916
          %2920 = vset.pattern.permute.xlu0 0
          %2921 = vperm.xlu0 %2920, %v2879
          %v2922 = vpop.permute.xlu0 %2921
          %2925 = vset.pattern.permute.xlu0 0
          %2926 = vperm.xlu0 %2925, %v2880
          %v2927 = vpop.permute.xlu0 %2926
          %2930 = vset.pattern.permute.xlu0 0
          %2931 = vperm.xlu0 %2930, %v2881
          %v2932 = vpop.permute.xlu0 %2931
          %2935 = vset.pattern.permute.xlu0 0
          %2936 = vperm.xlu0 %2935, %v2882
          %v2937 = vpop.permute.xlu0 %2936
          %2940 = vset.pattern.permute.xlu0 0
          %2941 = vperm.xlu0 %2940, %v2883
          %v2942 = vpop.permute.xlu0 %2941
          %2945 = vset.pattern.permute.xlu0 0
          %2946 = vperm.xlu0 %2945, %v2884
          %v2947 = vpop.permute.xlu0 %2946
          %2950 = vset.pattern.permute.xlu0 0
          %2951 = vperm.xlu0 %2950, %v2885
          %v2952 = vpop.permute.xlu0 %2951
          %2955 = vset.pattern.permute.xlu0 0
          %2956 = vperm.xlu0 %2955, %v2886
          %v2957 = vpop.permute.xlu0 %2956
          %2960 = vset.pattern.permute.xlu0 0
          %2961 = vperm.xlu0 %2960, %v2887
          %v2962 = vpop.permute.xlu0 %2961
          %2965 = vset.pattern.permute.xlu0 0
          %2966 = vperm.xlu0 %2965, %v2888
          %v2967 = vpop.permute.xlu0 %2966
          %2970 = vset.pattern.permute.xlu0 0
          %2971 = vperm.xlu0 %2970, %v2889
          %v2972 = vpop.permute.xlu0 %2971
          %2975 = vset.pattern.permute.xlu0 0
          %2976 = vperm.xlu0 %2975, %v2890
          %v2977 = vpop.permute.xlu0 %2976
          %2980 = vset.pattern.permute.xlu0 0
          %2981 = vperm.xlu0 %2980, %v2891
          %v2982 = vpop.permute.xlu0 %2981
          %2985 = vset.pattern.permute.xlu0 0
          %2986 = vperm.xlu0 %2985, %v2892
          %v2987 = vpop.permute.xlu0 %2986
          %2990 = vset.pattern.permute.xlu0 0
          %2991 = vperm.xlu0 %2990, %v2893
          %v2992 = vpop.permute.xlu0 %2991
          %2995 = vset.pattern.permute.xlu0 0
          %2996 = vperm.xlu0 %2995, %v2894
          %v2997 = vpop.permute.xlu0 %2996
          %3000 = vset.pattern.permute.xlu0 0
          %3001 = vperm.xlu0 %3000, %v2895
          %v3002 = vpop.permute.xlu0 %3001
          %3005 = vset.pattern.permute.xlu0 0
          %3006 = vperm.xlu0 %3005, %v2896
          %v3007 = vpop.permute.xlu0 %3006
          %3010 = vset.pattern.permute.xlu0 0
          %3011 = vperm.xlu0 %3010, %v2897
          %v3012 = vpop.permute.xlu0 %3011
          %3015 = vset.pattern.permute.xlu0 0
          %3016 = vperm.xlu0 %3015, %v2898
          %v3017 = vpop.permute.xlu0 %3016
          %3020 = vset.pattern.permute.xlu0 0
          %3021 = vperm.xlu0 %3020, %v2899
          %v3022 = vpop.permute.xlu0 %3021
          %3025 = vset.pattern.permute.xlu0 0
          %3026 = vperm.xlu0 %3025, %v2900
          %v3027 = vpop.permute.xlu0 %3026
          %3030 = vset.pattern.permute.xlu0 0
          %3031 = vperm.xlu0 %3030, %v2901
          %v3032 = vpop.permute.xlu0 %3031
          %3035 = vset.pattern.permute.xlu0 0
          %3036 = vperm.xlu0 %3035, %v2902
          %v3037 = vpop.permute.xlu0 %3036
          %3040 = vset.pattern.permute.xlu0 0
          %3041 = vperm.xlu0 %3040, %v2903
          %v3042 = vpop.permute.xlu0 %3041
          %3045 = vset.pattern.permute.xlu0 0
          %3046 = vperm.xlu0 %3045, %v2904
          %v3047 = vpop.permute.xlu0 %3046
          %3050 = vset.pattern.permute.xlu0 0
          %3051 = vperm.xlu0 %3050, %v2905
          %v3052 = vpop.permute.xlu0 %3051
          %3055 = vset.pattern.permute.xlu0 0
          %3056 = vperm.xlu0 %3055, %v2906
          %v3057 = vpop.permute.xlu0 %3056
          %3060 = vset.pattern.permute.xlu0 0
          %3061 = vperm.xlu0 %3060, %v2907
          %v3062 = vpop.permute.xlu0 %3061
          %3065 = vset.pattern.permute.xlu0 0
          %3066 = vperm.xlu0 %3065, %v2908
          %v3067 = vpop.permute.xlu0 %3066
          %v3069 = vmul.f32 %v2813, %v2912
          %v3070 = vmul.f32 %v2814, %v2917
          %v3071 = vmul.f32 %v2815, %v2922
          %v3072 = vmul.f32 %v2816, %v2927
          %v3073 = vmul.f32 %v2817, %v2932
          %v3074 = vmul.f32 %v2818, %v2937
          %v3075 = vmul.f32 %v2819, %v2942
          %v3076 = vmul.f32 %v2820, %v2947
          %v3077 = vmul.f32 %v2821, %v2952
          %v3078 = vmul.f32 %v2822, %v2957
          %v3079 = vmul.f32 %v2823, %v2962
          %v3080 = vmul.f32 %v2824, %v2967
          %v3081 = vmul.f32 %v2825, %v2972
          %v3082 = vmul.f32 %v2826, %v2977
          %v3083 = vmul.f32 %v2827, %v2982
          %v3084 = vmul.f32 %v2828, %v2987
          %v3085 = vmul.f32 %v2829, %v2992
          %v3086 = vmul.f32 %v2830, %v2997
          %v3087 = vmul.f32 %v2831, %v3002
          %v3088 = vmul.f32 %v2832, %v3007
          %v3089 = vmul.f32 %v2833, %v3012
          %v3090 = vmul.f32 %v2834, %v3017
          %v3091 = vmul.f32 %v2835, %v3022
          %v3092 = vmul.f32 %v2836, %v3027
          %v3093 = vmul.f32 %v2837, %v3032
          %v3094 = vmul.f32 %v2838, %v3037
          %v3095 = vmul.f32 %v2839, %v3042
          %v3096 = vmul.f32 %v2840, %v3047
          %v3097 = vmul.f32 %v2841, %v3052
          %v3098 = vmul.f32 %v2842, %v3057
          %v3099 = vmul.f32 %v2843, %v3062
          %v3100 = vmul.f32 %v2844, %v3067
          %v3101 = vld [vmem:[%s6] sm:$0x1]
          %v3103 = vlaneseq
          %v3104 = vshrl.u32 %v3103, 7
          %v3105 = vsub.s32 0, %v3104
          %v3106 = vrot.slane %v3101, %v3105
          %v3108 = vadd.f32 %v3069, %v3106
          %v3109 = vadd.f32 %v3070, %v3106
          %v3110 = vadd.f32 %v3071, %v3106
          %v3111 = vadd.f32 %v3072, %v3106
          %v3112 = vadd.f32 %v3073, %v3106
          %v3113 = vadd.f32 %v3074, %v3106
          %v3114 = vadd.f32 %v3075, %v3106
          %v3115 = vadd.f32 %v3076, %v3106
          %v3116 = vadd.f32 %v3077, %v3106
          %v3117 = vadd.f32 %v3078, %v3106
          %v3118 = vadd.f32 %v3079, %v3106
          %v3119 = vadd.f32 %v3080, %v3106
          %v3120 = vadd.f32 %v3081, %v3106
          %v3121 = vadd.f32 %v3082, %v3106
          %v3122 = vadd.f32 %v3083, %v3106
          %v3123 = vadd.f32 %v3084, %v3106
          %v3124 = vadd.f32 %v3085, %v3106
          %v3125 = vadd.f32 %v3086, %v3106
          %v3126 = vadd.f32 %v3087, %v3106
          %v3127 = vadd.f32 %v3088, %v3106
          %v3128 = vadd.f32 %v3089, %v3106
          %v3129 = vadd.f32 %v3090, %v3106
          %v3130 = vadd.f32 %v3091, %v3106
          %v3131 = vadd.f32 %v3092, %v3106
          %v3132 = vadd.f32 %v3093, %v3106
          %v3133 = vadd.f32 %v3094, %v3106
          %v3134 = vadd.f32 %v3095, %v3106
          %v3135 = vadd.f32 %v3096, %v3106
          %v3136 = vadd.f32 %v3097, %v3106
          %v3137 = vadd.f32 %v3098, %v3106
          %v3138 = vadd.f32 %v3099, %v3106
          %v3139 = vadd.f32 %v3100, %v3106
          %v3140 = vmax.f32 %v3108, 0.0
          %v3141 = vmax.f32 %v3109, 0.0
          %v3142 = vmax.f32 %v3110, 0.0
          %v3143 = vmax.f32 %v3111, 0.0
          %v3144 = vmax.f32 %v3112, 0.0
          %v3145 = vmax.f32 %v3113, 0.0
          %v3146 = vmax.f32 %v3114, 0.0
          %v3147 = vmax.f32 %v3115, 0.0
          %v3148 = vmax.f32 %v3116, 0.0
          %v3149 = vmax.f32 %v3117, 0.0
          %v3150 = vmax.f32 %v3118, 0.0
          %v3151 = vmax.f32 %v3119, 0.0
          %v3152 = vmax.f32 %v3120, 0.0
          %v3153 = vmax.f32 %v3121, 0.0
          %v3154 = vmax.f32 %v3122, 0.0
          %v3155 = vmax.f32 %v3123, 0.0
          %v3156 = vmax.f32 %v3124, 0.0
          %v3157 = vmax.f32 %v3125, 0.0
          %v3158 = vmax.f32 %v3126, 0.0
          %v3159 = vmax.f32 %v3127, 0.0
          %v3160 = vmax.f32 %v3128, 0.0
          %v3161 = vmax.f32 %v3129, 0.0
          %v3162 = vmax.f32 %v3130, 0.0
          %v3163 = vmax.f32 %v3131, 0.0
          %v3164 = vmax.f32 %v3132, 0.0
          %v3165 = vmax.f32 %v3133, 0.0
          %v3166 = vmax.f32 %v3134, 0.0
          %v3167 = vmax.f32 %v3135, 0.0
          %v3168 = vmax.f32 %v3136, 0.0
          %v3169 = vmax.f32 %v3137, 0.0
          %v3170 = vmax.f32 %v3138, 0.0
          %v3171 = vmax.f32 %v3139, 0.0
          %v3172 = vpack.c.bf16 %v3141, %v3140
          %v3173 = vpack.c.bf16 %v3143, %v3142
          %v3174 = vpack.c.bf16 %v3145, %v3144
          %v3175 = vpack.c.bf16 %v3147, %v3146
          %v3176 = vpack.c.bf16 %v3149, %v3148
          %v3177 = vpack.c.bf16 %v3151, %v3150
          %v3178 = vpack.c.bf16 %v3153, %v3152
          %v3179 = vpack.c.bf16 %v3155, %v3154
          %v3180 = vpack.c.bf16 %v3157, %v3156
          %v3181 = vpack.c.bf16 %v3159, %v3158
          %v3182 = vpack.c.bf16 %v3161, %v3160
          %v3183 = vpack.c.bf16 %v3163, %v3162
          %v3184 = vpack.c.bf16 %v3165, %v3164
          %v3185 = vpack.c.bf16 %v3167, %v3166
          %v3186 = vpack.c.bf16 %v3169, %v3168
          %v3187 = vpack.c.bf16 %v3171, %v3170
          %v3204 = vunpack.c.l.b16 %v3172
          %v3205 = vunpack.c.h.b16 %v3172
          %v3206 = vunpack.c.l.b16 %v3173
          %v3207 = vunpack.c.h.b16 %v3173
          %v3208 = vunpack.c.l.b16 %v3174
          %v3209 = vunpack.c.h.b16 %v3174
          %v3210 = vunpack.c.l.b16 %v3175
          %v3211 = vunpack.c.h.b16 %v3175
          %v3212 = vunpack.c.l.b16 %v3176
          %v3213 = vunpack.c.h.b16 %v3176
          %v3214 = vunpack.c.l.b16 %v3177
          %v3215 = vunpack.c.h.b16 %v3177
          %v3216 = vunpack.c.l.b16 %v3178
          %v3217 = vunpack.c.h.b16 %v3178
          %v3218 = vunpack.c.l.b16 %v3179
          %v3219 = vunpack.c.h.b16 %v3179
          %v3220 = vunpack.c.l.b16 %v3180
          %v3221 = vunpack.c.h.b16 %v3180
          %v3222 = vunpack.c.l.b16 %v3181
          %v3223 = vunpack.c.h.b16 %v3181
          %v3224 = vunpack.c.l.b16 %v3182
          %v3225 = vunpack.c.h.b16 %v3182
          %v3226 = vunpack.c.l.b16 %v3183
          %v3227 = vunpack.c.h.b16 %v3183
          %v3228 = vunpack.c.l.b16 %v3184
          %v3229 = vunpack.c.h.b16 %v3184
          %v3230 = vunpack.c.l.b16 %v3185
          %v3231 = vunpack.c.h.b16 %v3185
          %v3232 = vunpack.c.l.b16 %v3186
          %v3233 = vunpack.c.h.b16 %v3186
          %v3234 = vunpack.c.l.b16 %v3187
          %v3235 = vunpack.c.h.b16 %v3187
          %v3236 = vpack.c.b16 %v3204, %v3204
          %v3237 = vpack.c.b16 %v3205, %v3205
          %v3238 = vpack.c.b16 %v3206, %v3206
          %v3239 = vpack.c.b16 %v3207, %v3207
          %v3240 = vpack.c.b16 %v3208, %v3208
          %v3241 = vpack.c.b16 %v3209, %v3209
          %v3242 = vpack.c.b16 %v3210, %v3210
          %v3243 = vpack.c.b16 %v3211, %v3211
          %v3244 = vpack.c.b16 %v3212, %v3212
          %v3245 = vpack.c.b16 %v3213, %v3213
          %v3246 = vpack.c.b16 %v3214, %v3214
          %v3247 = vpack.c.b16 %v3215, %v3215
          %v3248 = vpack.c.b16 %v3216, %v3216
          %v3249 = vpack.c.b16 %v3217, %v3217
          %v3250 = vpack.c.b16 %v3218, %v3218
          %v3251 = vpack.c.b16 %v3219, %v3219
          %v3252 = vpack.c.b16 %v3220, %v3220
          %v3253 = vpack.c.b16 %v3221, %v3221
          %v3254 = vpack.c.b16 %v3222, %v3222
          %v3255 = vpack.c.b16 %v3223, %v3223
          %v3256 = vpack.c.b16 %v3224, %v3224
          %v3257 = vpack.c.b16 %v3225, %v3225
          %v3258 = vpack.c.b16 %v3226, %v3226
          %v3259 = vpack.c.b16 %v3227, %v3227
          %v3260 = vpack.c.b16 %v3228, %v3228
          %v3261 = vpack.c.b16 %v3229, %v3229
          %v3262 = vpack.c.b16 %v3230, %v3230
          %v3263 = vpack.c.b16 %v3231, %v3231
          %v3264 = vpack.c.b16 %v3232, %v3232
          %v3265 = vpack.c.b16 %v3233, %v3233
          %v3266 = vpack.c.b16 %v3234, %v3234
          %v3267 = vpack.c.b16 %v3235, %v3235
          %3300 = vst [vmem:[%s404] sm:$0xf] %v3236
          %3301 = vst [vmem:[%s404 + $0x4] sm:$0xf] %v3237
          %3302 = vst [vmem:[%s404 + $0x8] sm:$0xf] %v3238
          %3303 = vst [vmem:[%s404 + $0xc] sm:$0xf] %v3239
          %3304 = vst [vmem:[%s404 + $0x10] sm:$0xf] %v3240
          %3305 = vst [vmem:[%s404 + $0x14] sm:$0xf] %v3241
          %3306 = vst [vmem:[%s404 + $0x18] sm:$0xf] %v3242
          %3307 = vst [vmem:[%s404 + $0x1c] sm:$0xf] %v3243
          %3308 = vst [vmem:[%s404 + $0x20] sm:$0xf] %v3244
          %3309 = vst [vmem:[%s404 + $0x24] sm:$0xf] %v3245
          %3310 = vst [vmem:[%s404 + $0x28] sm:$0xf] %v3246
          %3311 = vst [vmem:[%s404 + $0x2c] sm:$0xf] %v3247
          %3312 = vst [vmem:[%s404 + $0x30] sm:$0xf] %v3248
          %3313 = vst [vmem:[%s404 + $0x34] sm:$0xf] %v3249
          %3314 = vst [vmem:[%s404 + $0x38] sm:$0xf] %v3250
          %3315 = vst [vmem:[%s404 + $0x3c] sm:$0xf] %v3251
          %3316 = vst [vmem:[%s404 + $0x40] sm:$0xf] %v3252
          %3317 = vst [vmem:[%s404 + $0x44] sm:$0xf] %v3253
          %3318 = vst [vmem:[%s404 + $0x48] sm:$0xf] %v3254
          %3319 = vst [vmem:[%s404 + $0x4c] sm:$0xf] %v3255
          %3320 = vst [vmem:[%s404 + $0x50] sm:$0xf] %v3256
          %3321 = vst [vmem:[%s404 + $0x54] sm:$0xf] %v3257
          %3322 = vst [vmem:[%s404 + $0x58] sm:$0xf] %v3258
          %3323 = vst [vmem:[%s404 + $0x5c] sm:$0xf] %v3259
          %3324 = vst [vmem:[%s404 + $0x60] sm:$0xf] %v3260
          %3325 = vst [vmem:[%s404 + $0x64] sm:$0xf] %v3261
          %3326 = vst [vmem:[%s404 + $0x68] sm:$0xf] %v3262
          %3327 = vst [vmem:[%s404 + $0x6c] sm:$0xf] %v3263
          %3328 = vst [vmem:[%s404 + $0x70] sm:$0xf] %v3264
          %3329 = vst [vmem:[%s404 + $0x74] sm:$0xf] %v3265
          %3330 = vst [vmem:[%s404 + $0x78] sm:$0xf] %v3266
          %3331 = vst [vmem:[%s404 + $0x7c] sm:$0xf] %v3267
        $region79: #{tpu_custom_call.1} parent=58 // pred_fallthru
          _
        %s3332 = sand.u32 %s199, 1
        %s3333 = scalar_lea.sflag [#allocation11], %s3332
        %s3334 = sand.u32 %s199, 1
        %s3335 = smul.addr %s3334, 128
        %s3336 = scalar_lea.vmem [#allocation12], %s3335
        // Predicated region
        $region80: #{tpu_custom_call.1} parent=58 // pred_check
          %p3337 = pneg %p209
        $region81: #{tpu_custom_call.1} parent=58 // pred_check_branch
          %3339 = sbr.rel (%p3337) target = $region83
        $region82: #{tpu_custom_call.1} parent=58 // pred_region
          %s3340 = smul.u32 32, %s38
          %s3342 = ssub.s32 2048, 2048
          %3343 = vsyncadd %s3333, %s3342
          %s3344 = smul.addr %s3340, 64
          %s3345 = scalar_lea.hbm %s7, %s3344
          %s3346 = sshll.u32 %s3336, 4
          %s3347 = int_to_ptr.vmem [resolvable:$true] %s3346
          %3352 = dma.vmem_to_hbm [thread:$0]  %s3347, 2048, %s3345, %s3333, 64, 64, 4
        $region83: #{tpu_custom_call.1} parent=58 // pred_fallthru
          _
      $region59: #{tpu_custom_call.1} parent=5 // pred_fallthru
        _
      %p3353 = scmp.le.s32.totalorder 2, %s29
      // Predicated region
      $region84: #{tpu_custom_call.1} parent=5 // pred_check
        %p3354 = pneg %p3353
      $region85: #{tpu_custom_call.1} parent=5 // pred_check_branch
        %3356 = sbr.rel (%p3354) target = $region87
      $region86: #{tpu_custom_call.1} parent=5 // pred_region
        %s3357 = ssub.s32 %s29, 2
        // Predicated region
        $region88: #{tpu_custom_call.1} parent=86 // pred_check
          %p3358 = pneg %p215
        $region89: #{tpu_custom_call.1} parent=86 // pred_check_branch
          %3360 = sbr.rel (%p3358) target = $region91
        $region90: #{tpu_custom_call.1} parent=86 // pred_region
          %s3361 = sand.u32 %s200, 1
          %s3362 = scalar_lea.sflag [#allocation11], %s3361
          %s3363 = sand.u32 %s200, 1
          %s3364 = smul.addr %s3363, 128
          %s3365 = scalar_lea.vmem [#allocation12], %s3364
          %3366 = dma.done %s3362, 2048
        $region91: #{tpu_custom_call.1} parent=86 // pred_fallthru
          _
      $region87: #{tpu_custom_call.1} parent=5 // pred_fallthru
        _
    $region6: #{tpu_custom_call.1} parent=1 // loop_footer
      %s33 = sadd.s32 1, %s29
    $region7: #{tpu_custom_call.1} parent=1 // loop_footer_branch
      %28 = sbr.rel target = $region3
    $region8: #{tpu_custom_call.1} parent=1 // loop_exit
      _
    %3367 = vsyncpa [#allocation10], 1
    %s3368 = scalar_lea.sflag [#allocation10], 1
    %3369 = vsyncpa %s3368, 1
    %3370 = vsyncpa [#allocation11], 1
    %s3371 = scalar_lea.sflag [#allocation11], 1
    %3372 = vsyncpa %s3371, 1

</llo_original>
